<compile_context>
chip_gen: v7x
topology: tpu7x:2x2x1
jax: 0.10.0
libtpu: 0.0.40
codegen_flags: <defaults>
</compile_context>

<pallas_src>
import functools

import numpy as np
import jax
import jax.numpy as jnp
from jax.experimental import pallas as pl
from jax.experimental.pallas import tpu as pltpu

# ----------------------------------------------------------------------------
# model dimensions (tiny deterministic DeepLabV3-style net)
# ----------------------------------------------------------------------------
IN_CH = 4
STEM_CH = 16
BACKBONE_CH = 32
ASPP_CH = 16
NUM_CLASSES = 5
PAD_CH = 128                       # lane-dense padding for HBM-visible tensors


# ----------------------------------------------------------------------------
# compile-time constant matrices (NumPy -> baked into the launch as inputs)
# ----------------------------------------------------------------------------
def _bilinear_matrix_np(out_size, in_size):
    """Row-stochastic interpolation matrix matching F.interpolate(bilinear,
    align_corners=False)."""
    scale = in_size / out_size
    src = (np.arange(out_size, dtype=np.float64) + 0.5) * scale - 0.5
    src = np.clip(src, 0.0, in_size - 1)
    lo = np.floor(src).astype(np.int64)
    hi = np.minimum(lo + 1, in_size - 1)
    frac = src - lo
    m = np.zeros((out_size, in_size), dtype=np.float32)
    m[np.arange(out_size), lo] += (1.0 - frac).astype(np.float32)
    m[np.arange(out_size), hi] += frac.astype(np.float32)
    return m


def _conv_gather_np(in_h, in_w, out_h, out_w, ksize, stride, pad, dilation):
    """0/1 gather matrix (ksize^2 * out_h*out_w, in_h*in_w): row t*M + m holds
    a 1 at the input position feeding tap t of output m; an all-zero row
    reproduces zero padding exactly."""
    m = out_h * out_w
    g = np.zeros((ksize * ksize * m, in_h * in_w), dtype=np.float32)
    for p in range(ksize):
        for q in range(ksize):
            t = p * ksize + q
            for i in range(out_h):
                for j in range(out_w):
                    r = i * stride - pad + p * dilation
                    c = j * stride - pad + q * dilation
                    if 0 <= r < in_h and 0 <= c < in_w:
                        g[t * m + i * out_w + j, r * in_w + c] = 1.0
    return g


# ----------------------------------------------------------------------------
# the single fused kernel (one grid step == one batch element)
# ----------------------------------------------------------------------------
def _fused_forward_kernel(x_ref, ws_ref, bs_ref, gl_ref, wl_ref, bl_ref,
                          ga_ref, wb_ref, bb_ref, wpj_ref, bpj_ref,
                          gc_ref, wc_ref, bc_ref, wo_ref, bo_ref, au_ref,
                          o_ref, *, m2):
    f32 = jnp.float32
    bf16 = jnp.bfloat16

    def dot(a, b):
        return jnp.dot(a, b, preferred_element_type=f32)

    # --- stem 3x3 / stride 2: taps pre-folded into K on the host -> 1 matmul
    stem = jnp.maximum(dot(x_ref[0], ws_ref[...]) + bs_ref[...], 0.0)
    stem = stem.astype(bf16)                                   # (m1, STEM_CH)

    # --- layer 3x3 / stride 2: constant gather matmul + 9 chained tap dots
    g1 = dot(gl_ref[...], stem).astype(bf16)                   # (9*m2, STEM_CH)
    acc = dot(g1[0:m2], wl_ref[0])
    for t in range(1, 9):
        acc = acc + dot(g1[t * m2:(t + 1) * m2], wl_ref[t])
    feat = jnp.maximum(acc + bl_ref[...], 0.0).astype(bf16)    # (m2, BACKBONE_CH)

    # --- ASPP: dil-2 taps, dil-3 taps and the (1/hw) pooling rows share one
    #     gather matmul; branch weights live in disjoint 16-lane slices of a
    #     64-wide pre-activation, so "concat" is a plain add.
    ga = dot(ga_ref[...], feat).astype(bf16)                   # (19*m2, BACKBONE_CH)
    pre = dot(feat, wb_ref[0])                                 # 1x1 branch
    for t in range(9):                                         # 3x3, dilation 2
        pre = pre + dot(ga[t * m2:(t + 1) * m2], wb_ref[1 + t])
    for t in range(9):                                         # 3x3, dilation 3
        pre = pre + dot(ga[(9 + t) * m2:(10 + t) * m2], wb_ref[10 + t])
    pre = pre + dot(ga[18 * m2:19 * m2], wb_ref[19])           # image pooling
    branches = jnp.maximum(pre + bb_ref[...], 0.0).astype(bf16)   # (m2, 64)

    # 1x1 projection: single K=64 matmul.
    # TODO(synk): ASPP projection Dropout(0.5) is identity in eval mode; omitted.
    aspp = jnp.maximum(dot(branches, wpj_ref[...]) + bpj_ref[...], 0.0)
    aspp = aspp.astype(bf16)                                   # (m2, ASPP_CH)

    # --- classifier head: 3x3 (gather + 9 tap dots) then 1x1 to 128-padded classes
    gcv = dot(gc_ref[...], aspp).astype(bf16)                  # (9*m2, ASPP_CH)
    hid = dot(gcv[0:m2], wc_ref[0])
    for t in range(1, 9):
        hid = hid + dot(gcv[t * m2:(t + 1) * m2], wc_ref[t])
    hid = jnp.maximum(hid + bc_ref[...], 0.0).astype(bf16)     # (m2, ASPP_CH)
    logits = (dot(hid, wo_ref[...]) + bo_ref[...]).astype(bf16)   # (m2, 128)

    # --- bilinear upsample (align_corners=False): one constant-matrix matmul,
    #     lane-dense f32 output block (class slice / transpose happen outside).
    o_ref[0] = dot(au_ref[...], logits)                        # (out_h*out_w, 128)


# ----------------------------------------------------------------------------
# launcher: host prep (one fusion), weight packing, single pallas_call
# ----------------------------------------------------------------------------
def _const_spec(arr):
    zeros = (0,) * arr.ndim
    return pl.BlockSpec(arr.shape, lambda b, _z=zeros: _z)


def deeplabv3_model(params, x_nchw):
    """Returns {'out': logits} like torchvision DeepLabV3 (eval mode)."""
    n, c, h, w = x_nchw.shape
    assert c == IN_CH and h % 4 == 0 and w % 4 == 0
    sh, sw = h // 2, w // 2            # stem output grid
    fh, fw = h // 4, w // 4            # backbone feature grid
    m1, m2 = sh * sw, fh * fw
    f32, bf16 = jnp.float32, jnp.bfloat16
    ac = ASPP_CH

    # ---- host prep: NCHW->NHWC, zero pad, stem stride-2 im2col folded into K
    x = jnp.transpose(x_nchw, (0, 2, 3, 1)).astype(f32)
    xp = jnp.pad(x, ((0, 0), (1, 1), (1, 1), (0, 0)))
    taps = [xp[:, p:p + 2 * (sh - 1) + 1:2, q:q + 2 * (sw - 1) + 1:2, :]
            .reshape(n, m1, IN_CH)
            for p in range(3) for q in range(3)]
    x_im = jnp.concatenate(taps, axis=-1)                          # (n, m1, 36)
    x_im = jnp.pad(x_im, ((0, 0), (0, 0), (0, PAD_CH - 9 * IN_CH))).astype(bf16)

    # ---- weight packing (tiny) ----
    ws = jnp.pad(params["stem"]["w"].reshape(9 * IN_CH, STEM_CH),
                 ((0, PAD_CH - 9 * IN_CH), (0, 0))).astype(bf16)   # (128, 16)
    bs = params["stem"]["b"].reshape(1, STEM_CH).astype(f32)
    wl = params["layer"]["w"].reshape(9, STEM_CH, BACKBONE_CH).astype(bf16)
    bl = params["layer"]["b"].reshape(1, BACKBONE_CH).astype(f32)

    w0e = jnp.pad(params["aspp_b0"]["w"].reshape(BACKBONE_CH, ac),
                  ((0, 0), (0, 3 * ac)))
    w1e = jnp.pad(params["aspp_b1"]["w"].reshape(9, BACKBONE_CH, ac),
                  ((0, 0), (0, 0), (ac, 2 * ac)))
    w2e = jnp.pad(params["aspp_b2"]["w"].reshape(9, BACKBONE_CH, ac),
                  ((0, 0), (0, 0), (2 * ac, ac)))
    wpe = jnp.pad(params["aspp_pool"]["w"].reshape(BACKBONE_CH, ac),
                  ((0, 0), (3 * ac, 0)))
    wb = jnp.concatenate([w0e[None], w1e, w2e, wpe[None]],
                         axis=0).astype(bf16)                      # (20, 32, 64)
    bb = jnp.concatenate([params["aspp_b0"]["b"], params["aspp_b1"]["b"],
                          params["aspp_b2"]["b"], params["aspp_pool"]["b"]]
                         ).reshape(1, 4 * ac).astype(f32)
    wpj = params["aspp_proj"]["w"].reshape(4 * ac, ac).astype(bf16)
    bpj = params["aspp_proj"]["b"].reshape(1, ac).astype(f32)

    wc = params["cls_conv"]["w"].reshape(9, ac, ac).astype(bf16)
    bc = params["cls_conv"]["b"].reshape(1, ac).astype(f32)
    wo = jnp.pad(params["cls_out"]["w"].reshape(ac, NUM_CLASSES),
                 ((0, 0), (0, PAD_CH - NUM_CLASSES))).astype(bf16)  # (16, 128)
    bo = jnp.pad(params["cls_out"]["b"],
                 (0, PAD_CH - NUM_CLASSES)).reshape(1, PAD_CH).astype(f32)

    # ---- compile-time gather / interpolation matrices ----
    gl = jnp.asarray(_conv_gather_np(sh, sw, fh, fw, 3, 2, 1, 1), bf16)   # (9*m2, m1)
    g2 = _conv_gather_np(fh, fw, fh, fw, 3, 1, 2, 2)
    g3 = _conv_gather_np(fh, fw, fh, fw, 3, 1, 3, 3)
    pool = np.full((m2, m2), 1.0 / m2, np.float32)
    ga = jnp.asarray(np.concatenate([g2, g3, pool], axis=0), bf16)        # (19*m2, m2)
    gc = jnp.asarray(_conv_gather_np(fh, fw, fh, fw, 3, 1, 1, 1), bf16)   # (9*m2, m2)
    mh = _bilinear_matrix_np(h, fh)
    mw = _bilinear_matrix_np(w, fw)
    au = jnp.asarray(np.einsum("ui,vj->uvij", mh, mw).reshape(h * w, m2), bf16)

    kernel = functools.partial(_fused_forward_kernel, m2=m2)
    consts = (ws, bs, gl, wl, bl, ga, wb, bb, wpj, bpj, gc, wc, bc, wo, bo, au)

    out = pl.pallas_call(
        kernel,
        out_shape=jax.ShapeDtypeStruct((n, h * w, PAD_CH), f32),
        grid=(n,),
        in_specs=[pl.BlockSpec((1, m1, PAD_CH), lambda b: (b, 0, 0))]
                 + [_const_spec(a) for a in consts],
        out_specs=pl.BlockSpec((1, h * w, PAD_CH), lambda b: (b, 0, 0)),
        compiler_params=pltpu.CompilerParams(
            dimension_semantics=("parallel",)),
    )(x_im, *consts)

    # single XLA epilogue: drop the lane padding and go back to NCHW
    out = out.reshape(n, h, w, PAD_CH)[..., :NUM_CLASSES]
    return {"out": jnp.transpose(out, (0, 3, 1, 2))}


def deeplabv3_wrapper_forward(params, x_nchw):
    """Equivalent of DeepLabV3Wrapper.forward: return model(input)['out']."""
    return deeplabv3_model(params, x_nchw)["out"]


# ----------------------------------------------------------------------------
# Small deterministic DeepLabV3-style model (same stand-in as before)
# ----------------------------------------------------------------------------
def init_params(key):
    def conv_p(k, kh, kw, cin, cout):
        kw_, kb_ = jax.random.split(k)
        w = jax.random.normal(kw_, (kh, kw, cin, cout), jnp.float32) * 0.1
        b = jax.random.normal(kb_, (cout,), jnp.float32) * 0.01
        return {"w": w, "b": b}

    keys = jax.random.split(key, 10)
    # TODO(synk): BatchNorm folded as identity (default running stats); a real
    # checkpoint would require folding actual stats into the conv weights.
    return {
        "stem": conv_p(keys[0], 3, 3, IN_CH, STEM_CH),
        "layer": conv_p(keys[1], 3, 3, STEM_CH, BACKBONE_CH),
        "aspp_b0": conv_p(keys[2], 1, 1, BACKBONE_CH, ASPP_CH),
        "aspp_b1": conv_p(keys[3], 3, 3, BACKBONE_CH, ASPP_CH),
        "aspp_b2": conv_p(keys[4], 3, 3, BACKBONE_CH, ASPP_CH),
        "aspp_pool": conv_p(keys[5], 1, 1, BACKBONE_CH, ASPP_CH),
        "aspp_proj": conv_p(keys[6], 1, 1, 4 * ASPP_CH, ASPP_CH),
        "cls_conv": conv_p(keys[7], 3, 3, ASPP_CH, ASPP_CH),
        "cls_out": conv_p(keys[8], 1, 1, ASPP_CH, NUM_CLASSES),
    }


# ----------------------------------------------------------------------------
if __name__ == "__main__":
    key = jax.random.PRNGKey(0)
    k_params, k_input = jax.random.split(key)
    params = init_params(k_params)
    x = jax.random.normal(k_input, (2, IN_CH, 16, 16), jnp.float32)   # NCHW

    fwd = jax.jit(deeplabv3_wrapper_forward)
    out = jax.block_until_ready(fwd(params, x))
    assert out.shape == (2, NUM_CLASSES, 16, 16), out.shape
    assert out.dtype == jnp.float32
    print("KERNEL_OK")
</pallas_src>

<mosaic_0001>
module attributes {stable_mosaic.version = 11 : i64} {
  func.func @_fused_forward_kernel(%arg0: i32, %arg1: memref<1x64x128xbf16, #tpu.memory_space<vmem>>, %arg2: memref<128x16xbf16, #tpu.memory_space<vmem>>, %arg3: memref<1x16xf32, #tpu.memory_space<vmem>>, %arg4: memref<144x64xbf16, #tpu.memory_space<vmem>>, %arg5: memref<9x16x32xbf16, #tpu.memory_space<vmem>>, %arg6: memref<1x32xf32, #tpu.memory_space<vmem>>, %arg7: memref<304x16xbf16, #tpu.memory_space<vmem>>, %arg8: memref<20x32x64xbf16, #tpu.memory_space<vmem>>, %arg9: memref<1x64xf32, #tpu.memory_space<vmem>>, %arg10: memref<64x16xbf16, #tpu.memory_space<vmem>>, %arg11: memref<1x16xf32, #tpu.memory_space<vmem>>, %arg12: memref<144x16xbf16, #tpu.memory_space<vmem>>, %arg13: memref<9x16x16xbf16, #tpu.memory_space<vmem>>, %arg14: memref<1x16xf32, #tpu.memory_space<vmem>>, %arg15: memref<16x128xbf16, #tpu.memory_space<vmem>>, %arg16: memref<1x128xf32, #tpu.memory_space<vmem>>, %arg17: memref<256x16xbf16, #tpu.memory_space<vmem>>, %arg18: memref<1x256x128xf32, #tpu.memory_space<vmem>>) attributes {dimension_semantics = [#tpu.dimension_semantics<parallel>], iteration_bounds = array<i64: 2>, scalar_prefetch = 0 : i64, scratch_operands = 0 : i64, tpu.core_type = #tpu.core_type<tc>, window_params = [{transform_indices = @transform_0, window_bounds = array<i64: 1, 64, 128>}, {pipeline_mode = #tpu.pipeline_mode<synchronous>, transform_indices = @transform_1, window_bounds = array<i64: 128, 16>}, {pipeline_mode = #tpu.pipeline_mode<synchronous>, transform_indices = @transform_2, window_bounds = array<i64: 1, 16>}, {pipeline_mode = #tpu.pipeline_mode<synchronous>, transform_indices = @transform_3, window_bounds = array<i64: 144, 64>}, {pipeline_mode = #tpu.pipeline_mode<synchronous>, transform_indices = @transform_4, window_bounds = array<i64: 9, 16, 32>}, {pipeline_mode = #tpu.pipeline_mode<synchronous>, transform_indices = @transform_5, window_bounds = array<i64: 1, 32>}, {pipeline_mode = #tpu.pipeline_mode<synchronous>, transform_indices = @transform_6, window_bounds = array<i64: 304, 16>}, {pipeline_mode = #tpu.pipeline_mode<synchronous>, transform_indices = @transform_7, window_bounds = array<i64: 20, 32, 64>}, {pipeline_mode = #tpu.pipeline_mode<synchronous>, transform_indices = @transform_8, window_bounds = array<i64: 1, 64>}, {pipeline_mode = #tpu.pipeline_mode<synchronous>, transform_indices = @transform_9, window_bounds = array<i64: 64, 16>}, {pipeline_mode = #tpu.pipeline_mode<synchronous>, transform_indices = @transform_10, window_bounds = array<i64: 1, 16>}, {pipeline_mode = #tpu.pipeline_mode<synchronous>, transform_indices = @transform_11, window_bounds = array<i64: 144, 16>}, {pipeline_mode = #tpu.pipeline_mode<synchronous>, transform_indices = @transform_12, window_bounds = array<i64: 9, 16, 16>}, {pipeline_mode = #tpu.pipeline_mode<synchronous>, transform_indices = @transform_13, window_bounds = array<i64: 1, 16>}, {pipeline_mode = #tpu.pipeline_mode<synchronous>, transform_indices = @transform_14, window_bounds = array<i64: 16, 128>}, {pipeline_mode = #tpu.pipeline_mode<synchronous>, transform_indices = @transform_15, window_bounds = array<i64: 1, 128>}, {pipeline_mode = #tpu.pipeline_mode<synchronous>, transform_indices = @transform_16, window_bounds = array<i64: 256, 16>}, {transform_indices = @transform_17, window_bounds = array<i64: 1, 256, 128>}]} {
    %c0 = arith.constant 0 : index
    %c0_0 = arith.constant 0 : index
    %c0_1 = arith.constant 0 : index
    %0 = vector.load %arg1[%c0, %c0_0, %c0_1] : memref<1x64x128xbf16, #tpu.memory_space<vmem>>, vector<1x64x128xbf16>
    %1 = vector.shape_cast %0 : vector<1x64x128xbf16> to vector<64x128xbf16>
    %c0_2 = arith.constant 0 : index
    %c0_3 = arith.constant 0 : index
    %2 = vector.load %arg2[%c0_2, %c0_3] : memref<128x16xbf16, #tpu.memory_space<vmem>>, vector<128x16xbf16>
    %cst = arith.constant dense<0.000000e+00> : vector<64x16xf32>
    %3 = tpu.matmul %1, %2, %cst {dimension_numbers = #tpu.dot_dimension_numbers<[1], [0], [0], [1], [0, 0, 1, 1], [], []>} : vector<64x128xbf16>, vector<128x16xbf16>, vector<64x16xf32> -> vector<64x16xf32>
    %c0_4 = arith.constant 0 : index
    %c0_5 = arith.constant 0 : index
    %4 = vector.load %arg3[%c0_4, %c0_5] : memref<1x16xf32, #tpu.memory_space<vmem>>, vector<1x16xf32>
    %5 = vector.broadcast %4 : vector<1x16xf32> to vector<64x16xf32>
    %6 = arith.addf %3, %5 : vector<64x16xf32>
    %cst_6 = arith.constant 0.000000e+00 : f32
    %7 = vector.broadcast %cst_6 : f32 to vector<64x16xf32>
    %8 = arith.maximumf %6, %7 : vector<64x16xf32>
    %9 = arith.truncf %8 : vector<64x16xf32> to vector<64x16xbf16>
    %c0_7 = arith.constant 0 : index
    %c0_8 = arith.constant 0 : index
    %10 = vector.load %arg4[%c0_7, %c0_8] : memref<144x64xbf16, #tpu.memory_space<vmem>>, vector<144x64xbf16>
    %cst_9 = arith.constant dense<0.000000e+00> : vector<144x16xf32>
    %11 = tpu.matmul %10, %9, %cst_9 {dimension_numbers = #tpu.dot_dimension_numbers<[1], [0], [0], [1], [0, 0, 1, 1], [], []>} : vector<144x64xbf16>, vector<64x16xbf16>, vector<144x16xf32> -> vector<144x16xf32>
    %12 = arith.truncf %11 : vector<144x16xf32> to vector<144x16xbf16>
    %13 = vector.extract_strided_slice %12 {offsets = [0, 0], sizes = [16, 16], strides = [1, 1]} : vector<144x16xbf16> to vector<16x16xbf16>
    %c0_10 = arith.constant 0 : index
    %c0_11 = arith.constant 0 : index
    %c0_12 = arith.constant 0 : index
    %14 = vector.load %arg5[%c0_10, %c0_11, %c0_12] : memref<9x16x32xbf16, #tpu.memory_space<vmem>>, vector<1x16x32xbf16>
    %15 = vector.shape_cast %14 : vector<1x16x32xbf16> to vector<16x32xbf16>
    %cst_13 = arith.constant dense<0.000000e+00> : vector<16x32xf32>
    %16 = tpu.matmul %13, %15, %cst_13 {dimension_numbers = #tpu.dot_dimension_numbers<[1], [0], [0], [1], [0, 0, 1, 1], [], []>} : vector<16x16xbf16>, vector<16x32xbf16>, vector<16x32xf32> -> vector<16x32xf32>
    %17 = vector.extract_strided_slice %12 {offsets = [16, 0], sizes = [16, 16], strides = [1, 1]} : vector<144x16xbf16> to vector<16x16xbf16>
    %c1 = arith.constant 1 : index
    %c0_14 = arith.constant 0 : index
    %c0_15 = arith.constant 0 : index
    %18 = vector.load %arg5[%c1, %c0_14, %c0_15] : memref<9x16x32xbf16, #tpu.memory_space<vmem>>, vector<1x16x32xbf16>
    %19 = vector.shape_cast %18 : vector<1x16x32xbf16> to vector<16x32xbf16>
    %cst_16 = arith.constant dense<0.000000e+00> : vector<16x32xf32>
    %20 = tpu.matmul %17, %19, %cst_16 {dimension_numbers = #tpu.dot_dimension_numbers<[1], [0], [0], [1], [0, 0, 1, 1], [], []>} : vector<16x16xbf16>, vector<16x32xbf16>, vector<16x32xf32> -> vector<16x32xf32>
    %21 = arith.addf %16, %20 : vector<16x32xf32>
    %22 = vector.extract_strided_slice %12 {offsets = [32, 0], sizes = [16, 16], strides = [1, 1]} : vector<144x16xbf16> to vector<16x16xbf16>
    %c2 = arith.constant 2 : index
    %c0_17 = arith.constant 0 : index
    %c0_18 = arith.constant 0 : index
    %23 = vector.load %arg5[%c2, %c0_17, %c0_18] : memref<9x16x32xbf16, #tpu.memory_space<vmem>>, vector<1x16x32xbf16>
    %24 = vector.shape_cast %23 : vector<1x16x32xbf16> to vector<16x32xbf16>
    %cst_19 = arith.constant dense<0.000000e+00> : vector<16x32xf32>
    %25 = tpu.matmul %22, %24, %cst_19 {dimension_numbers = #tpu.dot_dimension_numbers<[1], [0], [0], [1], [0, 0, 1, 1], [], []>} : vector<16x16xbf16>, vector<16x32xbf16>, vector<16x32xf32> -> vector<16x32xf32>
    %26 = arith.addf %21, %25 : vector<16x32xf32>
    %27 = vector.extract_strided_slice %12 {offsets = [48, 0], sizes = [16, 16], strides = [1, 1]} : vector<144x16xbf16> to vector<16x16xbf16>
    %c3 = arith.constant 3 : index
    %c0_20 = arith.constant 0 : index
    %c0_21 = arith.constant 0 : index
    %28 = vector.load %arg5[%c3, %c0_20, %c0_21] : memref<9x16x32xbf16, #tpu.memory_space<vmem>>, vector<1x16x32xbf16>
    %29 = vector.shape_cast %28 : vector<1x16x32xbf16> to vector<16x32xbf16>
    %cst_22 = arith.constant dense<0.000000e+00> : vector<16x32xf32>
    %30 = tpu.matmul %27, %29, %cst_22 {dimension_numbers = #tpu.dot_dimension_numbers<[1], [0], [0], [1], [0, 0, 1, 1], [], []>} : vector<16x16xbf16>, vector<16x32xbf16>, vector<16x32xf32> -> vector<16x32xf32>
    %31 = arith.addf %26, %30 : vector<16x32xf32>
    %32 = vector.extract_strided_slice %12 {offsets = [64, 0], sizes = [16, 16], strides = [1, 1]} : vector<144x16xbf16> to vector<16x16xbf16>
    %c4 = arith.constant 4 : index
    %c0_23 = arith.constant 0 : index
    %c0_24 = arith.constant 0 : index
    %33 = vector.load %arg5[%c4, %c0_23, %c0_24] : memref<9x16x32xbf16, #tpu.memory_space<vmem>>, vector<1x16x32xbf16>
    %34 = vector.shape_cast %33 : vector<1x16x32xbf16> to vector<16x32xbf16>
    %cst_25 = arith.constant dense<0.000000e+00> : vector<16x32xf32>
    %35 = tpu.matmul %32, %34, %cst_25 {dimension_numbers = #tpu.dot_dimension_numbers<[1], [0], [0], [1], [0, 0, 1, 1], [], []>} : vector<16x16xbf16>, vector<16x32xbf16>, vector<16x32xf32> -> vector<16x32xf32>
    %36 = arith.addf %31, %35 : vector<16x32xf32>
    %37 = vector.extract_strided_slice %12 {offsets = [80, 0], sizes = [16, 16], strides = [1, 1]} : vector<144x16xbf16> to vector<16x16xbf16>
    %c5 = arith.constant 5 : index
    %c0_26 = arith.constant 0 : index
    %c0_27 = arith.constant 0 : index
    %38 = vector.load %arg5[%c5, %c0_26, %c0_27] : memref<9x16x32xbf16, #tpu.memory_space<vmem>>, vector<1x16x32xbf16>
    %39 = vector.shape_cast %38 : vector<1x16x32xbf16> to vector<16x32xbf16>
    %cst_28 = arith.constant dense<0.000000e+00> : vector<16x32xf32>
    %40 = tpu.matmul %37, %39, %cst_28 {dimension_numbers = #tpu.dot_dimension_numbers<[1], [0], [0], [1], [0, 0, 1, 1], [], []>} : vector<16x16xbf16>, vector<16x32xbf16>, vector<16x32xf32> -> vector<16x32xf32>
    %41 = arith.addf %36, %40 : vector<16x32xf32>
    %42 = vector.extract_strided_slice %12 {offsets = [96, 0], sizes = [16, 16], strides = [1, 1]} : vector<144x16xbf16> to vector<16x16xbf16>
    %c6 = arith.constant 6 : index
    %c0_29 = arith.constant 0 : index
    %c0_30 = arith.constant 0 : index
    %43 = vector.load %arg5[%c6, %c0_29, %c0_30] : memref<9x16x32xbf16, #tpu.memory_space<vmem>>, vector<1x16x32xbf16>
    %44 = vector.shape_cast %43 : vector<1x16x32xbf16> to vector<16x32xbf16>
    %cst_31 = arith.constant dense<0.000000e+00> : vector<16x32xf32>
    %45 = tpu.matmul %42, %44, %cst_31 {dimension_numbers = #tpu.dot_dimension_numbers<[1], [0], [0], [1], [0, 0, 1, 1], [], []>} : vector<16x16xbf16>, vector<16x32xbf16>, vector<16x32xf32> -> vector<16x32xf32>
    %46 = arith.addf %41, %45 : vector<16x32xf32>
    %47 = vector.extract_strided_slice %12 {offsets = [112, 0], sizes = [16, 16], strides = [1, 1]} : vector<144x16xbf16> to vector<16x16xbf16>
    %c7 = arith.constant 7 : index
    %c0_32 = arith.constant 0 : index
    %c0_33 = arith.constant 0 : index
    %48 = vector.load %arg5[%c7, %c0_32, %c0_33] : memref<9x16x32xbf16, #tpu.memory_space<vmem>>, vector<1x16x32xbf16>
    %49 = vector.shape_cast %48 : vector<1x16x32xbf16> to vector<16x32xbf16>
    %cst_34 = arith.constant dense<0.000000e+00> : vector<16x32xf32>
    %50 = tpu.matmul %47, %49, %cst_34 {dimension_numbers = #tpu.dot_dimension_numbers<[1], [0], [0], [1], [0, 0, 1, 1], [], []>} : vector<16x16xbf16>, vector<16x32xbf16>, vector<16x32xf32> -> vector<16x32xf32>
    %51 = arith.addf %46, %50 : vector<16x32xf32>
    %52 = vector.extract_strided_slice %12 {offsets = [128, 0], sizes = [16, 16], strides = [1, 1]} : vector<144x16xbf16> to vector<16x16xbf16>
    %c8 = arith.constant 8 : index
    %c0_35 = arith.constant 0 : index
    %c0_36 = arith.constant 0 : index
    %53 = vector.load %arg5[%c8, %c0_35, %c0_36] : memref<9x16x32xbf16, #tpu.memory_space<vmem>>, vector<1x16x32xbf16>
    %54 = vector.shape_cast %53 : vector<1x16x32xbf16> to vector<16x32xbf16>
    %cst_37 = arith.constant dense<0.000000e+00> : vector<16x32xf32>
    %55 = tpu.matmul %52, %54, %cst_37 {dimension_numbers = #tpu.dot_dimension_numbers<[1], [0], [0], [1], [0, 0, 1, 1], [], []>} : vector<16x16xbf16>, vector<16x32xbf16>, vector<16x32xf32> -> vector<16x32xf32>
    %56 = arith.addf %51, %55 : vector<16x32xf32>
    %c0_38 = arith.constant 0 : index
    %c0_39 = arith.constant 0 : index
    %57 = vector.load %arg6[%c0_38, %c0_39] : memref<1x32xf32, #tpu.memory_space<vmem>>, vector<1x32xf32>
    %58 = vector.broadcast %57 : vector<1x32xf32> to vector<16x32xf32>
    %59 = arith.addf %56, %58 : vector<16x32xf32>
    %cst_40 = arith.constant 0.000000e+00 : f32
    %60 = vector.broadcast %cst_40 : f32 to vector<16x32xf32>
    %61 = arith.maximumf %59, %60 : vector<16x32xf32>
    %62 = arith.truncf %61 : vector<16x32xf32> to vector<16x32xbf16>
    %c0_41 = arith.constant 0 : index
    %c0_42 = arith.constant 0 : index
    %63 = vector.load %arg7[%c0_41, %c0_42] : memref<304x16xbf16, #tpu.memory_space<vmem>>, vector<304x16xbf16>
    %cst_43 = arith.constant dense<0.000000e+00> : vector<304x32xf32>
    %64 = tpu.matmul %63, %62, %cst_43 {dimension_numbers = #tpu.dot_dimension_numbers<[1], [0], [0], [1], [0, 0, 1, 1], [], []>} : vector<304x16xbf16>, vector<16x32xbf16>, vector<304x32xf32> -> vector<304x32xf32>
    %65 = arith.truncf %64 : vector<304x32xf32> to vector<304x32xbf16>
    %c0_44 = arith.constant 0 : index
    %c0_45 = arith.constant 0 : index
    %c0_46 = arith.constant 0 : index
    %66 = vector.load %arg8[%c0_44, %c0_45, %c0_46] : memref<20x32x64xbf16, #tpu.memory_space<vmem>>, vector<1x32x64xbf16>
    %67 = vector.shape_cast %66 : vector<1x32x64xbf16> to vector<32x64xbf16>
    %cst_47 = arith.constant dense<0.000000e+00> : vector<16x64xf32>
    %68 = tpu.matmul %62, %67, %cst_47 {dimension_numbers = #tpu.dot_dimension_numbers<[1], [0], [0], [1], [0, 0, 1, 1], [], []>} : vector<16x32xbf16>, vector<32x64xbf16>, vector<16x64xf32> -> vector<16x64xf32>
    %69 = vector.extract_strided_slice %65 {offsets = [0, 0], sizes = [16, 32], strides = [1, 1]} : vector<304x32xbf16> to vector<16x32xbf16>
    %c1_48 = arith.constant 1 : index
    %c0_49 = arith.constant 0 : index
    %c0_50 = arith.constant 0 : index
    %70 = vector.load %arg8[%c1_48, %c0_49, %c0_50] : memref<20x32x64xbf16, #tpu.memory_space<vmem>>, vector<1x32x64xbf16>
    %71 = vector.shape_cast %70 : vector<1x32x64xbf16> to vector<32x64xbf16>
    %cst_51 = arith.constant dense<0.000000e+00> : vector<16x64xf32>
    %72 = tpu.matmul %69, %71, %cst_51 {dimension_numbers = #tpu.dot_dimension_numbers<[1], [0], [0], [1], [0, 0, 1, 1], [], []>} : vector<16x32xbf16>, vector<32x64xbf16>, vector<16x64xf32> -> vector<16x64xf32>
    %73 = arith.addf %68, %72 : vector<16x64xf32>
    %74 = vector.extract_strided_slice %65 {offsets = [16, 0], sizes = [16, 32], strides = [1, 1]} : vector<304x32xbf16> to vector<16x32xbf16>
    %c2_52 = arith.constant 2 : index
    %c0_53 = arith.constant 0 : index
    %c0_54 = arith.constant 0 : index
    %75 = vector.load %arg8[%c2_52, %c0_53, %c0_54] : memref<20x32x64xbf16, #tpu.memory_space<vmem>>, vector<1x32x64xbf16>
    %76 = vector.shape_cast %75 : vector<1x32x64xbf16> to vector<32x64xbf16>
    %cst_55 = arith.constant dense<0.000000e+00> : vector<16x64xf32>
    %77 = tpu.matmul %74, %76, %cst_55 {dimension_numbers = #tpu.dot_dimension_numbers<[1], [0], [0], [1], [0, 0, 1, 1], [], []>} : vector<16x32xbf16>, vector<32x64xbf16>, vector<16x64xf32> -> vector<16x64xf32>
    %78 = arith.addf %73, %77 : vector<16x64xf32>
    %79 = vector.extract_strided_slice %65 {offsets = [32, 0], sizes = [16, 32], strides = [1, 1]} : vector<304x32xbf16> to vector<16x32xbf16>
    %c3_56 = arith.constant 3 : index
    %c0_57 = arith.constant 0 : index
    %c0_58 = arith.constant 0 : index
    %80 = vector.load %arg8[%c3_56, %c0_57, %c0_58] : memref<20x32x64xbf16, #tpu.memory_space<vmem>>, vector<1x32x64xbf16>
    %81 = vector.shape_cast %80 : vector<1x32x64xbf16> to vector<32x64xbf16>
    %cst_59 = arith.constant dense<0.000000e+00> : vector<16x64xf32>
    %82 = tpu.matmul %79, %81, %cst_59 {dimension_numbers = #tpu.dot_dimension_numbers<[1], [0], [0], [1], [0, 0, 1, 1], [], []>} : vector<16x32xbf16>, vector<32x64xbf16>, vector<16x64xf32> -> vector<16x64xf32>
    %83 = arith.addf %78, %82 : vector<16x64xf32>
    %84 = vector.extract_strided_slice %65 {offsets = [48, 0], sizes = [16, 32], strides = [1, 1]} : vector<304x32xbf16> to vector<16x32xbf16>
    %c4_60 = arith.constant 4 : index
    %c0_61 = arith.constant 0 : index
    %c0_62 = arith.constant 0 : index
    %85 = vector.load %arg8[%c4_60, %c0_61, %c0_62] : memref<20x32x64xbf16, #tpu.memory_space<vmem>>, vector<1x32x64xbf16>
    %86 = vector.shape_cast %85 : vector<1x32x64xbf16> to vector<32x64xbf16>
    %cst_63 = arith.constant dense<0.000000e+00> : vector<16x64xf32>
    %87 = tpu.matmul %84, %86, %cst_63 {dimension_numbers = #tpu.dot_dimension_numbers<[1], [0], [0], [1], [0, 0, 1, 1], [], []>} : vector<16x32xbf16>, vector<32x64xbf16>, vector<16x64xf32> -> vector<16x64xf32>
    %88 = arith.addf %83, %87 : vector<16x64xf32>
    %89 = vector.extract_strided_slice %65 {offsets = [64, 0], sizes = [16, 32], strides = [1, 1]} : vector<304x32xbf16> to vector<16x32xbf16>
    %c5_64 = arith.constant 5 : index
    %c0_65 = arith.constant 0 : index
    %c0_66 = arith.constant 0 : index
    %90 = vector.load %arg8[%c5_64, %c0_65, %c0_66] : memref<20x32x64xbf16, #tpu.memory_space<vmem>>, vector<1x32x64xbf16>
    %91 = vector.shape_cast %90 : vector<1x32x64xbf16> to vector<32x64xbf16>
    %cst_67 = arith.constant dense<0.000000e+00> : vector<16x64xf32>
    %92 = tpu.matmul %89, %91, %cst_67 {dimension_numbers = #tpu.dot_dimension_numbers<[1], [0], [0], [1], [0, 0, 1, 1], [], []>} : vector<16x32xbf16>, vector<32x64xbf16>, vector<16x64xf32> -> vector<16x64xf32>
    %93 = arith.addf %88, %92 : vector<16x64xf32>
    %94 = vector.extract_strided_slice %65 {offsets = [80, 0], sizes = [16, 32], strides = [1, 1]} : vector<304x32xbf16> to vector<16x32xbf16>
    %c6_68 = arith.constant 6 : index
    %c0_69 = arith.constant 0 : index
    %c0_70 = arith.constant 0 : index
    %95 = vector.load %arg8[%c6_68, %c0_69, %c0_70] : memref<20x32x64xbf16, #tpu.memory_space<vmem>>, vector<1x32x64xbf16>
    %96 = vector.shape_cast %95 : vector<1x32x64xbf16> to vector<32x64xbf16>
    %cst_71 = arith.constant dense<0.000000e+00> : vector<16x64xf32>
    %97 = tpu.matmul %94, %96, %cst_71 {dimension_numbers = #tpu.dot_dimension_numbers<[1], [0], [0], [1], [0, 0, 1, 1], [], []>} : vector<16x32xbf16>, vector<32x64xbf16>, vector<16x64xf32> -> vector<16x64xf32>
    %98 = arith.addf %93, %97 : vector<16x64xf32>
    %99 = vector.extract_strided_slice %65 {offsets = [96, 0], sizes = [16, 32], strides = [1, 1]} : vector<304x32xbf16> to vector<16x32xbf16>
    %c7_72 = arith.constant 7 : index
    %c0_73 = arith.constant 0 : index
    %c0_74 = arith.constant 0 : index
    %100 = vector.load %arg8[%c7_72, %c0_73, %c0_74] : memref<20x32x64xbf16, #tpu.memory_space<vmem>>, vector<1x32x64xbf16>
    %101 = vector.shape_cast %100 : vector<1x32x64xbf16> to vector<32x64xbf16>
    %cst_75 = arith.constant dense<0.000000e+00> : vector<16x64xf32>
    %102 = tpu.matmul %99, %101, %cst_75 {dimension_numbers = #tpu.dot_dimension_numbers<[1], [0], [0], [1], [0, 0, 1, 1], [], []>} : vector<16x32xbf16>, vector<32x64xbf16>, vector<16x64xf32> -> vector<16x64xf32>
    %103 = arith.addf %98, %102 : vector<16x64xf32>
    %104 = vector.extract_strided_slice %65 {offsets = [112, 0], sizes = [16, 32], strides = [1, 1]} : vector<304x32xbf16> to vector<16x32xbf16>
    %c8_76 = arith.constant 8 : index
    %c0_77 = arith.constant 0 : index
    %c0_78 = arith.constant 0 : index
    %105 = vector.load %arg8[%c8_76, %c0_77, %c0_78] : memref<20x32x64xbf16, #tpu.memory_space<vmem>>, vector<1x32x64xbf16>
    %106 = vector.shape_cast %105 : vector<1x32x64xbf16> to vector<32x64xbf16>
    %cst_79 = arith.constant dense<0.000000e+00> : vector<16x64xf32>
    %107 = tpu.matmul %104, %106, %cst_79 {dimension_numbers = #tpu.dot_dimension_numbers<[1], [0], [0], [1], [0, 0, 1, 1], [], []>} : vector<16x32xbf16>, vector<32x64xbf16>, vector<16x64xf32> -> vector<16x64xf32>
    %108 = arith.addf %103, %107 : vector<16x64xf32>
    %109 = vector.extract_strided_slice %65 {offsets = [128, 0], sizes = [16, 32], strides = [1, 1]} : vector<304x32xbf16> to vector<16x32xbf16>
    %c9 = arith.constant 9 : index
    %c0_80 = arith.constant 0 : index
    %c0_81 = arith.constant 0 : index
    %110 = vector.load %arg8[%c9, %c0_80, %c0_81] : memref<20x32x64xbf16, #tpu.memory_space<vmem>>, vector<1x32x64xbf16>
    %111 = vector.shape_cast %110 : vector<1x32x64xbf16> to vector<32x64xbf16>
    %cst_82 = arith.constant dense<0.000000e+00> : vector<16x64xf32>
    %112 = tpu.matmul %109, %111, %cst_82 {dimension_numbers = #tpu.dot_dimension_numbers<[1], [0], [0], [1], [0, 0, 1, 1], [], []>} : vector<16x32xbf16>, vector<32x64xbf16>, vector<16x64xf32> -> vector<16x64xf32>
    %113 = arith.addf %108, %112 : vector<16x64xf32>
    %114 = vector.extract_strided_slice %65 {offsets = [144, 0], sizes = [16, 32], strides = [1, 1]} : vector<304x32xbf16> to vector<16x32xbf16>
    %c10 = arith.constant 10 : index
    %c0_83 = arith.constant 0 : index
    %c0_84 = arith.constant 0 : index
    %115 = vector.load %arg8[%c10, %c0_83, %c0_84] : memref<20x32x64xbf16, #tpu.memory_space<vmem>>, vector<1x32x64xbf16>
    %116 = vector.shape_cast %115 : vector<1x32x64xbf16> to vector<32x64xbf16>
    %cst_85 = arith.constant dense<0.000000e+00> : vector<16x64xf32>
    %117 = tpu.matmul %114, %116, %cst_85 {dimension_numbers = #tpu.dot_dimension_numbers<[1], [0], [0], [1], [0, 0, 1, 1], [], []>} : vector<16x32xbf16>, vector<32x64xbf16>, vector<16x64xf32> -> vector<16x64xf32>
    %118 = arith.addf %113, %117 : vector<16x64xf32>
    %119 = vector.extract_strided_slice %65 {offsets = [160, 0], sizes = [16, 32], strides = [1, 1]} : vector<304x32xbf16> to vector<16x32xbf16>
    %c11 = arith.constant 11 : index
    %c0_86 = arith.constant 0 : index
    %c0_87 = arith.constant 0 : index
    %120 = vector.load %arg8[%c11, %c0_86, %c0_87] : memref<20x32x64xbf16, #tpu.memory_space<vmem>>, vector<1x32x64xbf16>
    %121 = vector.shape_cast %120 : vector<1x32x64xbf16> to vector<32x64xbf16>
    %cst_88 = arith.constant dense<0.000000e+00> : vector<16x64xf32>
    %122 = tpu.matmul %119, %121, %cst_88 {dimension_numbers = #tpu.dot_dimension_numbers<[1], [0], [0], [1], [0, 0, 1, 1], [], []>} : vector<16x32xbf16>, vector<32x64xbf16>, vector<16x64xf32> -> vector<16x64xf32>
    %123 = arith.addf %118, %122 : vector<16x64xf32>
    %124 = vector.extract_strided_slice %65 {offsets = [176, 0], sizes = [16, 32], strides = [1, 1]} : vector<304x32xbf16> to vector<16x32xbf16>
    %c12 = arith.constant 12 : index
    %c0_89 = arith.constant 0 : index
    %c0_90 = arith.constant 0 : index
    %125 = vector.load %arg8[%c12, %c0_89, %c0_90] : memref<20x32x64xbf16, #tpu.memory_space<vmem>>, vector<1x32x64xbf16>
    %126 = vector.shape_cast %125 : vector<1x32x64xbf16> to vector<32x64xbf16>
    %cst_91 = arith.constant dense<0.000000e+00> : vector<16x64xf32>
    %127 = tpu.matmul %124, %126, %cst_91 {dimension_numbers = #tpu.dot_dimension_numbers<[1], [0], [0], [1], [0, 0, 1, 1], [], []>} : vector<16x32xbf16>, vector<32x64xbf16>, vector<16x64xf32> -> vector<16x64xf32>
    %128 = arith.addf %123, %127 : vector<16x64xf32>
    %129 = vector.extract_strided_slice %65 {offsets = [192, 0], sizes = [16, 32], strides = [1, 1]} : vector<304x32xbf16> to vector<16x32xbf16>
    %c13 = arith.constant 13 : index
    %c0_92 = arith.constant 0 : index
    %c0_93 = arith.constant 0 : index
    %130 = vector.load %arg8[%c13, %c0_92, %c0_93] : memref<20x32x64xbf16, #tpu.memory_space<vmem>>, vector<1x32x64xbf16>
    %131 = vector.shape_cast %130 : vector<1x32x64xbf16> to vector<32x64xbf16>
    %cst_94 = arith.constant dense<0.000000e+00> : vector<16x64xf32>
    %132 = tpu.matmul %129, %131, %cst_94 {dimension_numbers = #tpu.dot_dimension_numbers<[1], [0], [0], [1], [0, 0, 1, 1], [], []>} : vector<16x32xbf16>, vector<32x64xbf16>, vector<16x64xf32> -> vector<16x64xf32>
    %133 = arith.addf %128, %132 : vector<16x64xf32>
    %134 = vector.extract_strided_slice %65 {offsets = [208, 0], sizes = [16, 32], strides = [1, 1]} : vector<304x32xbf16> to vector<16x32xbf16>
    %c14 = arith.constant 14 : index
    %c0_95 = arith.constant 0 : index
    %c0_96 = arith.constant 0 : index
    %135 = vector.load %arg8[%c14, %c0_95, %c0_96] : memref<20x32x64xbf16, #tpu.memory_space<vmem>>, vector<1x32x64xbf16>
    %136 = vector.shape_cast %135 : vector<1x32x64xbf16> to vector<32x64xbf16>
    %cst_97 = arith.constant dense<0.000000e+00> : vector<16x64xf32>
    %137 = tpu.matmul %134, %136, %cst_97 {dimension_numbers = #tpu.dot_dimension_numbers<[1], [0], [0], [1], [0, 0, 1, 1], [], []>} : vector<16x32xbf16>, vector<32x64xbf16>, vector<16x64xf32> -> vector<16x64xf32>
    %138 = arith.addf %133, %137 : vector<16x64xf32>
    %139 = vector.extract_strided_slice %65 {offsets = [224, 0], sizes = [16, 32], strides = [1, 1]} : vector<304x32xbf16> to vector<16x32xbf16>
    %c15 = arith.constant 15 : index
    %c0_98 = arith.constant 0 : index
    %c0_99 = arith.constant 0 : index
    %140 = vector.load %arg8[%c15, %c0_98, %c0_99] : memref<20x32x64xbf16, #tpu.memory_space<vmem>>, vector<1x32x64xbf16>
    %141 = vector.shape_cast %140 : vector<1x32x64xbf16> to vector<32x64xbf16>
    %cst_100 = arith.constant dense<0.000000e+00> : vector<16x64xf32>
    %142 = tpu.matmul %139, %141, %cst_100 {dimension_numbers = #tpu.dot_dimension_numbers<[1], [0], [0], [1], [0, 0, 1, 1], [], []>} : vector<16x32xbf16>, vector<32x64xbf16>, vector<16x64xf32> -> vector<16x64xf32>
    %143 = arith.addf %138, %142 : vector<16x64xf32>
    %144 = vector.extract_strided_slice %65 {offsets = [240, 0], sizes = [16, 32], strides = [1, 1]} : vector<304x32xbf16> to vector<16x32xbf16>
    %c16 = arith.constant 16 : index
    %c0_101 = arith.constant 0 : index
    %c0_102 = arith.constant 0 : index
    %145 = vector.load %arg8[%c16, %c0_101, %c0_102] : memref<20x32x64xbf16, #tpu.memory_space<vmem>>, vector<1x32x64xbf16>
    %146 = vector.shape_cast %145 : vector<1x32x64xbf16> to vector<32x64xbf16>
    %cst_103 = arith.constant dense<0.000000e+00> : vector<16x64xf32>
    %147 = tpu.matmul %144, %146, %cst_103 {dimension_numbers = #tpu.dot_dimension_numbers<[1], [0], [0], [1], [0, 0, 1, 1], [], []>} : vector<16x32xbf16>, vector<32x64xbf16>, vector<16x64xf32> -> vector<16x64xf32>
    %148 = arith.addf %143, %147 : vector<16x64xf32>
    %149 = vector.extract_strided_slice %65 {offsets = [256, 0], sizes = [16, 32], strides = [1, 1]} : vector<304x32xbf16> to vector<16x32xbf16>
    %c17 = arith.constant 17 : index
    %c0_104 = arith.constant 0 : index
    %c0_105 = arith.constant 0 : index
    %150 = vector.load %arg8[%c17, %c0_104, %c0_105] : memref<20x32x64xbf16, #tpu.memory_space<vmem>>, vector<1x32x64xbf16>
    %151 = vector.shape_cast %150 : vector<1x32x64xbf16> to vector<32x64xbf16>
    %cst_106 = arith.constant dense<0.000000e+00> : vector<16x64xf32>
    %152 = tpu.matmul %149, %151, %cst_106 {dimension_numbers = #tpu.dot_dimension_numbers<[1], [0], [0], [1], [0, 0, 1, 1], [], []>} : vector<16x32xbf16>, vector<32x64xbf16>, vector<16x64xf32> -> vector<16x64xf32>
    %153 = arith.addf %148, %152 : vector<16x64xf32>
    %154 = vector.extract_strided_slice %65 {offsets = [272, 0], sizes = [16, 32], strides = [1, 1]} : vector<304x32xbf16> to vector<16x32xbf16>
    %c18 = arith.constant 18 : index
    %c0_107 = arith.constant 0 : index
    %c0_108 = arith.constant 0 : index
    %155 = vector.load %arg8[%c18, %c0_107, %c0_108] : memref<20x32x64xbf16, #tpu.memory_space<vmem>>, vector<1x32x64xbf16>
    %156 = vector.shape_cast %155 : vector<1x32x64xbf16> to vector<32x64xbf16>
    %cst_109 = arith.constant dense<0.000000e+00> : vector<16x64xf32>
    %157 = tpu.matmul %154, %156, %cst_109 {dimension_numbers = #tpu.dot_dimension_numbers<[1], [0], [0], [1], [0, 0, 1, 1], [], []>} : vector<16x32xbf16>, vector<32x64xbf16>, vector<16x64xf32> -> vector<16x64xf32>
    %158 = arith.addf %153, %157 : vector<16x64xf32>
    %159 = vector.extract_strided_slice %65 {offsets = [288, 0], sizes = [16, 32], strides = [1, 1]} : vector<304x32xbf16> to vector<16x32xbf16>
    %c19 = arith.constant 19 : index
    %c0_110 = arith.constant 0 : index
    %c0_111 = arith.constant 0 : index
    %160 = vector.load %arg8[%c19, %c0_110, %c0_111] : memref<20x32x64xbf16, #tpu.memory_space<vmem>>, vector<1x32x64xbf16>
    %161 = vector.shape_cast %160 : vector<1x32x64xbf16> to vector<32x64xbf16>
    %cst_112 = arith.constant dense<0.000000e+00> : vector<16x64xf32>
    %162 = tpu.matmul %159, %161, %cst_112 {dimension_numbers = #tpu.dot_dimension_numbers<[1], [0], [0], [1], [0, 0, 1, 1], [], []>} : vector<16x32xbf16>, vector<32x64xbf16>, vector<16x64xf32> -> vector<16x64xf32>
    %163 = arith.addf %158, %162 : vector<16x64xf32>
    %c0_113 = arith.constant 0 : index
    %c0_114 = arith.constant 0 : index
    %164 = vector.load %arg9[%c0_113, %c0_114] : memref<1x64xf32, #tpu.memory_space<vmem>>, vector<1x64xf32>
    %165 = vector.broadcast %164 : vector<1x64xf32> to vector<16x64xf32>
    %166 = arith.addf %163, %165 : vector<16x64xf32>
    %cst_115 = arith.constant 0.000000e+00 : f32
    %167 = vector.broadcast %cst_115 : f32 to vector<16x64xf32>
    %168 = arith.maximumf %166, %167 : vector<16x64xf32>
    %169 = arith.truncf %168 : vector<16x64xf32> to vector<16x64xbf16>
    %c0_116 = arith.constant 0 : index
    %c0_117 = arith.constant 0 : index
    %170 = vector.load %arg10[%c0_116, %c0_117] : memref<64x16xbf16, #tpu.memory_space<vmem>>, vector<64x16xbf16>
    %cst_118 = arith.constant dense<0.000000e+00> : vector<16x16xf32>
    %171 = tpu.matmul %169, %170, %cst_118 {dimension_numbers = #tpu.dot_dimension_numbers<[1], [0], [0], [1], [0, 0, 1, 1], [], []>} : vector<16x64xbf16>, vector<64x16xbf16>, vector<16x16xf32> -> vector<16x16xf32>
    %c0_119 = arith.constant 0 : index
    %c0_120 = arith.constant 0 : index
    %172 = vector.load %arg11[%c0_119, %c0_120] : memref<1x16xf32, #tpu.memory_space<vmem>>, vector<1x16xf32>
    %173 = vector.broadcast %172 : vector<1x16xf32> to vector<16x16xf32>
    %174 = arith.addf %171, %173 : vector<16x16xf32>
    %cst_121 = arith.constant 0.000000e+00 : f32
    %175 = vector.broadcast %cst_121 : f32 to vector<16x16xf32>
    %176 = arith.maximumf %174, %175 : vector<16x16xf32>
    %177 = arith.truncf %176 : vector<16x16xf32> to vector<16x16xbf16>
    %c0_122 = arith.constant 0 : index
    %c0_123 = arith.constant 0 : index
    %178 = vector.load %arg12[%c0_122, %c0_123] : memref<144x16xbf16, #tpu.memory_space<vmem>>, vector<144x16xbf16>
    %cst_124 = arith.constant dense<0.000000e+00> : vector<144x16xf32>
    %179 = tpu.matmul %178, %177, %cst_124 {dimension_numbers = #tpu.dot_dimension_numbers<[1], [0], [0], [1], [0, 0, 1, 1], [], []>} : vector<144x16xbf16>, vector<16x16xbf16>, vector<144x16xf32> -> vector<144x16xf32>
    %180 = arith.truncf %179 : vector<144x16xf32> to vector<144x16xbf16>
    %181 = vector.extract_strided_slice %180 {offsets = [0, 0], sizes = [16, 16], strides = [1, 1]} : vector<144x16xbf16> to vector<16x16xbf16>
    %c0_125 = arith.constant 0 : index
    %c0_126 = arith.constant 0 : index
    %c0_127 = arith.constant 0 : index
    %182 = vector.load %arg13[%c0_125, %c0_126, %c0_127] : memref<9x16x16xbf16, #tpu.memory_space<vmem>>, vector<1x16x16xbf16>
    %183 = vector.shape_cast %182 : vector<1x16x16xbf16> to vector<16x16xbf16>
    %cst_128 = arith.constant dense<0.000000e+00> : vector<16x16xf32>
    %184 = tpu.matmul %181, %183, %cst_128 {dimension_numbers = #tpu.dot_dimension_numbers<[1], [0], [0], [1], [0, 0, 1, 1], [], []>} : vector<16x16xbf16>, vector<16x16xbf16>, vector<16x16xf32> -> vector<16x16xf32>
    %185 = vector.extract_strided_slice %180 {offsets = [16, 0], sizes = [16, 16], strides = [1, 1]} : vector<144x16xbf16> to vector<16x16xbf16>
    %c1_129 = arith.constant 1 : index
    %c0_130 = arith.constant 0 : index
    %c0_131 = arith.constant 0 : index
    %186 = vector.load %arg13[%c1_129, %c0_130, %c0_131] : memref<9x16x16xbf16, #tpu.memory_space<vmem>>, vector<1x16x16xbf16>
    %187 = vector.shape_cast %186 : vector<1x16x16xbf16> to vector<16x16xbf16>
    %cst_132 = arith.constant dense<0.000000e+00> : vector<16x16xf32>
    %188 = tpu.matmul %185, %187, %cst_132 {dimension_numbers = #tpu.dot_dimension_numbers<[1], [0], [0], [1], [0, 0, 1, 1], [], []>} : vector<16x16xbf16>, vector<16x16xbf16>, vector<16x16xf32> -> vector<16x16xf32>
    %189 = arith.addf %184, %188 : vector<16x16xf32>
    %190 = vector.extract_strided_slice %180 {offsets = [32, 0], sizes = [16, 16], strides = [1, 1]} : vector<144x16xbf16> to vector<16x16xbf16>
    %c2_133 = arith.constant 2 : index
    %c0_134 = arith.constant 0 : index
    %c0_135 = arith.constant 0 : index
    %191 = vector.load %arg13[%c2_133, %c0_134, %c0_135] : memref<9x16x16xbf16, #tpu.memory_space<vmem>>, vector<1x16x16xbf16>
    %192 = vector.shape_cast %191 : vector<1x16x16xbf16> to vector<16x16xbf16>
    %cst_136 = arith.constant dense<0.000000e+00> : vector<16x16xf32>
    %193 = tpu.matmul %190, %192, %cst_136 {dimension_numbers = #tpu.dot_dimension_numbers<[1], [0], [0], [1], [0, 0, 1, 1], [], []>} : vector<16x16xbf16>, vector<16x16xbf16>, vector<16x16xf32> -> vector<16x16xf32>
    %194 = arith.addf %189, %193 : vector<16x16xf32>
    %195 = vector.extract_strided_slice %180 {offsets = [48, 0], sizes = [16, 16], strides = [1, 1]} : vector<144x16xbf16> to vector<16x16xbf16>
    %c3_137 = arith.constant 3 : index
    %c0_138 = arith.constant 0 : index
    %c0_139 = arith.constant 0 : index
    %196 = vector.load %arg13[%c3_137, %c0_138, %c0_139] : memref<9x16x16xbf16, #tpu.memory_space<vmem>>, vector<1x16x16xbf16>
    %197 = vector.shape_cast %196 : vector<1x16x16xbf16> to vector<16x16xbf16>
    %cst_140 = arith.constant dense<0.000000e+00> : vector<16x16xf32>
    %198 = tpu.matmul %195, %197, %cst_140 {dimension_numbers = #tpu.dot_dimension_numbers<[1], [0], [0], [1], [0, 0, 1, 1], [], []>} : vector<16x16xbf16>, vector<16x16xbf16>, vector<16x16xf32> -> vector<16x16xf32>
    %199 = arith.addf %194, %198 : vector<16x16xf32>
    %200 = vector.extract_strided_slice %180 {offsets = [64, 0], sizes = [16, 16], strides = [1, 1]} : vector<144x16xbf16> to vector<16x16xbf16>
    %c4_141 = arith.constant 4 : index
    %c0_142 = arith.constant 0 : index
    %c0_143 = arith.constant 0 : index
    %201 = vector.load %arg13[%c4_141, %c0_142, %c0_143] : memref<9x16x16xbf16, #tpu.memory_space<vmem>>, vector<1x16x16xbf16>
    %202 = vector.shape_cast %201 : vector<1x16x16xbf16> to vector<16x16xbf16>
    %cst_144 = arith.constant dense<0.000000e+00> : vector<16x16xf32>
    %203 = tpu.matmul %200, %202, %cst_144 {dimension_numbers = #tpu.dot_dimension_numbers<[1], [0], [0], [1], [0, 0, 1, 1], [], []>} : vector<16x16xbf16>, vector<16x16xbf16>, vector<16x16xf32> -> vector<16x16xf32>
    %204 = arith.addf %199, %203 : vector<16x16xf32>
    %205 = vector.extract_strided_slice %180 {offsets = [80, 0], sizes = [16, 16], strides = [1, 1]} : vector<144x16xbf16> to vector<16x16xbf16>
    %c5_145 = arith.constant 5 : index
    %c0_146 = arith.constant 0 : index
    %c0_147 = arith.constant 0 : index
    %206 = vector.load %arg13[%c5_145, %c0_146, %c0_147] : memref<9x16x16xbf16, #tpu.memory_space<vmem>>, vector<1x16x16xbf16>
    %207 = vector.shape_cast %206 : vector<1x16x16xbf16> to vector<16x16xbf16>
    %cst_148 = arith.constant dense<0.000000e+00> : vector<16x16xf32>
    %208 = tpu.matmul %205, %207, %cst_148 {dimension_numbers = #tpu.dot_dimension_numbers<[1], [0], [0], [1], [0, 0, 1, 1], [], []>} : vector<16x16xbf16>, vector<16x16xbf16>, vector<16x16xf32> -> vector<16x16xf32>
    %209 = arith.addf %204, %208 : vector<16x16xf32>
    %210 = vector.extract_strided_slice %180 {offsets = [96, 0], sizes = [16, 16], strides = [1, 1]} : vector<144x16xbf16> to vector<16x16xbf16>
    %c6_149 = arith.constant 6 : index
    %c0_150 = arith.constant 0 : index
    %c0_151 = arith.constant 0 : index
    %211 = vector.load %arg13[%c6_149, %c0_150, %c0_151] : memref<9x16x16xbf16, #tpu.memory_space<vmem>>, vector<1x16x16xbf16>
    %212 = vector.shape_cast %211 : vector<1x16x16xbf16> to vector<16x16xbf16>
    %cst_152 = arith.constant dense<0.000000e+00> : vector<16x16xf32>
    %213 = tpu.matmul %210, %212, %cst_152 {dimension_numbers = #tpu.dot_dimension_numbers<[1], [0], [0], [1], [0, 0, 1, 1], [], []>} : vector<16x16xbf16>, vector<16x16xbf16>, vector<16x16xf32> -> vector<16x16xf32>
    %214 = arith.addf %209, %213 : vector<16x16xf32>
    %215 = vector.extract_strided_slice %180 {offsets = [112, 0], sizes = [16, 16], strides = [1, 1]} : vector<144x16xbf16> to vector<16x16xbf16>
    %c7_153 = arith.constant 7 : index
    %c0_154 = arith.constant 0 : index
    %c0_155 = arith.constant 0 : index
    %216 = vector.load %arg13[%c7_153, %c0_154, %c0_155] : memref<9x16x16xbf16, #tpu.memory_space<vmem>>, vector<1x16x16xbf16>
    %217 = vector.shape_cast %216 : vector<1x16x16xbf16> to vector<16x16xbf16>
    %cst_156 = arith.constant dense<0.000000e+00> : vector<16x16xf32>
    %218 = tpu.matmul %215, %217, %cst_156 {dimension_numbers = #tpu.dot_dimension_numbers<[1], [0], [0], [1], [0, 0, 1, 1], [], []>} : vector<16x16xbf16>, vector<16x16xbf16>, vector<16x16xf32> -> vector<16x16xf32>
    %219 = arith.addf %214, %218 : vector<16x16xf32>
    %220 = vector.extract_strided_slice %180 {offsets = [128, 0], sizes = [16, 16], strides = [1, 1]} : vector<144x16xbf16> to vector<16x16xbf16>
    %c8_157 = arith.constant 8 : index
    %c0_158 = arith.constant 0 : index
    %c0_159 = arith.constant 0 : index
    %221 = vector.load %arg13[%c8_157, %c0_158, %c0_159] : memref<9x16x16xbf16, #tpu.memory_space<vmem>>, vector<1x16x16xbf16>
    %222 = vector.shape_cast %221 : vector<1x16x16xbf16> to vector<16x16xbf16>
    %cst_160 = arith.constant dense<0.000000e+00> : vector<16x16xf32>
    %223 = tpu.matmul %220, %222, %cst_160 {dimension_numbers = #tpu.dot_dimension_numbers<[1], [0], [0], [1], [0, 0, 1, 1], [], []>} : vector<16x16xbf16>, vector<16x16xbf16>, vector<16x16xf32> -> vector<16x16xf32>
    %224 = arith.addf %219, %223 : vector<16x16xf32>
    %c0_161 = arith.constant 0 : index
    %c0_162 = arith.constant 0 : index
    %225 = vector.load %arg14[%c0_161, %c0_162] : memref<1x16xf32, #tpu.memory_space<vmem>>, vector<1x16xf32>
    %226 = vector.broadcast %225 : vector<1x16xf32> to vector<16x16xf32>
    %227 = arith.addf %224, %226 : vector<16x16xf32>
    %cst_163 = arith.constant 0.000000e+00 : f32
    %228 = vector.broadcast %cst_163 : f32 to vector<16x16xf32>
    %229 = arith.maximumf %227, %228 : vector<16x16xf32>
    %230 = arith.truncf %229 : vector<16x16xf32> to vector<16x16xbf16>
    %c0_164 = arith.constant 0 : index
    %c0_165 = arith.constant 0 : index
    %231 = vector.load %arg15[%c0_164, %c0_165] : memref<16x128xbf16, #tpu.memory_space<vmem>>, vector<16x128xbf16>
    %cst_166 = arith.constant dense<0.000000e+00> : vector<16x128xf32>
    %232 = tpu.matmul %230, %231, %cst_166 {dimension_numbers = #tpu.dot_dimension_numbers<[1], [0], [0], [1], [0, 0, 1, 1], [], []>} : vector<16x16xbf16>, vector<16x128xbf16>, vector<16x128xf32> -> vector<16x128xf32>
    %c0_167 = arith.constant 0 : index
    %c0_168 = arith.constant 0 : index
    %233 = vector.load %arg16[%c0_167, %c0_168] : memref<1x128xf32, #tpu.memory_space<vmem>>, vector<1x128xf32>
    %234 = vector.broadcast %233 : vector<1x128xf32> to vector<16x128xf32>
    %235 = arith.addf %232, %234 : vector<16x128xf32>
    %236 = arith.truncf %235 : vector<16x128xf32> to vector<16x128xbf16>
    %c0_169 = arith.constant 0 : index
    %c0_170 = arith.constant 0 : index
    %237 = vector.load %arg17[%c0_169, %c0_170] : memref<256x16xbf16, #tpu.memory_space<vmem>>, vector<256x16xbf16>
    %cst_171 = arith.constant dense<0.000000e+00> : vector<256x128xf32>
    %238 = tpu.matmul %237, %236, %cst_171 {dimension_numbers = #tpu.dot_dimension_numbers<[1], [0], [0], [1], [0, 0, 1, 1], [], []>} : vector<256x16xbf16>, vector<16x128xbf16>, vector<256x128xf32> -> vector<256x128xf32>
    %c0_172 = arith.constant 0 : index
    %c0_173 = arith.constant 0 : index
    %c0_174 = arith.constant 0 : index
    %239 = vector.load %arg18[%c0_172, %c0_173, %c0_174] : memref<1x256x128xf32, #tpu.memory_space<vmem>>, vector<1x256x128xf32>
    %240 = vector.shape_cast %239 : vector<1x256x128xf32> to vector<256x128xf32>
    %241 = vector.shape_cast %238 : vector<256x128xf32> to vector<1x256x128xf32>
    tpu.vector_store %arg18[%c0_172, %c0_173, %c0_174], %241 {strides = array<i32>} : memref<1x256x128xf32, #tpu.memory_space<vmem>>, vector<1x256x128xf32>,
    return
  }
  func.func @transform_0(%arg0: i32) -> (i32, i32, i32) {
    %c0_i32 = arith.constant 0 : i32
    %c0_i32_0 = arith.constant 0 : i32
    %c0_i32_1 = arith.constant 0 : i32
    return %arg0, %c0_i32, %c0_i32_0 : i32, i32, i32
  }
  func.func @transform_1(%arg0: i32) -> (i32, i32) {
    %c0_i32 = arith.constant 0 : i32
    %c0_i32_0 = arith.constant 0 : i32
    %c0_i32_1 = arith.constant 0 : i32
    return %c0_i32, %c0_i32_0 : i32, i32
  }
  func.func @transform_2(%arg0: i32) -> (i32, i32) {
    %c0_i32 = arith.constant 0 : i32
    %c0_i32_0 = arith.constant 0 : i32
    %c0_i32_1 = arith.constant 0 : i32
    return %c0_i32, %c0_i32_0 : i32, i32
  }
  func.func @transform_3(%arg0: i32) -> (i32, i32) {
    %c0_i32 = arith.constant 0 : i32
    %c0_i32_0 = arith.constant 0 : i32
    %c0_i32_1 = arith.constant 0 : i32
    return %c0_i32, %c0_i32_0 : i32, i32
  }
  func.func @transform_4(%arg0: i32) -> (i32, i32, i32) {
    %c0_i32 = arith.constant 0 : i32
    %c0_i32_0 = arith.constant 0 : i32
    %c0_i32_1 = arith.constant 0 : i32
    %c0_i32_2 = arith.constant 0 : i32
    return %c0_i32, %c0_i32_0, %c0_i32_1 : i32, i32, i32
  }
  func.func @transform_5(%arg0: i32) -> (i32, i32) {
    %c0_i32 = arith.constant 0 : i32
    %c0_i32_0 = arith.constant 0 : i32
    %c0_i32_1 = arith.constant 0 : i32
    return %c0_i32, %c0_i32_0 : i32, i32
  }
  func.func @transform_6(%arg0: i32) -> (i32, i32) {
    %c0_i32 = arith.constant 0 : i32
    %c0_i32_0 = arith.constant 0 : i32
    %c0_i32_1 = arith.constant 0 : i32
    return %c0_i32, %c0_i32_0 : i32, i32
  }
  func.func @transform_7(%arg0: i32) -> (i32, i32, i32) {
    %c0_i32 = arith.constant 0 : i32
    %c0_i32_0 = arith.constant 0 : i32
    %c0_i32_1 = arith.constant 0 : i32
    %c0_i32_2 = arith.constant 0 : i32
    return %c0_i32, %c0_i32_0, %c0_i32_1 : i32, i32, i32
  }
  func.func @transform_8(%arg0: i32) -> (i32, i32) {
    %c0_i32 = arith.constant 0 : i32
    %c0_i32_0 = arith.constant 0 : i32
    %c0_i32_1 = arith.constant 0 : i32
    return %c0_i32, %c0_i32_0 : i32, i32
  }
  func.func @transform_9(%arg0: i32) -> (i32, i32) {
    %c0_i32 = arith.constant 0 : i32
    %c0_i32_0 = arith.constant 0 : i32
    %c0_i32_1 = arith.constant 0 : i32
    return %c0_i32, %c0_i32_0 : i32, i32
  }
  func.func @transform_10(%arg0: i32) -> (i32, i32) {
    %c0_i32 = arith.constant 0 : i32
    %c0_i32_0 = arith.constant 0 : i32
    %c0_i32_1 = arith.constant 0 : i32
    return %c0_i32, %c0_i32_0 : i32, i32
  }
  func.func @transform_11(%arg0: i32) -> (i32, i32) {
    %c0_i32 = arith.constant 0 : i32
    %c0_i32_0 = arith.constant 0 : i32
    %c0_i32_1 = arith.constant 0 : i32
    return %c0_i32, %c0_i32_0 : i32, i32
  }
  func.func @transform_12(%arg0: i32) -> (i32, i32, i32) {
    %c0_i32 = arith.constant 0 : i32
    %c0_i32_0 = arith.constant 0 : i32
    %c0_i32_1 = arith.constant 0 : i32
    %c0_i32_2 = arith.constant 0 : i32
    return %c0_i32, %c0_i32_0, %c0_i32_1 : i32, i32, i32
  }
  func.func @transform_13(%arg0: i32) -> (i32, i32) {
    %c0_i32 = arith.constant 0 : i32
    %c0_i32_0 = arith.constant 0 : i32
    %c0_i32_1 = arith.constant 0 : i32
    return %c0_i32, %c0_i32_0 : i32, i32
  }
  func.func @transform_14(%arg0: i32) -> (i32, i32) {
    %c0_i32 = arith.constant 0 : i32
    %c0_i32_0 = arith.constant 0 : i32
    %c0_i32_1 = arith.constant 0 : i32
    return %c0_i32, %c0_i32_0 : i32, i32
  }
  func.func @transform_15(%arg0: i32) -> (i32, i32) {
    %c0_i32 = arith.constant 0 : i32
    %c0_i32_0 = arith.constant 0 : i32
    %c0_i32_1 = arith.constant 0 : i32
    return %c0_i32, %c0_i32_0 : i32, i32
  }
  func.func @transform_16(%arg0: i32) -> (i32, i32) {
    %c0_i32 = arith.constant 0 : i32
    %c0_i32_0 = arith.constant 0 : i32
    %c0_i32_1 = arith.constant 0 : i32
    return %c0_i32, %c0_i32_0 : i32, i32
  }
  func.func @transform_17(%arg0: i32) -> (i32, i32, i32) {
    %c0_i32 = arith.constant 0 : i32
    %c0_i32_0 = arith.constant 0 : i32
    %c0_i32_1 = arith.constant 0 : i32
    return %arg0, %c0_i32, %c0_i32_0 : i32, i32, i32
  }
}

</mosaic_0001>

<llo_original>
// kernel: deeplabv3_wrapper_forward.1
$region0: #{deeplabv3_wrapper_forward.1}
  #allocation0 [shape = 'u32[]', space=smem, size = 0x4, offset = 0x4, fixed_abs, tag = 'smem constant byte address 0x4 - core index']
  #allocation1 [shape = 'u32[144,128]{1,0:T(1,128)}', space=vmem, size = 0x12000, scoped, tag = 'internal scratch']
  %s0 = inlined_call_operand.vmem [shape: bf16[2,64,128], index: 0, kind: input, shape index: {}]
  %s1 = inlined_call_operand.vmem [shape: bf16[128,16], index: 1, kind: input, shape index: {}]
  %s2 = inlined_call_operand.vmem [shape: f32[1,16], index: 2, kind: input, shape index: {}]
  %s3 = inlined_call_operand.vmem [shape: bf16[144,64], index: 3, kind: input, shape index: {}]
  %s4 = inlined_call_operand.vmem [shape: bf16[9,16,32], index: 4, kind: input, shape index: {}]
  %s5 = inlined_call_operand.vmem [shape: f32[1,32], index: 5, kind: input, shape index: {}]
  %s6 = inlined_call_operand.vmem [shape: bf16[304,16], index: 6, kind: input, shape index: {}]
  %s7 = inlined_call_operand.vmem [shape: bf16[20,32,64], index: 7, kind: input, shape index: {}]
  %s8 = inlined_call_operand.vmem [shape: f32[1,64], index: 8, kind: input, shape index: {}]
  %s9 = inlined_call_operand.vmem [shape: bf16[64,16], index: 9, kind: input, shape index: {}]
  %s10 = inlined_call_operand.vmem [shape: f32[1,16], index: 10, kind: input, shape index: {}]
  %s11 = inlined_call_operand.vmem [shape: bf16[144,16], index: 11, kind: input, shape index: {}]
  %s12 = inlined_call_operand.vmem [shape: bf16[9,16,16], index: 12, kind: input, shape index: {}]
  %s13 = inlined_call_operand.vmem [shape: f32[1,16], index: 13, kind: input, shape index: {}]
  %s14 = inlined_call_operand.vmem [shape: bf16[16,128], index: 14, kind: input, shape index: {}]
  %s15 = inlined_call_operand.vmem [shape: f32[1,128], index: 15, kind: input, shape index: {}]
  %s16 = inlined_call_operand.vmem [shape: bf16[256,16], index: 16, kind: input, shape index: {}]
  %s17 = inlined_call_operand.vmem [shape: f32[2,256,128], index: 17, kind: output, shape index: {}]
  %s18 = sld [smem:[#allocation0]]
  $region101: #{deeplabv3_wrapper_forward.1} parent=0
    _
  %s20 = ssub.s32 1, %s18
  %s21 = scalar_select 0, %s20, %s18
  loop: start=0, step=1, limit=4
  $region2: #{deeplabv3_wrapper_forward.1} parent=0 // loop_pre_header
    _
  $region3: #{deeplabv3_wrapper_forward.1} parent=0 // loop_header
    %s23 = sphi 0, %s27
    %p24 = scmp.ge.s32.totalorder %s23, 4
    %s33 = sphi 0, %s35
    %s36 = sphi 0, %s33
    %s37 = sphi 0, %s36
    %s53 = sphi 0, %s37
    %s57 = sphi 0, %s57
    %s59 = sphi 0, %s57
    %s60 = sphi 0, %s59
    %s74 = sphi 0, %s60
    %s78 = sphi 0, %s78
    %s80 = sphi 0, %s78
    %s81 = sphi 0, %s80
    %s95 = sphi 0, %s81
    %s99 = sphi 0, %s99
    %s101 = sphi 0, %s99
    %s102 = sphi 0, %s101
    %s116 = sphi 0, %s102
    %s120 = sphi 0, %s120
    %s122 = sphi 0, %s120
    %s123 = sphi 0, %s122
    %s137 = sphi 0, %s123
    %s141 = sphi 0, %s141
    %s143 = sphi 0, %s141
    %s144 = sphi 0, %s143
    %s158 = sphi 0, %s144
    %s162 = sphi 0, %s162
    %s164 = sphi 0, %s162
    %s165 = sphi 0, %s164
    %s179 = sphi 0, %s165
    %s183 = sphi 0, %s183
    %s185 = sphi 0, %s183
    %s186 = sphi 0, %s185
    %s200 = sphi 0, %s186
    %s204 = sphi 0, %s204
    %s206 = sphi 0, %s204
    %s207 = sphi 0, %s206
    %s221 = sphi 0, %s207
    %s225 = sphi 0, %s225
    %s227 = sphi 0, %s225
    %s228 = sphi 0, %s227
    %s242 = sphi 0, %s228
    %s246 = sphi 0, %s246
    %s248 = sphi 0, %s246
    %s249 = sphi 0, %s248
    %s263 = sphi 0, %s249
    %s267 = sphi 0, %s267
    %s269 = sphi 0, %s267
    %s270 = sphi 0, %s269
    %s284 = sphi 0, %s270
    %s288 = sphi 0, %s288
    %s290 = sphi 0, %s288
    %s291 = sphi 0, %s290
    %s305 = sphi 0, %s291
    %s309 = sphi 0, %s309
    %s311 = sphi 0, %s309
    %s312 = sphi 0, %s311
    %s326 = sphi 0, %s312
    %s330 = sphi 0, %s330
    %s332 = sphi 0, %s330
    %s333 = sphi 0, %s332
    %s347 = sphi 0, %s333
    %s351 = sphi 0, %s351
    %s353 = sphi 0, %s351
    %s354 = sphi 0, %s353
    %s368 = sphi 0, %s354
    %s372 = sphi 0, %s372
    %s374 = sphi 0, %s372
    %s375 = sphi 0, %s374
    %s389 = sphi 0, %s375
    %s395 = sphi 0, %s397
    %s398 = sphi 0, %s395
    %s399 = sphi 0, %s398
    %s415 = sphi 0, %s399
  $region4: #{deeplabv3_wrapper_forward.1} parent=0 // loop_header_branch
    %26 = sbr.rel (%p24) target = $region8
  $region5: #{deeplabv3_wrapper_forward.1} parent=0 // loop_body
    %s28 = ssub.s32 %s23, 1
    %s29 = ssub.s32 %s23, 2
    %s30 = sadd.s32 %s23, 1
    %s31 = ssub.s32 %s23, %s30
    %p32 = scmp.eq.s32.totalorder %s31, 0
    %s34 = sadd.s32 %s33, 1
    %s35 = scalar_select %p32, %s33, %s34
    %p38 = pneg %p32
    %p39 = scmp.eq.s32.totalorder %s23, 1
    %p40 = por %p38, %p39
    %p41 = scmp.ne.s32.totalorder %s33, %s36
    %p42 = scmp.eq.s32.totalorder %s23, 0
    %p43 = por %p41, %p42
    %p44 = scmp.ne.s32.totalorder %s33, %s36
    %p45 = scmp.eq.s32.totalorder %s28, 1
    %p46 = por %p44, %p45
    %p47 = scmp.ne.s32.totalorder %s36, %s37
    %p48 = scmp.eq.s32.totalorder %s28, 0
    %p49 = por %p47, %p48
    %p50 = scmp.ne.s32.totalorder %s36, %s37
    %p51 = scmp.eq.s32.totalorder %s29, 1
    %p52 = por %p50, %p51
    %p54 = scmp.ne.s32.totalorder %s37, %s53
    %p55 = scmp.eq.s32.totalorder %s29, 0
    %p56 = por %p54, %p55
    %s58 = sadd.s32 %s57, 1
    %p61 = scmp.eq.s32.totalorder %s23, 1
    %p62 = scmp.ne.s32.totalorder %s57, %s59
    %p63 = scmp.eq.s32.totalorder %s23, 0
    %p64 = por %p62, %p63
    %p65 = scmp.ne.s32.totalorder %s57, %s59
    %p66 = scmp.eq.s32.totalorder %s28, 1
    %p67 = por %p65, %p66
    %p68 = scmp.ne.s32.totalorder %s59, %s60
    %p69 = scmp.eq.s32.totalorder %s28, 0
    %p70 = por %p68, %p69
    %p71 = scmp.ne.s32.totalorder %s59, %s60
    %p72 = scmp.eq.s32.totalorder %s29, 1
    %p73 = por %p71, %p72
    %p75 = scmp.ne.s32.totalorder %s60, %s74
    %p76 = scmp.eq.s32.totalorder %s29, 0
    %p77 = por %p75, %p76
    %s79 = sadd.s32 %s78, 1
    %p82 = scmp.eq.s32.totalorder %s23, 1
    %p83 = scmp.ne.s32.totalorder %s78, %s80
    %p84 = scmp.eq.s32.totalorder %s23, 0
    %p85 = por %p83, %p84
    %p86 = scmp.ne.s32.totalorder %s78, %s80
    %p87 = scmp.eq.s32.totalorder %s28, 1
    %p88 = por %p86, %p87
    %p89 = scmp.ne.s32.totalorder %s80, %s81
    %p90 = scmp.eq.s32.totalorder %s28, 0
    %p91 = por %p89, %p90
    %p92 = scmp.ne.s32.totalorder %s80, %s81
    %p93 = scmp.eq.s32.totalorder %s29, 1
    %p94 = por %p92, %p93
    %p96 = scmp.ne.s32.totalorder %s81, %s95
    %p97 = scmp.eq.s32.totalorder %s29, 0
    %p98 = por %p96, %p97
    %s100 = sadd.s32 %s99, 1
    %p103 = scmp.eq.s32.totalorder %s23, 1
    %p104 = scmp.ne.s32.totalorder %s99, %s101
    %p105 = scmp.eq.s32.totalorder %s23, 0
    %p106 = por %p104, %p105
    %p107 = scmp.ne.s32.totalorder %s99, %s101
    %p108 = scmp.eq.s32.totalorder %s28, 1
    %p109 = por %p107, %p108
    %p110 = scmp.ne.s32.totalorder %s101, %s102
    %p111 = scmp.eq.s32.totalorder %s28, 0
    %p112 = por %p110, %p111
    %p113 = scmp.ne.s32.totalorder %s101, %s102
    %p114 = scmp.eq.s32.totalorder %s29, 1
    %p115 = por %p113, %p114
    %p117 = scmp.ne.s32.totalorder %s102, %s116
    %p118 = scmp.eq.s32.totalorder %s29, 0
    %p119 = por %p117, %p118
    %s121 = sadd.s32 %s120, 1
    %p124 = scmp.eq.s32.totalorder %s23, 1
    %p125 = scmp.ne.s32.totalorder %s120, %s122
    %p126 = scmp.eq.s32.totalorder %s23, 0
    %p127 = por %p125, %p126
    %p128 = scmp.ne.s32.totalorder %s120, %s122
    %p129 = scmp.eq.s32.totalorder %s28, 1
    %p130 = por %p128, %p129
    %p131 = scmp.ne.s32.totalorder %s122, %s123
    %p132 = scmp.eq.s32.totalorder %s28, 0
    %p133 = por %p131, %p132
    %p134 = scmp.ne.s32.totalorder %s122, %s123
    %p135 = scmp.eq.s32.totalorder %s29, 1
    %p136 = por %p134, %p135
    %p138 = scmp.ne.s32.totalorder %s123, %s137
    %p139 = scmp.eq.s32.totalorder %s29, 0
    %p140 = por %p138, %p139
    %s142 = sadd.s32 %s141, 1
    %p145 = scmp.eq.s32.totalorder %s23, 1
    %p146 = scmp.ne.s32.totalorder %s141, %s143
    %p147 = scmp.eq.s32.totalorder %s23, 0
    %p148 = por %p146, %p147
    %p149 = scmp.ne.s32.totalorder %s141, %s143
    %p150 = scmp.eq.s32.totalorder %s28, 1
    %p151 = por %p149, %p150
    %p152 = scmp.ne.s32.totalorder %s143, %s144
    %p153 = scmp.eq.s32.totalorder %s28, 0
    %p154 = por %p152, %p153
    %p155 = scmp.ne.s32.totalorder %s143, %s144
    %p156 = scmp.eq.s32.totalorder %s29, 1
    %p157 = por %p155, %p156
    %p159 = scmp.ne.s32.totalorder %s144, %s158
    %p160 = scmp.eq.s32.totalorder %s29, 0
    %p161 = por %p159, %p160
    %s163 = sadd.s32 %s162, 1
    %p166 = scmp.eq.s32.totalorder %s23, 1
    %p167 = scmp.ne.s32.totalorder %s162, %s164
    %p168 = scmp.eq.s32.totalorder %s23, 0
    %p169 = por %p167, %p168
    %p170 = scmp.ne.s32.totalorder %s162, %s164
    %p171 = scmp.eq.s32.totalorder %s28, 1
    %p172 = por %p170, %p171
    %p173 = scmp.ne.s32.totalorder %s164, %s165
    %p174 = scmp.eq.s32.totalorder %s28, 0
    %p175 = por %p173, %p174
    %p176 = scmp.ne.s32.totalorder %s164, %s165
    %p177 = scmp.eq.s32.totalorder %s29, 1
    %p178 = por %p176, %p177
    %p180 = scmp.ne.s32.totalorder %s165, %s179
    %p181 = scmp.eq.s32.totalorder %s29, 0
    %p182 = por %p180, %p181
    %s184 = sadd.s32 %s183, 1
    %p187 = scmp.eq.s32.totalorder %s23, 1
    %p188 = scmp.ne.s32.totalorder %s183, %s185
    %p189 = scmp.eq.s32.totalorder %s23, 0
    %p190 = por %p188, %p189
    %p191 = scmp.ne.s32.totalorder %s183, %s185
    %p192 = scmp.eq.s32.totalorder %s28, 1
    %p193 = por %p191, %p192
    %p194 = scmp.ne.s32.totalorder %s185, %s186
    %p195 = scmp.eq.s32.totalorder %s28, 0
    %p196 = por %p194, %p195
    %p197 = scmp.ne.s32.totalorder %s185, %s186
    %p198 = scmp.eq.s32.totalorder %s29, 1
    %p199 = por %p197, %p198
    %p201 = scmp.ne.s32.totalorder %s186, %s200
    %p202 = scmp.eq.s32.totalorder %s29, 0
    %p203 = por %p201, %p202
    %s205 = sadd.s32 %s204, 1
    %p208 = scmp.eq.s32.totalorder %s23, 1
    %p209 = scmp.ne.s32.totalorder %s204, %s206
    %p210 = scmp.eq.s32.totalorder %s23, 0
    %p211 = por %p209, %p210
    %p212 = scmp.ne.s32.totalorder %s204, %s206
    %p213 = scmp.eq.s32.totalorder %s28, 1
    %p214 = por %p212, %p213
    %p215 = scmp.ne.s32.totalorder %s206, %s207
    %p216 = scmp.eq.s32.totalorder %s28, 0
    %p217 = por %p215, %p216
    %p218 = scmp.ne.s32.totalorder %s206, %s207
    %p219 = scmp.eq.s32.totalorder %s29, 1
    %p220 = por %p218, %p219
    %p222 = scmp.ne.s32.totalorder %s207, %s221
    %p223 = scmp.eq.s32.totalorder %s29, 0
    %p224 = por %p222, %p223
    %s226 = sadd.s32 %s225, 1
    %p229 = scmp.eq.s32.totalorder %s23, 1
    %p230 = scmp.ne.s32.totalorder %s225, %s227
    %p231 = scmp.eq.s32.totalorder %s23, 0
    %p232 = por %p230, %p231
    %p233 = scmp.ne.s32.totalorder %s225, %s227
    %p234 = scmp.eq.s32.totalorder %s28, 1
    %p235 = por %p233, %p234
    %p236 = scmp.ne.s32.totalorder %s227, %s228
    %p237 = scmp.eq.s32.totalorder %s28, 0
    %p238 = por %p236, %p237
    %p239 = scmp.ne.s32.totalorder %s227, %s228
    %p240 = scmp.eq.s32.totalorder %s29, 1
    %p241 = por %p239, %p240
    %p243 = scmp.ne.s32.totalorder %s228, %s242
    %p244 = scmp.eq.s32.totalorder %s29, 0
    %p245 = por %p243, %p244
    %s247 = sadd.s32 %s246, 1
    %p250 = scmp.eq.s32.totalorder %s23, 1
    %p251 = scmp.ne.s32.totalorder %s246, %s248
    %p252 = scmp.eq.s32.totalorder %s23, 0
    %p253 = por %p251, %p252
    %p254 = scmp.ne.s32.totalorder %s246, %s248
    %p255 = scmp.eq.s32.totalorder %s28, 1
    %p256 = por %p254, %p255
    %p257 = scmp.ne.s32.totalorder %s248, %s249
    %p258 = scmp.eq.s32.totalorder %s28, 0
    %p259 = por %p257, %p258
    %p260 = scmp.ne.s32.totalorder %s248, %s249
    %p261 = scmp.eq.s32.totalorder %s29, 1
    %p262 = por %p260, %p261
    %p264 = scmp.ne.s32.totalorder %s249, %s263
    %p265 = scmp.eq.s32.totalorder %s29, 0
    %p266 = por %p264, %p265
    %s268 = sadd.s32 %s267, 1
    %p271 = scmp.eq.s32.totalorder %s23, 1
    %p272 = scmp.ne.s32.totalorder %s267, %s269
    %p273 = scmp.eq.s32.totalorder %s23, 0
    %p274 = por %p272, %p273
    %p275 = scmp.ne.s32.totalorder %s267, %s269
    %p276 = scmp.eq.s32.totalorder %s28, 1
    %p277 = por %p275, %p276
    %p278 = scmp.ne.s32.totalorder %s269, %s270
    %p279 = scmp.eq.s32.totalorder %s28, 0
    %p280 = por %p278, %p279
    %p281 = scmp.ne.s32.totalorder %s269, %s270
    %p282 = scmp.eq.s32.totalorder %s29, 1
    %p283 = por %p281, %p282
    %p285 = scmp.ne.s32.totalorder %s270, %s284
    %p286 = scmp.eq.s32.totalorder %s29, 0
    %p287 = por %p285, %p286
    %s289 = sadd.s32 %s288, 1
    %p292 = scmp.eq.s32.totalorder %s23, 1
    %p293 = scmp.ne.s32.totalorder %s288, %s290
    %p294 = scmp.eq.s32.totalorder %s23, 0
    %p295 = por %p293, %p294
    %p296 = scmp.ne.s32.totalorder %s288, %s290
    %p297 = scmp.eq.s32.totalorder %s28, 1
    %p298 = por %p296, %p297
    %p299 = scmp.ne.s32.totalorder %s290, %s291
    %p300 = scmp.eq.s32.totalorder %s28, 0
    %p301 = por %p299, %p300
    %p302 = scmp.ne.s32.totalorder %s290, %s291
    %p303 = scmp.eq.s32.totalorder %s29, 1
    %p304 = por %p302, %p303
    %p306 = scmp.ne.s32.totalorder %s291, %s305
    %p307 = scmp.eq.s32.totalorder %s29, 0
    %p308 = por %p306, %p307
    %s310 = sadd.s32 %s309, 1
    %p313 = scmp.eq.s32.totalorder %s23, 1
    %p314 = scmp.ne.s32.totalorder %s309, %s311
    %p315 = scmp.eq.s32.totalorder %s23, 0
    %p316 = por %p314, %p315
    %p317 = scmp.ne.s32.totalorder %s309, %s311
    %p318 = scmp.eq.s32.totalorder %s28, 1
    %p319 = por %p317, %p318
    %p320 = scmp.ne.s32.totalorder %s311, %s312
    %p321 = scmp.eq.s32.totalorder %s28, 0
    %p322 = por %p320, %p321
    %p323 = scmp.ne.s32.totalorder %s311, %s312
    %p324 = scmp.eq.s32.totalorder %s29, 1
    %p325 = por %p323, %p324
    %p327 = scmp.ne.s32.totalorder %s312, %s326
    %p328 = scmp.eq.s32.totalorder %s29, 0
    %p329 = por %p327, %p328
    %s331 = sadd.s32 %s330, 1
    %p334 = scmp.eq.s32.totalorder %s23, 1
    %p335 = scmp.ne.s32.totalorder %s330, %s332
    %p336 = scmp.eq.s32.totalorder %s23, 0
    %p337 = por %p335, %p336
    %p338 = scmp.ne.s32.totalorder %s330, %s332
    %p339 = scmp.eq.s32.totalorder %s28, 1
    %p340 = por %p338, %p339
    %p341 = scmp.ne.s32.totalorder %s332, %s333
    %p342 = scmp.eq.s32.totalorder %s28, 0
    %p343 = por %p341, %p342
    %p344 = scmp.ne.s32.totalorder %s332, %s333
    %p345 = scmp.eq.s32.totalorder %s29, 1
    %p346 = por %p344, %p345
    %p348 = scmp.ne.s32.totalorder %s333, %s347
    %p349 = scmp.eq.s32.totalorder %s29, 0
    %p350 = por %p348, %p349
    %s352 = sadd.s32 %s351, 1
    %p355 = scmp.eq.s32.totalorder %s23, 1
    %p356 = scmp.ne.s32.totalorder %s351, %s353
    %p357 = scmp.eq.s32.totalorder %s23, 0
    %p358 = por %p356, %p357
    %p359 = scmp.ne.s32.totalorder %s351, %s353
    %p360 = scmp.eq.s32.totalorder %s28, 1
    %p361 = por %p359, %p360
    %p362 = scmp.ne.s32.totalorder %s353, %s354
    %p363 = scmp.eq.s32.totalorder %s28, 0
    %p364 = por %p362, %p363
    %p365 = scmp.ne.s32.totalorder %s353, %s354
    %p366 = scmp.eq.s32.totalorder %s29, 1
    %p367 = por %p365, %p366
    %p369 = scmp.ne.s32.totalorder %s354, %s368
    %p370 = scmp.eq.s32.totalorder %s29, 0
    %p371 = por %p369, %p370
    %s373 = sadd.s32 %s372, 1
    %p376 = scmp.eq.s32.totalorder %s23, 1
    %p377 = scmp.ne.s32.totalorder %s372, %s374
    %p378 = scmp.eq.s32.totalorder %s23, 0
    %p379 = por %p377, %p378
    %p380 = scmp.ne.s32.totalorder %s372, %s374
    %p381 = scmp.eq.s32.totalorder %s28, 1
    %p382 = por %p380, %p381
    %p383 = scmp.ne.s32.totalorder %s374, %s375
    %p384 = scmp.eq.s32.totalorder %s28, 0
    %p385 = por %p383, %p384
    %p386 = scmp.ne.s32.totalorder %s374, %s375
    %p387 = scmp.eq.s32.totalorder %s29, 1
    %p388 = por %p386, %p387
    %p390 = scmp.ne.s32.totalorder %s375, %s389
    %p391 = scmp.eq.s32.totalorder %s29, 0
    %p392 = por %p390, %p391
    %s393 = ssub.s32 %s23, %s30
    %p394 = scmp.eq.s32.totalorder %s393, 0
    %s396 = sadd.s32 %s395, 1
    %s397 = scalar_select %p394, %s395, %s396
    %p400 = pneg %p394
    %p401 = scmp.eq.s32.totalorder %s23, 1
    %p402 = por %p400, %p401
    %p403 = scmp.ne.s32.totalorder %s395, %s398
    %p404 = scmp.eq.s32.totalorder %s23, 0
    %p405 = por %p403, %p404
    %p406 = scmp.ne.s32.totalorder %s395, %s398
    %p407 = scmp.eq.s32.totalorder %s28, 1
    %p408 = por %p406, %p407
    %p409 = scmp.ne.s32.totalorder %s398, %s399
    %p410 = scmp.eq.s32.totalorder %s28, 0
    %p411 = por %p409, %p410
    %p412 = scmp.ne.s32.totalorder %s398, %s399
    %p413 = scmp.eq.s32.totalorder %s29, 1
    %p414 = por %p412, %p413
    %p416 = scmp.ne.s32.totalorder %s399, %s415
    %p417 = scmp.eq.s32.totalorder %s29, 0
    %p418 = por %p416, %p417
    %p419 = scmp.le.s32.totalorder 1, %s23
    %p420 = scmp.lt.s32.totalorder %s23, 3
    %p421 = pnand %p419, %p420
    %p422 = pneg %p421
    // Predicated region
    $region9: #{deeplabv3_wrapper_forward.1} parent=5 // pred_check
      _
    $region10: #{deeplabv3_wrapper_forward.1} parent=5 // pred_check_branch
      %424 = sbr.rel (%p421) target = $region12
    $region11: #{deeplabv3_wrapper_forward.1} parent=5 // pred_region
      %s425 = ssub.s32 %s23, 1
      // Predicated region
      $region13: #{deeplabv3_wrapper_forward.1} parent=11 // pred_check
        %p426 = pneg %p70
      $region14: #{deeplabv3_wrapper_forward.1} parent=11 // pred_check_branch
        %428 = sbr.rel (%p426) target = $region16
      $region15: #{deeplabv3_wrapper_forward.1} parent=11 // pred_region
        _
      $region16: #{deeplabv3_wrapper_forward.1} parent=11 // pred_fallthru
        _
      // Predicated region
      $region17: #{deeplabv3_wrapper_forward.1} parent=11 // pred_check
        %p429 = pneg %p91
      $region18: #{deeplabv3_wrapper_forward.1} parent=11 // pred_check_branch
        %431 = sbr.rel (%p429) target = $region20
      $region19: #{deeplabv3_wrapper_forward.1} parent=11 // pred_region
        _
      $region20: #{deeplabv3_wrapper_forward.1} parent=11 // pred_fallthru
        _
      // Predicated region
      $region21: #{deeplabv3_wrapper_forward.1} parent=11 // pred_check
        %p432 = pneg %p112
      $region22: #{deeplabv3_wrapper_forward.1} parent=11 // pred_check_branch
        %434 = sbr.rel (%p432) target = $region24
      $region23: #{deeplabv3_wrapper_forward.1} parent=11 // pred_region
        _
      $region24: #{deeplabv3_wrapper_forward.1} parent=11 // pred_fallthru
        _
      // Predicated region
      $region25: #{deeplabv3_wrapper_forward.1} parent=11 // pred_check
        %p435 = pneg %p133
      $region26: #{deeplabv3_wrapper_forward.1} parent=11 // pred_check_branch
        %437 = sbr.rel (%p435) target = $region28
      $region27: #{deeplabv3_wrapper_forward.1} parent=11 // pred_region
        _
      $region28: #{deeplabv3_wrapper_forward.1} parent=11 // pred_fallthru
        _
      // Predicated region
      $region29: #{deeplabv3_wrapper_forward.1} parent=11 // pred_check
        %p438 = pneg %p154
      $region30: #{deeplabv3_wrapper_forward.1} parent=11 // pred_check_branch
        %440 = sbr.rel (%p438) target = $region32
      $region31: #{deeplabv3_wrapper_forward.1} parent=11 // pred_region
        _
      $region32: #{deeplabv3_wrapper_forward.1} parent=11 // pred_fallthru
        _
      // Predicated region
      $region33: #{deeplabv3_wrapper_forward.1} parent=11 // pred_check
        %p441 = pneg %p175
      $region34: #{deeplabv3_wrapper_forward.1} parent=11 // pred_check_branch
        %443 = sbr.rel (%p441) target = $region36
      $region35: #{deeplabv3_wrapper_forward.1} parent=11 // pred_region
        _
      $region36: #{deeplabv3_wrapper_forward.1} parent=11 // pred_fallthru
        _
      // Predicated region
      $region37: #{deeplabv3_wrapper_forward.1} parent=11 // pred_check
        %p444 = pneg %p196
      $region38: #{deeplabv3_wrapper_forward.1} parent=11 // pred_check_branch
        %446 = sbr.rel (%p444) target = $region40
      $region39: #{deeplabv3_wrapper_forward.1} parent=11 // pred_region
        _
      $region40: #{deeplabv3_wrapper_forward.1} parent=11 // pred_fallthru
        _
      // Predicated region
      $region41: #{deeplabv3_wrapper_forward.1} parent=11 // pred_check
        %p447 = pneg %p217
      $region42: #{deeplabv3_wrapper_forward.1} parent=11 // pred_check_branch
        %449 = sbr.rel (%p447) target = $region44
      $region43: #{deeplabv3_wrapper_forward.1} parent=11 // pred_region
        _
      $region44: #{deeplabv3_wrapper_forward.1} parent=11 // pred_fallthru
        _
      // Predicated region
      $region45: #{deeplabv3_wrapper_forward.1} parent=11 // pred_check
        %p450 = pneg %p238
      $region46: #{deeplabv3_wrapper_forward.1} parent=11 // pred_check_branch
        %452 = sbr.rel (%p450) target = $region48
      $region47: #{deeplabv3_wrapper_forward.1} parent=11 // pred_region
        _
      $region48: #{deeplabv3_wrapper_forward.1} parent=11 // pred_fallthru
        _
      // Predicated region
      $region49: #{deeplabv3_wrapper_forward.1} parent=11 // pred_check
        %p453 = pneg %p259
      $region50: #{deeplabv3_wrapper_forward.1} parent=11 // pred_check_branch
        %455 = sbr.rel (%p453) target = $region52
      $region51: #{deeplabv3_wrapper_forward.1} parent=11 // pred_region
        _
      $region52: #{deeplabv3_wrapper_forward.1} parent=11 // pred_fallthru
        _
      // Predicated region
      $region53: #{deeplabv3_wrapper_forward.1} parent=11 // pred_check
        %p456 = pneg %p280
      $region54: #{deeplabv3_wrapper_forward.1} parent=11 // pred_check_branch
        %458 = sbr.rel (%p456) target = $region56
      $region55: #{deeplabv3_wrapper_forward.1} parent=11 // pred_region
        _
      $region56: #{deeplabv3_wrapper_forward.1} parent=11 // pred_fallthru
        _
      // Predicated region
      $region57: #{deeplabv3_wrapper_forward.1} parent=11 // pred_check
        %p459 = pneg %p301
      $region58: #{deeplabv3_wrapper_forward.1} parent=11 // pred_check_branch
        %461 = sbr.rel (%p459) target = $region60
      $region59: #{deeplabv3_wrapper_forward.1} parent=11 // pred_region
        _
      $region60: #{deeplabv3_wrapper_forward.1} parent=11 // pred_fallthru
        _
      // Predicated region
      $region61: #{deeplabv3_wrapper_forward.1} parent=11 // pred_check
        %p462 = pneg %p322
      $region62: #{deeplabv3_wrapper_forward.1} parent=11 // pred_check_branch
        %464 = sbr.rel (%p462) target = $region64
      $region63: #{deeplabv3_wrapper_forward.1} parent=11 // pred_region
        _
      $region64: #{deeplabv3_wrapper_forward.1} parent=11 // pred_fallthru
        _
      // Predicated region
      $region65: #{deeplabv3_wrapper_forward.1} parent=11 // pred_check
        %p465 = pneg %p343
      $region66: #{deeplabv3_wrapper_forward.1} parent=11 // pred_check_branch
        %467 = sbr.rel (%p465) target = $region68
      $region67: #{deeplabv3_wrapper_forward.1} parent=11 // pred_region
        _
      $region68: #{deeplabv3_wrapper_forward.1} parent=11 // pred_fallthru
        _
      // Predicated region
      $region69: #{deeplabv3_wrapper_forward.1} parent=11 // pred_check
        %p468 = pneg %p364
      $region70: #{deeplabv3_wrapper_forward.1} parent=11 // pred_check_branch
        %470 = sbr.rel (%p468) target = $region72
      $region71: #{deeplabv3_wrapper_forward.1} parent=11 // pred_region
        _
      $region72: #{deeplabv3_wrapper_forward.1} parent=11 // pred_fallthru
        _
      // Predicated region
      $region73: #{deeplabv3_wrapper_forward.1} parent=11 // pred_check
        %p471 = pneg %p385
      $region74: #{deeplabv3_wrapper_forward.1} parent=11 // pred_check_branch
        %473 = sbr.rel (%p471) target = $region76
      $region75: #{deeplabv3_wrapper_forward.1} parent=11 // pred_region
        _
      $region76: #{deeplabv3_wrapper_forward.1} parent=11 // pred_fallthru
        _
    $region12: #{deeplabv3_wrapper_forward.1} parent=5 // pred_fallthru
      _
    %p474 = scmp.lt.s32.totalorder %s23, 2
    // Predicated region
    $region77: #{deeplabv3_wrapper_forward.1} parent=5 // pred_check
      %p475 = pneg %p474
    $region78: #{deeplabv3_wrapper_forward.1} parent=5 // pred_check_branch
      %477 = sbr.rel (%p475) target = $region80
    $region79: #{deeplabv3_wrapper_forward.1} parent=5 // pred_region
      // Predicated region
      $region81: #{deeplabv3_wrapper_forward.1} parent=79 // pred_check
        %p478 = pneg %p43
      $region82: #{deeplabv3_wrapper_forward.1} parent=79 // pred_check_branch
        %480 = sbr.rel (%p478) target = $region84
      $region83: #{deeplabv3_wrapper_forward.1} parent=79 // pred_region
        %p481 = scmp.lt.s32.totalorder %s23, 1
        %s482 = scalar_select %p481, %s23, 1
        %s483 = smul.addr %s482, 8
        %s484 = smul.addr %s483, 4
        %s485 = scalar_lea.vmem %s0, %s484
      $region84: #{deeplabv3_wrapper_forward.1} parent=79 // pred_fallthru
        _
    $region80: #{deeplabv3_wrapper_forward.1} parent=5 // pred_fallthru
      _
    %p486 = scmp.le.s32.totalorder 1, %s23
    %p487 = scmp.lt.s32.totalorder %s23, 3
    %p488 = pnand %p486, %p487
    %p489 = pneg %p488
    // Predicated region
    $region85: #{deeplabv3_wrapper_forward.1} parent=5 // pred_check
      _
    $region86: #{deeplabv3_wrapper_forward.1} parent=5 // pred_check_branch
      %491 = sbr.rel (%p488) target = $region88
    $region87: #{deeplabv3_wrapper_forward.1} parent=5 // pred_region
      %s492 = ssub.s32 %s23, 1
      %p493 = scmp.lt.s32.totalorder %s28, 1
      %s494 = scalar_select %p493, %s28, 1
      %s495 = smul.addr %s494, 8
      %s496 = smul.addr %s495, 4
      %s497 = scalar_lea.vmem %s0, %s496
      %p498 = pneg %p49
      %p499 = pneg %p46
      %p500 = pneg %p70
      %p501 = pneg %p67
      %p502 = pneg %p91
      %p503 = pneg %p88
      %p504 = pneg %p112
      %p505 = pneg %p109
      %p506 = pneg %p133
      %p507 = pneg %p130
      %p508 = pneg %p154
      %p509 = pneg %p151
      %p510 = pneg %p175
      %p511 = pneg %p172
      %p512 = pneg %p196
      %p513 = pneg %p193
      %p514 = pneg %p217
      %p515 = pneg %p214
      %p516 = pneg %p238
      %p517 = pneg %p235
      %p518 = pneg %p259
      %p519 = pneg %p256
      %p520 = pneg %p280
      %p521 = pneg %p277
      %p522 = pneg %p301
      %p523 = pneg %p298
      %p524 = pneg %p322
      %p525 = pneg %p319
      %p526 = pneg %p343
      %p527 = pneg %p340
      %p528 = pneg %p364
      %p529 = pneg %p361
      %p530 = pneg %p385
      %p531 = pneg %p382
      %p532 = pneg %p411
      %p533 = pneg %p408
      %p534 = scmp.lt.s32.totalorder %s28, 1
      %s535 = scalar_select %p534, %s28, 1
      %s536 = smul.addr %s535, 32
      %s537 = smul.addr %s536, 8
      %s538 = scalar_lea.vmem %s17, %s537
      %p539 = scmp.lt.s32.totalorder %s28, 1
      %s540 = scalar_select %p539, %s28, 1
      %s541 = smul.addr %s540, 8
      %s542 = smul.addr %s541, 4
      %s543 = scalar_lea.vmem %s0, %s542
      %p544 = scmp.lt.s32.totalorder %s28, 1
      %s545 = scalar_select %p544, %s28, 1
      %s546 = smul.addr %s545, 32
      %s547 = smul.addr %s546, 8
      %s548 = scalar_lea.vmem %s17, %s547
      %v550 = vld [vmem:[%s543] sm:$0xf]
      %v551 = vld [vmem:[%s543 + $0x4] sm:$0xf]
      %v552 = vld [vmem:[%s543 + $0x8] sm:$0xf]
      %v553 = vld [vmem:[%s543 + $0xc] sm:$0xf]
      %v554 = vld [vmem:[%s543 + $0x10] sm:$0xf]
      %v555 = vld [vmem:[%s543 + $0x14] sm:$0xf]
      %v556 = vld [vmem:[%s543 + $0x18] sm:$0xf]
      %v557 = vld [vmem:[%s543 + $0x1c] sm:$0xf]
      %v558 = vld [vmem:[%s1] sm:$0xf]
      %v559 = vld [vmem:[%s1 + $0x4] sm:$0xf]
      %v560 = vld [vmem:[%s1 + $0x8] sm:$0xf]
      %v561 = vld [vmem:[%s1 + $0xc] sm:$0xf]
      %v562 = vld [vmem:[%s1 + $0x10] sm:$0xf]
      %v563 = vld [vmem:[%s1 + $0x14] sm:$0xf]
      %v564 = vld [vmem:[%s1 + $0x18] sm:$0xf]
      %v565 = vld [vmem:[%s1 + $0x1c] sm:$0xf]
      %v566 = vld [vmem:[%s1 + $0x20] sm:$0xf]
      %v567 = vld [vmem:[%s1 + $0x24] sm:$0xf]
      %v568 = vld [vmem:[%s1 + $0x28] sm:$0xf]
      %v569 = vld [vmem:[%s1 + $0x2c] sm:$0xf]
      %v570 = vld [vmem:[%s1 + $0x30] sm:$0xf]
      %v571 = vld [vmem:[%s1 + $0x34] sm:$0xf]
      %v572 = vld [vmem:[%s1 + $0x38] sm:$0xf]
      %v573 = vld [vmem:[%s1 + $0x3c] sm:$0xf]
      %v574 = vld [vmem:[%s2] sm:$0x1]
      %v576 = vlaneseq
      %v577 = vshrl.u32 %v576, 7
      %v578 = vsub.s32 0, %v577
      %v579 = vrot.slane %v574, %v578
      %v589 = vunpack.c.l.b16 %v550
      %v590 = vunpack.c.l.b16 %v551
      %v591 = vunpack.c.l.b16 %v552
      %v592 = vunpack.c.l.b16 %v553
      %v593 = vunpack.c.l.b16 %v554
      %v594 = vunpack.c.l.b16 %v555
      %v595 = vunpack.c.l.b16 %v556
      %v596 = vunpack.c.l.b16 %v557
      %v597 = vpack.c.b16 %v590, %v589
      %v598 = vpack.c.b16 %v592, %v591
      %v599 = vpack.c.b16 %v594, %v593
      %v600 = vpack.c.b16 %v596, %v595
      %v621 = vunpack.c.l.b16 %v558
      %v622 = vunpack.c.l.b16 %v559
      %v623 = vunpack.c.l.b16 %v560
      %v624 = vunpack.c.l.b16 %v561
      %v625 = vunpack.c.l.b16 %v562
      %v626 = vunpack.c.l.b16 %v563
      %v627 = vunpack.c.l.b16 %v564
      %v628 = vunpack.c.l.b16 %v565
      %v629 = vunpack.c.l.b16 %v566
      %v630 = vunpack.c.l.b16 %v567
      %v631 = vunpack.c.l.b16 %v568
      %v632 = vunpack.c.l.b16 %v569
      %v633 = vunpack.c.l.b16 %v570
      %v634 = vunpack.c.l.b16 %v571
      %v635 = vunpack.c.l.b16 %v572
      %v636 = vunpack.c.l.b16 %v573
      %v637 = vpack.c.b16 %v622, %v621
      %v638 = vpack.c.b16 %v624, %v623
      %v639 = vpack.c.b16 %v626, %v625
      %v640 = vpack.c.b16 %v628, %v627
      %v641 = vpack.c.b16 %v630, %v629
      %v642 = vpack.c.b16 %v632, %v631
      %v643 = vpack.c.b16 %v634, %v633
      %v644 = vpack.c.b16 %v636, %v635
      %653 = vmatprep.subr.bf16.mxu0 0
      %654 = vmatpush1.bf16.msra.mxu0 %v637
      %655 = vmatprep.subr.bf16.mxu0 0
      %656 = vmatpush1.bf16.msra.mxu0 %v638
      %657 = vmatprep.subr.bf16.mxu0 0
      %658 = vmatpush1.bf16.msra.mxu0 %v639
      %659 = vmatprep.subr.bf16.mxu0 0
      %660 = vmatpush1.bf16.msra.mxu0 %v640
      %661 = vmatprep.subr.bf16.mxu0 0
      %662 = vmatpush1.bf16.msra.mxu0 %v641
      %663 = vmatprep.subr.bf16.mxu0 0
      %664 = vmatpush1.bf16.msra.mxu0 %v642
      %665 = vmatprep.subr.bf16.mxu0 0
      %666 = vmatpush1.bf16.msra.mxu0 %v643
      %667 = vmatprep.subr.bf16.mxu0 0
      %668 = vmatpush1.bf16.msra.mxu0 %v644
      %669 = vmatprep.subr.bf16.mxu0 0
      %670 = vmatpush1.bf16.msra.mxu0 0
      %671 = vmatprep.subr.bf16.mxu0 0
      %672 = vmatpush1.bf16.msra.mxu0 0
      %673 = vmatprep.subr.bf16.mxu0 0
      %674 = vmatpush1.bf16.msra.mxu0 0
      %675 = vmatprep.subr.bf16.mxu0 0
      %676 = vmatpush1.bf16.msra.mxu0 0
      %677 = vmatprep.subr.bf16.mxu0 0
      %678 = vmatpush1.bf16.msra.mxu0 0
      %679 = vmatprep.subr.bf16.mxu0 0
      %680 = vmatpush1.bf16.msra.mxu0 0
      %681 = vmatprep.subr.bf16.mxu0 0
      %682 = vmatpush1.bf16.msra.mxu0 0
      %683 = vmatprep.subr.bf16.mxu0 0
      %684 = vmatpush1.bf16.msra.mxu0 0
      %685 = vmatprep.mubr.bf16.mxu0 0
      %686 = vmatmul.mubr.bf16.gmra.mrb[0].mxu0 %v597
      %v687 = vpop.f32.mrb[0].mxu0
      %v688 = vadd.f32 %v579, %v687
      %v689 = vpop.f32.mrb[0].mxu0
      %v690 = vpop.f32.mrb[0].mxu0
      %v691 = vadd.f32 %v579, %v690
      %v692 = vpop.f32.mrb[0].mxu0
      %693 = vmatprep.mubr.bf16.mxu0 0
      %694 = vmatmul.mubr.bf16.gmra.mrb[0].mxu0 %v598
      %v695 = vpop.f32.mrb[0].mxu0
      %v696 = vadd.f32 %v579, %v695
      %v697 = vpop.f32.mrb[0].mxu0
      %v698 = vpop.f32.mrb[0].mxu0
      %v699 = vadd.f32 %v579, %v698
      %v700 = vpop.f32.mrb[0].mxu0
      %701 = vmatprep.mubr.bf16.mxu0 0
      %702 = vmatmul.mubr.bf16.gmra.mrb[0].mxu0 %v599
      %v703 = vpop.f32.mrb[0].mxu0
      %v704 = vadd.f32 %v579, %v703
      %v705 = vpop.f32.mrb[0].mxu0
      %v706 = vpop.f32.mrb[0].mxu0
      %v707 = vadd.f32 %v579, %v706
      %v708 = vpop.f32.mrb[0].mxu0
      %709 = vmatprep.mubr.bf16.mxu0 0
      %710 = vmatmul.mubr.bf16.gmra.mrb[0].mxu0 %v600
      %v711 = vpop.f32.mrb[0].mxu0
      %v712 = vadd.f32 %v579, %v711
      %v713 = vpop.f32.mrb[0].mxu0
      %v714 = vpop.f32.mrb[0].mxu0
      %v715 = vadd.f32 %v579, %v714
      %v716 = vpop.f32.mrb[0].mxu0
      %717 = vdwg.mxu0
      %v718 = vmax.f32 %v688, 0.0
      %v719 = vmax.f32 %v691, 0.0
      %v720 = vmax.f32 %v696, 0.0
      %v721 = vmax.f32 %v699, 0.0
      %v722 = vmax.f32 %v704, 0.0
      %v723 = vmax.f32 %v707, 0.0
      %v724 = vmax.f32 %v712, 0.0
      %v725 = vmax.f32 %v715, 0.0
      %v726 = vpack.c.bf16 %v719, %v718
      %v727 = vpack.c.bf16 %v721, %v720
      %v728 = vpack.c.bf16 %v723, %v722
      %v729 = vpack.c.bf16 %v725, %v724
      %v730 = vld [vmem:[%s3] sm:$0xf]
      %v731 = vld [vmem:[%s3 + $0x4] sm:$0xf]
      %v732 = vld [vmem:[%s3 + $0x8] sm:$0xf]
      %v733 = vld [vmem:[%s3 + $0xc] sm:$0xf]
      %v734 = vld [vmem:[%s3 + $0x10] sm:$0xf]
      %v735 = vld [vmem:[%s3 + $0x14] sm:$0xf]
      %v736 = vld [vmem:[%s3 + $0x18] sm:$0xf]
      %v737 = vld [vmem:[%s3 + $0x1c] sm:$0xf]
      %v738 = vld [vmem:[%s3 + $0x20] sm:$0xf]
      %v739 = vld [vmem:[%s3 + $0x24] sm:$0xf]
      %v740 = vld [vmem:[%s3 + $0x28] sm:$0xf]
      %v741 = vld [vmem:[%s3 + $0x2c] sm:$0xf]
      %v742 = vld [vmem:[%s3 + $0x30] sm:$0xf]
      %v743 = vld [vmem:[%s3 + $0x34] sm:$0xf]
      %v744 = vld [vmem:[%s3 + $0x38] sm:$0xf]
      %v745 = vld [vmem:[%s3 + $0x3c] sm:$0xf]
      %v746 = vld [vmem:[%s3 + $0x40] sm:$0xf]
      %v747 = vld [vmem:[%s3 + $0x44] sm:$0xf]
      %v766 = vunpack.c.l.b16 %v730
      %v767 = vunpack.c.l.b16 %v731
      %v768 = vunpack.c.l.b16 %v732
      %v769 = vunpack.c.l.b16 %v733
      %v770 = vunpack.c.l.b16 %v734
      %v771 = vunpack.c.l.b16 %v735
      %v772 = vunpack.c.l.b16 %v736
      %v773 = vunpack.c.l.b16 %v737
      %v774 = vunpack.c.l.b16 %v738
      %v775 = vunpack.c.l.b16 %v739
      %v776 = vunpack.c.l.b16 %v740
      %v777 = vunpack.c.l.b16 %v741
      %v778 = vunpack.c.l.b16 %v742
      %v779 = vunpack.c.l.b16 %v743
      %v780 = vunpack.c.l.b16 %v744
      %v781 = vunpack.c.l.b16 %v745
      %v782 = vunpack.c.l.b16 %v746
      %v783 = vunpack.c.l.b16 %v747
      %v784 = vpack.c.b16 %v767, %v766
      %v785 = vpack.c.b16 %v769, %v768
      %v786 = vpack.c.b16 %v771, %v770
      %v787 = vpack.c.b16 %v773, %v772
      %v788 = vpack.c.b16 %v775, %v774
      %v789 = vpack.c.b16 %v777, %v776
      %v790 = vpack.c.b16 %v779, %v778
      %v791 = vpack.c.b16 %v781, %v780
      %v792 = vpack.c.b16 %v783, %v782
      %vm793 = vcmask 523264
      %v795 = vsel %vm793, %v784, 0
      %v798 = vsel %vm793, %v785, 0
      %v801 = vsel %vm793, %v786, 0
      %v804 = vsel %vm793, %v787, 0
      %v807 = vsel %vm793, %v788, 0
      %v810 = vsel %vm793, %v789, 0
      %v813 = vsel %vm793, %v790, 0
      %v816 = vsel %vm793, %v791, 0
      %v819 = vsel %vm793, %v792, 0
      %821 = vmatprep.subr.bf16.mxu0 0
      %822 = vmatpush1.bf16.msra.mxu0 %v726
      %823 = vmatprep.subr.bf16.mxu0 0
      %824 = vmatpush1.bf16.msra.mxu0 %v727
      %825 = vmatprep.subr.bf16.mxu0 0
      %826 = vmatpush1.bf16.msra.mxu0 %v728
      %827 = vmatprep.subr.bf16.mxu0 0
      %828 = vmatpush1.bf16.msra.mxu0 %v729
      %829 = vmatprep.subr.bf16.mxu0 0
      %830 = vmatpush1.bf16.msra.mxu0 0
      %831 = vmatprep.subr.bf16.mxu0 0
      %832 = vmatpush1.bf16.msra.mxu0 0
      %833 = vmatprep.subr.bf16.mxu0 0
      %834 = vmatpush1.bf16.msra.mxu0 0
      %835 = vmatprep.subr.bf16.mxu0 0
      %836 = vmatpush1.bf16.msra.mxu0 0
      %837 = vmatprep.subr.bf16.mxu0 0
      %838 = vmatpush1.bf16.msra.mxu0 0
      %839 = vmatprep.subr.bf16.mxu0 0
      %840 = vmatpush1.bf16.msra.mxu0 0
      %841 = vmatprep.subr.bf16.mxu0 0
      %842 = vmatpush1.bf16.msra.mxu0 0
      %843 = vmatprep.subr.bf16.mxu0 0
      %844 = vmatpush1.bf16.msra.mxu0 0
      %845 = vmatprep.subr.bf16.mxu0 0
      %846 = vmatpush1.bf16.msra.mxu0 0
      %847 = vmatprep.subr.bf16.mxu0 0
      %848 = vmatpush1.bf16.msra.mxu0 0
      %849 = vmatprep.subr.bf16.mxu0 0
      %850 = vmatpush1.bf16.msra.mxu0 0
      %851 = vmatprep.subr.bf16.mxu0 0
      %852 = vmatpush1.bf16.msra.mxu0 0
      %853 = vmatprep.mubr.bf16.mxu0 0
      %854 = vmatmul.mubr.bf16.gmra.mrb[0].mxu0 %v795
      %v855 = vpop.f32.mrb[0].mxu0
      %v856 = vadd.f32 0.0, %v855
      %v857 = vpop.f32.mrb[0].mxu0
      %v858 = vpop.f32.mrb[0].mxu0
      %v859 = vadd.f32 0.0, %v858
      %v860 = vpop.f32.mrb[0].mxu0
      %861 = vmatprep.mubr.bf16.mxu0 0
      %862 = vmatmul.mubr.bf16.gmra.mrb[0].mxu0 %v798
      %v863 = vpop.f32.mrb[0].mxu0
      %v864 = vadd.f32 0.0, %v863
      %v865 = vpop.f32.mrb[0].mxu0
      %v866 = vpop.f32.mrb[0].mxu0
      %v867 = vadd.f32 0.0, %v866
      %v868 = vpop.f32.mrb[0].mxu0
      %869 = vmatprep.mubr.bf16.mxu0 0
      %870 = vmatmul.mubr.bf16.gmra.mrb[0].mxu0 %v801
      %v871 = vpop.f32.mrb[0].mxu0
      %v872 = vadd.f32 0.0, %v871
      %v873 = vpop.f32.mrb[0].mxu0
      %v874 = vpop.f32.mrb[0].mxu0
      %v875 = vadd.f32 0.0, %v874
      %v876 = vpop.f32.mrb[0].mxu0
      %877 = vmatprep.mubr.bf16.mxu0 0
      %878 = vmatmul.mubr.bf16.gmra.mrb[0].mxu0 %v804
      %v879 = vpop.f32.mrb[0].mxu0
      %v880 = vadd.f32 0.0, %v879
      %v881 = vpop.f32.mrb[0].mxu0
      %v882 = vpop.f32.mrb[0].mxu0
      %v883 = vadd.f32 0.0, %v882
      %v884 = vpop.f32.mrb[0].mxu0
      %885 = vmatprep.mubr.bf16.mxu0 0
      %886 = vmatmul.mubr.bf16.gmra.mrb[0].mxu0 %v807
      %v887 = vpop.f32.mrb[0].mxu0
      %v888 = vadd.f32 0.0, %v887
      %v889 = vpop.f32.mrb[0].mxu0
      %v890 = vpop.f32.mrb[0].mxu0
      %v891 = vadd.f32 0.0, %v890
      %v892 = vpop.f32.mrb[0].mxu0
      %893 = vmatprep.mubr.bf16.mxu0 0
      %894 = vmatmul.mubr.bf16.gmra.mrb[0].mxu0 %v810
      %v895 = vpop.f32.mrb[0].mxu0
      %v896 = vadd.f32 0.0, %v895
      %v897 = vpop.f32.mrb[0].mxu0
      %v898 = vpop.f32.mrb[0].mxu0
      %v899 = vadd.f32 0.0, %v898
      %v900 = vpop.f32.mrb[0].mxu0
      %901 = vmatprep.mubr.bf16.mxu0 0
      %902 = vmatmul.mubr.bf16.gmra.mrb[0].mxu0 %v813
      %v903 = vpop.f32.mrb[0].mxu0
      %v904 = vadd.f32 0.0, %v903
      %v905 = vpop.f32.mrb[0].mxu0
      %v906 = vpop.f32.mrb[0].mxu0
      %v907 = vadd.f32 0.0, %v906
      %v908 = vpop.f32.mrb[0].mxu0
      %909 = vmatprep.mubr.bf16.mxu0 0
      %910 = vmatmul.mubr.bf16.gmra.mrb[0].mxu0 %v816
      %v911 = vpop.f32.mrb[0].mxu0
      %v912 = vadd.f32 0.0, %v911
      %v913 = vpop.f32.mrb[0].mxu0
      %v914 = vpop.f32.mrb[0].mxu0
      %v915 = vadd.f32 0.0, %v914
      %v916 = vpop.f32.mrb[0].mxu0
      %917 = vmatprep.mubr.bf16.mxu0 0
      %918 = vmatmul.mubr.bf16.gmra.mrb[0].mxu0 %v819
      %v919 = vpop.f32.mrb[0].mxu0
      %v920 = vadd.f32 0.0, %v919
      %v921 = vpop.f32.mrb[0].mxu0
      %v922 = vpop.f32.mrb[0].mxu0
      %v923 = vadd.f32 0.0, %v922
      %v924 = vpop.f32.mrb[0].mxu0
      %925 = vdwg.mxu0
      %v926 = vpack.c.bf16 %v859, %v856
      %v927 = vpack.c.bf16 %v867, %v864
      %v928 = vpack.c.bf16 %v875, %v872
      %v929 = vpack.c.bf16 %v883, %v880
      %v930 = vpack.c.bf16 %v891, %v888
      %v931 = vpack.c.bf16 %v899, %v896
      %v932 = vpack.c.bf16 %v907, %v904
      %v933 = vpack.c.bf16 %v915, %v912
      %v934 = vpack.c.bf16 %v923, %v920
      %v935 = vld [vmem:[%s4] sm:$0xf]
      %v936 = vld [vmem:[%s4 + $0x4] sm:$0xf]
      %s937 = scalar_lea.vmem %s4, 8
      %v938 = vld [vmem:[%s937] sm:$0xf]
      %v939 = vld [vmem:[%s937 + $0x4] sm:$0xf]
      %v942 = vunpack.c.l.b16 %v938
      %v943 = vunpack.c.l.b16 %v939
      %v944 = vpack.c.b16 %v943, %v942
      %vm946 = vcmask 130048
      %v948 = vsel %vm946, %v927, 0
      %950 = vmatprep.subr.bf16.mxu0 0
      %951 = vmatpush1.bf16.msra.mxu0 %v944
      %952 = vmatprep.subr.bf16.mxu0 0
      %953 = vmatpush1.bf16.msra.mxu0 0
      %954 = vmatprep.subr.bf16.mxu0 0
      %955 = vmatpush1.bf16.msra.mxu0 0
      %956 = vmatprep.subr.bf16.mxu0 0
      %957 = vmatpush1.bf16.msra.mxu0 0
      %958 = vmatprep.subr.bf16.mxu0 0
      %959 = vmatpush1.bf16.msra.mxu0 0
      %960 = vmatprep.subr.bf16.mxu0 0
      %961 = vmatpush1.bf16.msra.mxu0 0
      %962 = vmatprep.subr.bf16.mxu0 0
      %963 = vmatpush1.bf16.msra.mxu0 0
      %964 = vmatprep.subr.bf16.mxu0 0
      %965 = vmatpush1.bf16.msra.mxu0 0
      %966 = vmatprep.subr.bf16.mxu0 0
      %967 = vmatpush1.bf16.msra.mxu0 0
      %968 = vmatprep.subr.bf16.mxu0 0
      %969 = vmatpush1.bf16.msra.mxu0 0
      %970 = vmatprep.subr.bf16.mxu0 0
      %971 = vmatpush1.bf16.msra.mxu0 0
      %972 = vmatprep.subr.bf16.mxu0 0
      %973 = vmatpush1.bf16.msra.mxu0 0
      %974 = vmatprep.subr.bf16.mxu0 0
      %975 = vmatpush1.bf16.msra.mxu0 0
      %976 = vmatprep.subr.bf16.mxu0 0
      %977 = vmatpush1.bf16.msra.mxu0 0
      %978 = vmatprep.subr.bf16.mxu0 0
      %979 = vmatpush1.bf16.msra.mxu0 0
      %980 = vmatprep.subr.bf16.mxu0 0
      %981 = vmatpush1.bf16.msra.mxu0 0
      %982 = vmatprep.mubr.bf16.mxu0 0
      %983 = vmatmul.mubr.bf16.gmra.mrb[0].mxu0 %v948
      %v984 = vpop.f32.mrb[0].mxu0
      %v985 = vadd.f32 0.0, %v984
      %v986 = vpop.f32.mrb[0].mxu0
      %v987 = vpop.f32.mrb[0].mxu0
      %v988 = vadd.f32 0.0, %v987
      %v989 = vpop.f32.mrb[0].mxu0
      %990 = vdwg.mxu0
      %v993 = vunpack.c.l.b16 %v935
      %v994 = vunpack.c.l.b16 %v936
      %v995 = vpack.c.b16 %v994, %v993
      %v998 = vsel %vm946, %v926, 0
      %1000 = vmatprep.subr.bf16.mxu0 0
      %1001 = vmatpush1.bf16.msra.mxu0 %v995
      %1002 = vmatprep.subr.bf16.mxu0 0
      %1003 = vmatpush1.bf16.msra.mxu0 0
      %1004 = vmatprep.subr.bf16.mxu0 0
      %1005 = vmatpush1.bf16.msra.mxu0 0
      %1006 = vmatprep.subr.bf16.mxu0 0
      %1007 = vmatpush1.bf16.msra.mxu0 0
      %1008 = vmatprep.subr.bf16.mxu0 0
      %1009 = vmatpush1.bf16.msra.mxu0 0
      %1010 = vmatprep.subr.bf16.mxu0 0
      %1011 = vmatpush1.bf16.msra.mxu0 0
      %1012 = vmatprep.subr.bf16.mxu0 0
      %1013 = vmatpush1.bf16.msra.mxu0 0
      %1014 = vmatprep.subr.bf16.mxu0 0
      %1015 = vmatpush1.bf16.msra.mxu0 0
      %1016 = vmatprep.subr.bf16.mxu0 0
      %1017 = vmatpush1.bf16.msra.mxu0 0
      %1018 = vmatprep.subr.bf16.mxu0 0
      %1019 = vmatpush1.bf16.msra.mxu0 0
      %1020 = vmatprep.subr.bf16.mxu0 0
      %1021 = vmatpush1.bf16.msra.mxu0 0
      %1022 = vmatprep.subr.bf16.mxu0 0
      %1023 = vmatpush1.bf16.msra.mxu0 0
      %1024 = vmatprep.subr.bf16.mxu0 0
      %1025 = vmatpush1.bf16.msra.mxu0 0
      %1026 = vmatprep.subr.bf16.mxu0 0
      %1027 = vmatpush1.bf16.msra.mxu0 0
      %1028 = vmatprep.subr.bf16.mxu0 0
      %1029 = vmatpush1.bf16.msra.mxu0 0
      %1030 = vmatprep.subr.bf16.mxu0 0
      %1031 = vmatpush1.bf16.msra.mxu0 0
      %1032 = vmatprep.mubr.bf16.mxu0 0
      %1033 = vmatmul.mubr.bf16.gmra.mrb[0].mxu0 %v998
      %v1034 = vpop.f32.mrb[0].mxu0
      %v1035 = vadd.f32 %v985, %v1034
      %v1036 = vpop.f32.mrb[0].mxu0
      %v1037 = vpop.f32.mrb[0].mxu0
      %v1038 = vadd.f32 %v988, %v1037
      %v1039 = vpop.f32.mrb[0].mxu0
      %1040 = vdwg.mxu0
      %s1041 = scalar_lea.vmem %s4, 16
      %v1042 = vld [vmem:[%s1041] sm:$0xf]
      %v1043 = vld [vmem:[%s1041 + $0x4] sm:$0xf]
      %v1046 = vunpack.c.l.b16 %v1042
      %v1047 = vunpack.c.l.b16 %v1043
      %v1048 = vpack.c.b16 %v1047, %v1046
      %v1051 = vsel %vm946, %v928, 0
      %1053 = vmatprep.subr.bf16.mxu0 0
      %1054 = vmatpush1.bf16.msra.mxu0 %v1048
      %1055 = vmatprep.subr.bf16.mxu0 0
      %1056 = vmatpush1.bf16.msra.mxu0 0
      %1057 = vmatprep.subr.bf16.mxu0 0
      %1058 = vmatpush1.bf16.msra.mxu0 0
      %1059 = vmatprep.subr.bf16.mxu0 0
      %1060 = vmatpush1.bf16.msra.mxu0 0
      %1061 = vmatprep.subr.bf16.mxu0 0
      %1062 = vmatpush1.bf16.msra.mxu0 0
      %1063 = vmatprep.subr.bf16.mxu0 0
      %1064 = vmatpush1.bf16.msra.mxu0 0
      %1065 = vmatprep.subr.bf16.mxu0 0
      %1066 = vmatpush1.bf16.msra.mxu0 0
      %1067 = vmatprep.subr.bf16.mxu0 0
      %1068 = vmatpush1.bf16.msra.mxu0 0
      %1069 = vmatprep.subr.bf16.mxu0 0
      %1070 = vmatpush1.bf16.msra.mxu0 0
      %1071 = vmatprep.subr.bf16.mxu0 0
      %1072 = vmatpush1.bf16.msra.mxu0 0
      %1073 = vmatprep.subr.bf16.mxu0 0
      %1074 = vmatpush1.bf16.msra.mxu0 0
      %1075 = vmatprep.subr.bf16.mxu0 0
      %1076 = vmatpush1.bf16.msra.mxu0 0
      %1077 = vmatprep.subr.bf16.mxu0 0
      %1078 = vmatpush1.bf16.msra.mxu0 0
      %1079 = vmatprep.subr.bf16.mxu0 0
      %1080 = vmatpush1.bf16.msra.mxu0 0
      %1081 = vmatprep.subr.bf16.mxu0 0
      %1082 = vmatpush1.bf16.msra.mxu0 0
      %1083 = vmatprep.subr.bf16.mxu0 0
      %1084 = vmatpush1.bf16.msra.mxu0 0
      %1085 = vmatprep.mubr.bf16.mxu0 0
      %1086 = vmatmul.mubr.bf16.gmra.mrb[0].mxu0 %v1051
      %v1087 = vpop.f32.mrb[0].mxu0
      %v1088 = vadd.f32 0.0, %v1087
      %v1089 = vpop.f32.mrb[0].mxu0
      %v1090 = vpop.f32.mrb[0].mxu0
      %v1091 = vadd.f32 0.0, %v1090
      %v1092 = vpop.f32.mrb[0].mxu0
      %1093 = vdwg.mxu0
      %v1094 = vadd.f32 %v1035, %v1088
      %v1095 = vadd.f32 %v1038, %v1091
      %s1096 = scalar_lea.vmem %s4, 24
      %v1097 = vld [vmem:[%s1096] sm:$0xf]
      %v1098 = vld [vmem:[%s1096 + $0x4] sm:$0xf]
      %v1101 = vunpack.c.l.b16 %v1097
      %v1102 = vunpack.c.l.b16 %v1098
      %v1103 = vpack.c.b16 %v1102, %v1101
      %v1106 = vsel %vm946, %v929, 0
      %1108 = vmatprep.subr.bf16.mxu0 0
      %1109 = vmatpush1.bf16.msra.mxu0 %v1103
      %1110 = vmatprep.subr.bf16.mxu0 0
      %1111 = vmatpush1.bf16.msra.mxu0 0
      %1112 = vmatprep.subr.bf16.mxu0 0
      %1113 = vmatpush1.bf16.msra.mxu0 0
      %1114 = vmatprep.subr.bf16.mxu0 0
      %1115 = vmatpush1.bf16.msra.mxu0 0
      %1116 = vmatprep.subr.bf16.mxu0 0
      %1117 = vmatpush1.bf16.msra.mxu0 0
      %1118 = vmatprep.subr.bf16.mxu0 0
      %1119 = vmatpush1.bf16.msra.mxu0 0
      %1120 = vmatprep.subr.bf16.mxu0 0
      %1121 = vmatpush1.bf16.msra.mxu0 0
      %1122 = vmatprep.subr.bf16.mxu0 0
      %1123 = vmatpush1.bf16.msra.mxu0 0
      %1124 = vmatprep.subr.bf16.mxu0 0
      %1125 = vmatpush1.bf16.msra.mxu0 0
      %1126 = vmatprep.subr.bf16.mxu0 0
      %1127 = vmatpush1.bf16.msra.mxu0 0
      %1128 = vmatprep.subr.bf16.mxu0 0
      %1129 = vmatpush1.bf16.msra.mxu0 0
      %1130 = vmatprep.subr.bf16.mxu0 0
      %1131 = vmatpush1.bf16.msra.mxu0 0
      %1132 = vmatprep.subr.bf16.mxu0 0
      %1133 = vmatpush1.bf16.msra.mxu0 0
      %1134 = vmatprep.subr.bf16.mxu0 0
      %1135 = vmatpush1.bf16.msra.mxu0 0
      %1136 = vmatprep.subr.bf16.mxu0 0
      %1137 = vmatpush1.bf16.msra.mxu0 0
      %1138 = vmatprep.subr.bf16.mxu0 0
      %1139 = vmatpush1.bf16.msra.mxu0 0
      %1140 = vmatprep.mubr.bf16.mxu0 0
      %1141 = vmatmul.mubr.bf16.gmra.mrb[0].mxu0 %v1106
      %v1142 = vpop.f32.mrb[0].mxu0
      %v1143 = vadd.f32 0.0, %v1142
      %v1144 = vpop.f32.mrb[0].mxu0
      %v1145 = vpop.f32.mrb[0].mxu0
      %v1146 = vadd.f32 0.0, %v1145
      %v1147 = vpop.f32.mrb[0].mxu0
      %1148 = vdwg.mxu0
      %v1149 = vadd.f32 %v1094, %v1143
      %v1150 = vadd.f32 %v1095, %v1146
      %s1151 = scalar_lea.vmem %s4, 32
      %v1152 = vld [vmem:[%s1151] sm:$0xf]
      %v1153 = vld [vmem:[%s1151 + $0x4] sm:$0xf]
      %v1156 = vunpack.c.l.b16 %v1152
      %v1157 = vunpack.c.l.b16 %v1153
      %v1158 = vpack.c.b16 %v1157, %v1156
      %v1161 = vsel %vm946, %v930, 0
      %1163 = vmatprep.subr.bf16.mxu0 0
      %1164 = vmatpush1.bf16.msra.mxu0 %v1158
      %1165 = vmatprep.subr.bf16.mxu0 0
      %1166 = vmatpush1.bf16.msra.mxu0 0
      %1167 = vmatprep.subr.bf16.mxu0 0
      %1168 = vmatpush1.bf16.msra.mxu0 0
      %1169 = vmatprep.subr.bf16.mxu0 0
      %1170 = vmatpush1.bf16.msra.mxu0 0
      %1171 = vmatprep.subr.bf16.mxu0 0
      %1172 = vmatpush1.bf16.msra.mxu0 0
      %1173 = vmatprep.subr.bf16.mxu0 0
      %1174 = vmatpush1.bf16.msra.mxu0 0
      %1175 = vmatprep.subr.bf16.mxu0 0
      %1176 = vmatpush1.bf16.msra.mxu0 0
      %1177 = vmatprep.subr.bf16.mxu0 0
      %1178 = vmatpush1.bf16.msra.mxu0 0
      %1179 = vmatprep.subr.bf16.mxu0 0
      %1180 = vmatpush1.bf16.msra.mxu0 0
      %1181 = vmatprep.subr.bf16.mxu0 0
      %1182 = vmatpush1.bf16.msra.mxu0 0
      %1183 = vmatprep.subr.bf16.mxu0 0
      %1184 = vmatpush1.bf16.msra.mxu0 0
      %1185 = vmatprep.subr.bf16.mxu0 0
      %1186 = vmatpush1.bf16.msra.mxu0 0
      %1187 = vmatprep.subr.bf16.mxu0 0
      %1188 = vmatpush1.bf16.msra.mxu0 0
      %1189 = vmatprep.subr.bf16.mxu0 0
      %1190 = vmatpush1.bf16.msra.mxu0 0
      %1191 = vmatprep.subr.bf16.mxu0 0
      %1192 = vmatpush1.bf16.msra.mxu0 0
      %1193 = vmatprep.subr.bf16.mxu0 0
      %1194 = vmatpush1.bf16.msra.mxu0 0
      %1195 = vmatprep.mubr.bf16.mxu0 0
      %1196 = vmatmul.mubr.bf16.gmra.mrb[0].mxu0 %v1161
      %v1197 = vpop.f32.mrb[0].mxu0
      %v1198 = vadd.f32 0.0, %v1197
      %v1199 = vpop.f32.mrb[0].mxu0
      %v1200 = vpop.f32.mrb[0].mxu0
      %v1201 = vadd.f32 0.0, %v1200
      %v1202 = vpop.f32.mrb[0].mxu0
      %1203 = vdwg.mxu0
      %v1204 = vadd.f32 %v1149, %v1198
      %v1205 = vadd.f32 %v1150, %v1201
      %s1206 = scalar_lea.vmem %s4, 40
      %v1207 = vld [vmem:[%s1206] sm:$0xf]
      %v1208 = vld [vmem:[%s1206 + $0x4] sm:$0xf]
      %v1211 = vunpack.c.l.b16 %v1207
      %v1212 = vunpack.c.l.b16 %v1208
      %v1213 = vpack.c.b16 %v1212, %v1211
      %v1216 = vsel %vm946, %v931, 0
      %1218 = vmatprep.subr.bf16.mxu0 0
      %1219 = vmatpush1.bf16.msra.mxu0 %v1213
      %1220 = vmatprep.subr.bf16.mxu0 0
      %1221 = vmatpush1.bf16.msra.mxu0 0
      %1222 = vmatprep.subr.bf16.mxu0 0
      %1223 = vmatpush1.bf16.msra.mxu0 0
      %1224 = vmatprep.subr.bf16.mxu0 0
      %1225 = vmatpush1.bf16.msra.mxu0 0
      %1226 = vmatprep.subr.bf16.mxu0 0
      %1227 = vmatpush1.bf16.msra.mxu0 0
      %1228 = vmatprep.subr.bf16.mxu0 0
      %1229 = vmatpush1.bf16.msra.mxu0 0
      %1230 = vmatprep.subr.bf16.mxu0 0
      %1231 = vmatpush1.bf16.msra.mxu0 0
      %1232 = vmatprep.subr.bf16.mxu0 0
      %1233 = vmatpush1.bf16.msra.mxu0 0
      %1234 = vmatprep.subr.bf16.mxu0 0
      %1235 = vmatpush1.bf16.msra.mxu0 0
      %1236 = vmatprep.subr.bf16.mxu0 0
      %1237 = vmatpush1.bf16.msra.mxu0 0
      %1238 = vmatprep.subr.bf16.mxu0 0
      %1239 = vmatpush1.bf16.msra.mxu0 0
      %1240 = vmatprep.subr.bf16.mxu0 0
      %1241 = vmatpush1.bf16.msra.mxu0 0
      %1242 = vmatprep.subr.bf16.mxu0 0
      %1243 = vmatpush1.bf16.msra.mxu0 0
      %1244 = vmatprep.subr.bf16.mxu0 0
      %1245 = vmatpush1.bf16.msra.mxu0 0
      %1246 = vmatprep.subr.bf16.mxu0 0
      %1247 = vmatpush1.bf16.msra.mxu0 0
      %1248 = vmatprep.subr.bf16.mxu0 0
      %1249 = vmatpush1.bf16.msra.mxu0 0
      %1250 = vmatprep.mubr.bf16.mxu0 0
      %1251 = vmatmul.mubr.bf16.gmra.mrb[0].mxu0 %v1216
      %v1252 = vpop.f32.mrb[0].mxu0
      %v1253 = vadd.f32 0.0, %v1252
      %v1254 = vpop.f32.mrb[0].mxu0
      %v1255 = vpop.f32.mrb[0].mxu0
      %v1256 = vadd.f32 0.0, %v1255
      %v1257 = vpop.f32.mrb[0].mxu0
      %1258 = vdwg.mxu0
      %v1259 = vadd.f32 %v1204, %v1253
      %v1260 = vadd.f32 %v1205, %v1256
      %s1261 = scalar_lea.vmem %s4, 48
      %v1262 = vld [vmem:[%s1261] sm:$0xf]
      %v1263 = vld [vmem:[%s1261 + $0x4] sm:$0xf]
      %v1266 = vunpack.c.l.b16 %v1262
      %v1267 = vunpack.c.l.b16 %v1263
      %v1268 = vpack.c.b16 %v1267, %v1266
      %v1271 = vsel %vm946, %v932, 0
      %1273 = vmatprep.subr.bf16.mxu0 0
      %1274 = vmatpush1.bf16.msra.mxu0 %v1268
      %1275 = vmatprep.subr.bf16.mxu0 0
      %1276 = vmatpush1.bf16.msra.mxu0 0
      %1277 = vmatprep.subr.bf16.mxu0 0
      %1278 = vmatpush1.bf16.msra.mxu0 0
      %1279 = vmatprep.subr.bf16.mxu0 0
      %1280 = vmatpush1.bf16.msra.mxu0 0
      %1281 = vmatprep.subr.bf16.mxu0 0
      %1282 = vmatpush1.bf16.msra.mxu0 0
      %1283 = vmatprep.subr.bf16.mxu0 0
      %1284 = vmatpush1.bf16.msra.mxu0 0
      %1285 = vmatprep.subr.bf16.mxu0 0
      %1286 = vmatpush1.bf16.msra.mxu0 0
      %1287 = vmatprep.subr.bf16.mxu0 0
      %1288 = vmatpush1.bf16.msra.mxu0 0
      %1289 = vmatprep.subr.bf16.mxu0 0
      %1290 = vmatpush1.bf16.msra.mxu0 0
      %1291 = vmatprep.subr.bf16.mxu0 0
      %1292 = vmatpush1.bf16.msra.mxu0 0
      %1293 = vmatprep.subr.bf16.mxu0 0
      %1294 = vmatpush1.bf16.msra.mxu0 0
      %1295 = vmatprep.subr.bf16.mxu0 0
      %1296 = vmatpush1.bf16.msra.mxu0 0
      %1297 = vmatprep.subr.bf16.mxu0 0
      %1298 = vmatpush1.bf16.msra.mxu0 0
      %1299 = vmatprep.subr.bf16.mxu0 0
      %1300 = vmatpush1.bf16.msra.mxu0 0
      %1301 = vmatprep.subr.bf16.mxu0 0
      %1302 = vmatpush1.bf16.msra.mxu0 0
      %1303 = vmatprep.subr.bf16.mxu0 0
      %1304 = vmatpush1.bf16.msra.mxu0 0
      %1305 = vmatprep.mubr.bf16.mxu0 0
      %1306 = vmatmul.mubr.bf16.gmra.mrb[0].mxu0 %v1271
      %v1307 = vpop.f32.mrb[0].mxu0
      %v1308 = vadd.f32 0.0, %v1307
      %v1309 = vpop.f32.mrb[0].mxu0
      %v1310 = vpop.f32.mrb[0].mxu0
      %v1311 = vadd.f32 0.0, %v1310
      %v1312 = vpop.f32.mrb[0].mxu0
      %1313 = vdwg.mxu0
      %v1314 = vadd.f32 %v1259, %v1308
      %v1315 = vadd.f32 %v1260, %v1311
      %s1316 = scalar_lea.vmem %s4, 56
      %v1317 = vld [vmem:[%s1316] sm:$0xf]
      %v1318 = vld [vmem:[%s1316 + $0x4] sm:$0xf]
      %v1321 = vunpack.c.l.b16 %v1317
      %v1322 = vunpack.c.l.b16 %v1318
      %v1323 = vpack.c.b16 %v1322, %v1321
      %v1326 = vsel %vm946, %v933, 0
      %1328 = vmatprep.subr.bf16.mxu0 0
      %1329 = vmatpush1.bf16.msra.mxu0 %v1323
      %1330 = vmatprep.subr.bf16.mxu0 0
      %1331 = vmatpush1.bf16.msra.mxu0 0
      %1332 = vmatprep.subr.bf16.mxu0 0
      %1333 = vmatpush1.bf16.msra.mxu0 0
      %1334 = vmatprep.subr.bf16.mxu0 0
      %1335 = vmatpush1.bf16.msra.mxu0 0
      %1336 = vmatprep.subr.bf16.mxu0 0
      %1337 = vmatpush1.bf16.msra.mxu0 0
      %1338 = vmatprep.subr.bf16.mxu0 0
      %1339 = vmatpush1.bf16.msra.mxu0 0
      %1340 = vmatprep.subr.bf16.mxu0 0
      %1341 = vmatpush1.bf16.msra.mxu0 0
      %1342 = vmatprep.subr.bf16.mxu0 0
      %1343 = vmatpush1.bf16.msra.mxu0 0
      %1344 = vmatprep.subr.bf16.mxu0 0
      %1345 = vmatpush1.bf16.msra.mxu0 0
      %1346 = vmatprep.subr.bf16.mxu0 0
      %1347 = vmatpush1.bf16.msra.mxu0 0
      %1348 = vmatprep.subr.bf16.mxu0 0
      %1349 = vmatpush1.bf16.msra.mxu0 0
      %1350 = vmatprep.subr.bf16.mxu0 0
      %1351 = vmatpush1.bf16.msra.mxu0 0
      %1352 = vmatprep.subr.bf16.mxu0 0
      %1353 = vmatpush1.bf16.msra.mxu0 0
      %1354 = vmatprep.subr.bf16.mxu0 0
      %1355 = vmatpush1.bf16.msra.mxu0 0
      %1356 = vmatprep.subr.bf16.mxu0 0
      %1357 = vmatpush1.bf16.msra.mxu0 0
      %1358 = vmatprep.subr.bf16.mxu0 0
      %1359 = vmatpush1.bf16.msra.mxu0 0
      %1360 = vmatprep.mubr.bf16.mxu0 0
      %1361 = vmatmul.mubr.bf16.gmra.mrb[0].mxu0 %v1326
      %v1362 = vpop.f32.mrb[0].mxu0
      %v1363 = vadd.f32 0.0, %v1362
      %v1364 = vpop.f32.mrb[0].mxu0
      %v1365 = vpop.f32.mrb[0].mxu0
      %v1366 = vadd.f32 0.0, %v1365
      %v1367 = vpop.f32.mrb[0].mxu0
      %1368 = vdwg.mxu0
      %v1369 = vadd.f32 %v1314, %v1363
      %v1370 = vadd.f32 %v1315, %v1366
      %s1371 = scalar_lea.vmem %s4, 64
      %v1372 = vld [vmem:[%s1371] sm:$0xf]
      %v1373 = vld [vmem:[%s1371 + $0x4] sm:$0xf]
      %v1376 = vunpack.c.l.b16 %v1372
      %v1377 = vunpack.c.l.b16 %v1373
      %v1378 = vpack.c.b16 %v1377, %v1376
      %v1381 = vsel %vm946, %v934, 0
      %1383 = vmatprep.subr.bf16.mxu0 0
      %1384 = vmatpush1.bf16.msra.mxu0 %v1378
      %1385 = vmatprep.subr.bf16.mxu0 0
      %1386 = vmatpush1.bf16.msra.mxu0 0
      %1387 = vmatprep.subr.bf16.mxu0 0
      %1388 = vmatpush1.bf16.msra.mxu0 0
      %1389 = vmatprep.subr.bf16.mxu0 0
      %1390 = vmatpush1.bf16.msra.mxu0 0
      %1391 = vmatprep.subr.bf16.mxu0 0
      %1392 = vmatpush1.bf16.msra.mxu0 0
      %1393 = vmatprep.subr.bf16.mxu0 0
      %1394 = vmatpush1.bf16.msra.mxu0 0
      %1395 = vmatprep.subr.bf16.mxu0 0
      %1396 = vmatpush1.bf16.msra.mxu0 0
      %1397 = vmatprep.subr.bf16.mxu0 0
      %1398 = vmatpush1.bf16.msra.mxu0 0
      %1399 = vmatprep.subr.bf16.mxu0 0
      %1400 = vmatpush1.bf16.msra.mxu0 0
      %1401 = vmatprep.subr.bf16.mxu0 0
      %1402 = vmatpush1.bf16.msra.mxu0 0
      %1403 = vmatprep.subr.bf16.mxu0 0
      %1404 = vmatpush1.bf16.msra.mxu0 0
      %1405 = vmatprep.subr.bf16.mxu0 0
      %1406 = vmatpush1.bf16.msra.mxu0 0
      %1407 = vmatprep.subr.bf16.mxu0 0
      %1408 = vmatpush1.bf16.msra.mxu0 0
      %1409 = vmatprep.subr.bf16.mxu0 0
      %1410 = vmatpush1.bf16.msra.mxu0 0
      %1411 = vmatprep.subr.bf16.mxu0 0
      %1412 = vmatpush1.bf16.msra.mxu0 0
      %1413 = vmatprep.subr.bf16.mxu0 0
      %1414 = vmatpush1.bf16.msra.mxu0 0
      %1415 = vmatprep.mubr.bf16.mxu0 0
      %1416 = vmatmul.mubr.bf16.gmra.mrb[0].mxu0 %v1381
      %v1417 = vpop.f32.mrb[0].mxu0
      %v1418 = vadd.f32 0.0, %v1417
      %v1419 = vpop.f32.mrb[0].mxu0
      %v1420 = vpop.f32.mrb[0].mxu0
      %v1421 = vadd.f32 0.0, %v1420
      %v1422 = vpop.f32.mrb[0].mxu0
      %1423 = vdwg.mxu0
      %v1424 = vadd.f32 %v1369, %v1418
      %v1425 = vadd.f32 %v1370, %v1421
      %v1426 = vld [vmem:[%s5] sm:$0x1]
      %v1428 = vlaneseq
      %v1429 = vshrl.u32 %v1428, 7
      %v1430 = vsub.s32 0, %v1429
      %v1431 = vrot.slane %v1426, %v1430
      %v1433 = vadd.f32 %v1424, %v1431
      %v1434 = vadd.f32 %v1425, %v1431
      %v1435 = vmax.f32 %v1433, 0.0
      %v1436 = vmax.f32 %v1434, 0.0
      %v1437 = vpack.c.bf16 %v1436, %v1435
      %v1438 = vld [vmem:[%s6] sm:$0xf]
      %v1439 = vld [vmem:[%s6 + $0x4] sm:$0xf]
      %v1440 = vld [vmem:[%s6 + $0x8] sm:$0xf]
      %v1441 = vld [vmem:[%s6 + $0xc] sm:$0xf]
      %v1442 = vld [vmem:[%s6 + $0x10] sm:$0xf]
      %v1443 = vld [vmem:[%s6 + $0x14] sm:$0xf]
      %v1444 = vld [vmem:[%s6 + $0x18] sm:$0xf]
      %v1445 = vld [vmem:[%s6 + $0x1c] sm:$0xf]
      %v1446 = vld [vmem:[%s6 + $0x20] sm:$0xf]
      %v1447 = vld [vmem:[%s6 + $0x24] sm:$0xf]
      %v1448 = vld [vmem:[%s6 + $0x28] sm:$0xf]
      %v1449 = vld [vmem:[%s6 + $0x2c] sm:$0xf]
      %v1450 = vld [vmem:[%s6 + $0x30] sm:$0xf]
      %v1451 = vld [vmem:[%s6 + $0x34] sm:$0xf]
      %v1452 = vld [vmem:[%s6 + $0x38] sm:$0xf]
      %v1453 = vld [vmem:[%s6 + $0x3c] sm:$0xf]
      %v1454 = vld [vmem:[%s6 + $0x40] sm:$0xf]
      %v1455 = vld [vmem:[%s6 + $0x44] sm:$0xf]
      %v1456 = vld [vmem:[%s6 + $0x48] sm:$0xf]
      %v1457 = vld [vmem:[%s6 + $0x4c] sm:$0xf]
      %v1458 = vld [vmem:[%s6 + $0x50] sm:$0xf]
      %v1459 = vld [vmem:[%s6 + $0x54] sm:$0xf]
      %v1460 = vld [vmem:[%s6 + $0x58] sm:$0xf]
      %v1461 = vld [vmem:[%s6 + $0x5c] sm:$0xf]
      %v1462 = vld [vmem:[%s6 + $0x60] sm:$0xf]
      %v1463 = vld [vmem:[%s6 + $0x64] sm:$0xf]
      %v1464 = vld [vmem:[%s6 + $0x68] sm:$0xf]
      %v1465 = vld [vmem:[%s6 + $0x6c] sm:$0xf]
      %v1466 = vld [vmem:[%s6 + $0x70] sm:$0xf]
      %v1467 = vld [vmem:[%s6 + $0x74] sm:$0xf]
      %v1468 = vld [vmem:[%s6 + $0x78] sm:$0xf]
      %v1469 = vld [vmem:[%s6 + $0x7c] sm:$0xf]
      %v1470 = vld [vmem:[%s6 + $0x80] sm:$0xf]
      %v1471 = vld [vmem:[%s6 + $0x84] sm:$0xf]
      %v1472 = vld [vmem:[%s6 + $0x88] sm:$0xf]
      %v1473 = vld [vmem:[%s6 + $0x8c] sm:$0xf]
      %v1474 = vld [vmem:[%s6 + $0x90] sm:$0xf]
      %v1475 = vld [vmem:[%s6 + $0x94] sm:$0xf]
      %v1514 = vunpack.c.l.b16 %v1438
      %v1515 = vunpack.c.l.b16 %v1439
      %v1516 = vunpack.c.l.b16 %v1440
      %v1517 = vunpack.c.l.b16 %v1441
      %v1518 = vunpack.c.l.b16 %v1442
      %v1519 = vunpack.c.l.b16 %v1443
      %v1520 = vunpack.c.l.b16 %v1444
      %v1521 = vunpack.c.l.b16 %v1445
      %v1522 = vunpack.c.l.b16 %v1446
      %v1523 = vunpack.c.l.b16 %v1447
      %v1524 = vunpack.c.l.b16 %v1448
      %v1525 = vunpack.c.l.b16 %v1449
      %v1526 = vunpack.c.l.b16 %v1450
      %v1527 = vunpack.c.l.b16 %v1451
      %v1528 = vunpack.c.l.b16 %v1452
      %v1529 = vunpack.c.l.b16 %v1453
      %v1530 = vunpack.c.l.b16 %v1454
      %v1531 = vunpack.c.l.b16 %v1455
      %v1532 = vunpack.c.l.b16 %v1456
      %v1533 = vunpack.c.l.b16 %v1457
      %v1534 = vunpack.c.l.b16 %v1458
      %v1535 = vunpack.c.l.b16 %v1459
      %v1536 = vunpack.c.l.b16 %v1460
      %v1537 = vunpack.c.l.b16 %v1461
      %v1538 = vunpack.c.l.b16 %v1462
      %v1539 = vunpack.c.l.b16 %v1463
      %v1540 = vunpack.c.l.b16 %v1464
      %v1541 = vunpack.c.l.b16 %v1465
      %v1542 = vunpack.c.l.b16 %v1466
      %v1543 = vunpack.c.l.b16 %v1467
      %v1544 = vunpack.c.l.b16 %v1468
      %v1545 = vunpack.c.l.b16 %v1469
      %v1546 = vunpack.c.l.b16 %v1470
      %v1547 = vunpack.c.l.b16 %v1471
      %v1548 = vunpack.c.l.b16 %v1472
      %v1549 = vunpack.c.l.b16 %v1473
      %v1550 = vunpack.c.l.b16 %v1474
      %v1551 = vunpack.c.l.b16 %v1475
      %v1552 = vpack.c.b16 %v1515, %v1514
      %v1553 = vpack.c.b16 %v1517, %v1516
      %v1554 = vpack.c.b16 %v1519, %v1518
      %v1555 = vpack.c.b16 %v1521, %v1520
      %v1556 = vpack.c.b16 %v1523, %v1522
      %v1557 = vpack.c.b16 %v1525, %v1524
      %v1558 = vpack.c.b16 %v1527, %v1526
      %v1559 = vpack.c.b16 %v1529, %v1528
      %v1560 = vpack.c.b16 %v1531, %v1530
      %v1561 = vpack.c.b16 %v1533, %v1532
      %v1562 = vpack.c.b16 %v1535, %v1534
      %v1563 = vpack.c.b16 %v1537, %v1536
      %v1564 = vpack.c.b16 %v1539, %v1538
      %v1565 = vpack.c.b16 %v1541, %v1540
      %v1566 = vpack.c.b16 %v1543, %v1542
      %v1567 = vpack.c.b16 %v1545, %v1544
      %v1568 = vpack.c.b16 %v1547, %v1546
      %v1569 = vpack.c.b16 %v1549, %v1548
      %v1570 = vpack.c.b16 %v1551, %v1550
      %v1572 = vsel %vm946, %v1552, 0
      %v1575 = vsel %vm946, %v1553, 0
      %v1578 = vsel %vm946, %v1554, 0
      %v1581 = vsel %vm946, %v1555, 0
      %v1584 = vsel %vm946, %v1556, 0
      %v1587 = vsel %vm946, %v1557, 0
      %v1590 = vsel %vm946, %v1558, 0
      %v1593 = vsel %vm946, %v1559, 0
      %v1596 = vsel %vm946, %v1560, 0
      %v1599 = vsel %vm946, %v1561, 0
      %v1602 = vsel %vm946, %v1562, 0
      %v1605 = vsel %vm946, %v1563, 0
      %v1608 = vsel %vm946, %v1564, 0
      %v1611 = vsel %vm946, %v1565, 0
      %v1614 = vsel %vm946, %v1566, 0
      %v1617 = vsel %vm946, %v1567, 0
      %v1620 = vsel %vm946, %v1568, 0
      %v1623 = vsel %vm946, %v1569, 0
      %v1626 = vsel %vm946, %v1570, 0
      %1628 = vmatprep.subr.bf16.mxu0 0
      %1629 = vmatpush1.bf16.msra.mxu0 %v1437
      %1630 = vmatprep.subr.bf16.mxu0 0
      %1631 = vmatpush1.bf16.msra.mxu0 0
      %1632 = vmatprep.subr.bf16.mxu0 0
      %1633 = vmatpush1.bf16.msra.mxu0 0
      %1634 = vmatprep.subr.bf16.mxu0 0
      %1635 = vmatpush1.bf16.msra.mxu0 0
      %1636 = vmatprep.subr.bf16.mxu0 0
      %1637 = vmatpush1.bf16.msra.mxu0 0
      %1638 = vmatprep.subr.bf16.mxu0 0
      %1639 = vmatpush1.bf16.msra.mxu0 0
      %1640 = vmatprep.subr.bf16.mxu0 0
      %1641 = vmatpush1.bf16.msra.mxu0 0
      %1642 = vmatprep.subr.bf16.mxu0 0
      %1643 = vmatpush1.bf16.msra.mxu0 0
      %1644 = vmatprep.subr.bf16.mxu0 0
      %1645 = vmatpush1.bf16.msra.mxu0 0
      %1646 = vmatprep.subr.bf16.mxu0 0
      %1647 = vmatpush1.bf16.msra.mxu0 0
      %1648 = vmatprep.subr.bf16.mxu0 0
      %1649 = vmatpush1.bf16.msra.mxu0 0
      %1650 = vmatprep.subr.bf16.mxu0 0
      %1651 = vmatpush1.bf16.msra.mxu0 0
      %1652 = vmatprep.subr.bf16.mxu0 0
      %1653 = vmatpush1.bf16.msra.mxu0 0
      %1654 = vmatprep.subr.bf16.mxu0 0
      %1655 = vmatpush1.bf16.msra.mxu0 0
      %1656 = vmatprep.subr.bf16.mxu0 0
      %1657 = vmatpush1.bf16.msra.mxu0 0
      %1658 = vmatprep.subr.bf16.mxu0 0
      %1659 = vmatpush1.bf16.msra.mxu0 0
      %1660 = vmatprep.mubr.bf16.mxu0 0
      %1661 = vmatmul.mubr.bf16.gmra.mrb[0].mxu0 %v1572
      %v1662 = vpop.f32.mrb[0].mxu0
      %v1663 = vadd.f32 0.0, %v1662
      %v1664 = vpop.f32.mrb[0].mxu0
      %v1665 = vpop.f32.mrb[0].mxu0
      %v1666 = vadd.f32 0.0, %v1665
      %v1667 = vpop.f32.mrb[0].mxu0
      %1668 = vmatprep.mubr.bf16.mxu0 0
      %1669 = vmatmul.mubr.bf16.gmra.mrb[0].mxu0 %v1575
      %v1670 = vpop.f32.mrb[0].mxu0
      %v1671 = vadd.f32 0.0, %v1670
      %v1672 = vpop.f32.mrb[0].mxu0
      %v1673 = vpop.f32.mrb[0].mxu0
      %v1674 = vadd.f32 0.0, %v1673
      %v1675 = vpop.f32.mrb[0].mxu0
      %1676 = vmatprep.mubr.bf16.mxu0 0
      %1677 = vmatmul.mubr.bf16.gmra.mrb[0].mxu0 %v1578
      %v1678 = vpop.f32.mrb[0].mxu0
      %v1679 = vadd.f32 0.0, %v1678
      %v1680 = vpop.f32.mrb[0].mxu0
      %v1681 = vpop.f32.mrb[0].mxu0
      %v1682 = vadd.f32 0.0, %v1681
      %v1683 = vpop.f32.mrb[0].mxu0
      %1684 = vmatprep.mubr.bf16.mxu0 0
      %1685 = vmatmul.mubr.bf16.gmra.mrb[0].mxu0 %v1581
      %v1686 = vpop.f32.mrb[0].mxu0
      %v1687 = vadd.f32 0.0, %v1686
      %v1688 = vpop.f32.mrb[0].mxu0
      %v1689 = vpop.f32.mrb[0].mxu0
      %v1690 = vadd.f32 0.0, %v1689
      %v1691 = vpop.f32.mrb[0].mxu0
      %1692 = vmatprep.mubr.bf16.mxu0 0
      %1693 = vmatmul.mubr.bf16.gmra.mrb[0].mxu0 %v1584
      %v1694 = vpop.f32.mrb[0].mxu0
      %v1695 = vadd.f32 0.0, %v1694
      %v1696 = vpop.f32.mrb[0].mxu0
      %v1697 = vpop.f32.mrb[0].mxu0
      %v1698 = vadd.f32 0.0, %v1697
      %v1699 = vpop.f32.mrb[0].mxu0
      %1700 = vmatprep.mubr.bf16.mxu0 0
      %1701 = vmatmul.mubr.bf16.gmra.mrb[0].mxu0 %v1587
      %v1702 = vpop.f32.mrb[0].mxu0
      %v1703 = vadd.f32 0.0, %v1702
      %v1704 = vpop.f32.mrb[0].mxu0
      %v1705 = vpop.f32.mrb[0].mxu0
      %v1706 = vadd.f32 0.0, %v1705
      %v1707 = vpop.f32.mrb[0].mxu0
      %1708 = vmatprep.mubr.bf16.mxu0 0
      %1709 = vmatmul.mubr.bf16.gmra.mrb[0].mxu0 %v1590
      %v1710 = vpop.f32.mrb[0].mxu0
      %v1711 = vadd.f32 0.0, %v1710
      %v1712 = vpop.f32.mrb[0].mxu0
      %v1713 = vpop.f32.mrb[0].mxu0
      %v1714 = vadd.f32 0.0, %v1713
      %v1715 = vpop.f32.mrb[0].mxu0
      %1716 = vmatprep.mubr.bf16.mxu0 0
      %1717 = vmatmul.mubr.bf16.gmra.mrb[0].mxu0 %v1593
      %v1718 = vpop.f32.mrb[0].mxu0
      %v1719 = vadd.f32 0.0, %v1718
      %v1720 = vpop.f32.mrb[0].mxu0
      %v1721 = vpop.f32.mrb[0].mxu0
      %v1722 = vadd.f32 0.0, %v1721
      %v1723 = vpop.f32.mrb[0].mxu0
      %1724 = vmatprep.mubr.bf16.mxu0 0
      %1725 = vmatmul.mubr.bf16.gmra.mrb[0].mxu0 %v1596
      %v1726 = vpop.f32.mrb[0].mxu0
      %v1727 = vadd.f32 0.0, %v1726
      %v1728 = vpop.f32.mrb[0].mxu0
      %v1729 = vpop.f32.mrb[0].mxu0
      %v1730 = vadd.f32 0.0, %v1729
      %v1731 = vpop.f32.mrb[0].mxu0
      %1732 = vmatprep.mubr.bf16.mxu0 0
      %1733 = vmatmul.mubr.bf16.gmra.mrb[0].mxu0 %v1599
      %v1734 = vpop.f32.mrb[0].mxu0
      %v1735 = vadd.f32 0.0, %v1734
      %v1736 = vpop.f32.mrb[0].mxu0
      %v1737 = vpop.f32.mrb[0].mxu0
      %v1738 = vadd.f32 0.0, %v1737
      %v1739 = vpop.f32.mrb[0].mxu0
      %1740 = vmatprep.mubr.bf16.mxu0 0
      %1741 = vmatmul.mubr.bf16.gmra.mrb[0].mxu0 %v1602
      %v1742 = vpop.f32.mrb[0].mxu0
      %v1743 = vadd.f32 0.0, %v1742
      %v1744 = vpop.f32.mrb[0].mxu0
      %v1745 = vpop.f32.mrb[0].mxu0
      %v1746 = vadd.f32 0.0, %v1745
      %v1747 = vpop.f32.mrb[0].mxu0
      %1748 = vmatprep.mubr.bf16.mxu0 0
      %1749 = vmatmul.mubr.bf16.gmra.mrb[0].mxu0 %v1605
      %v1750 = vpop.f32.mrb[0].mxu0
      %v1751 = vadd.f32 0.0, %v1750
      %v1752 = vpop.f32.mrb[0].mxu0
      %v1753 = vpop.f32.mrb[0].mxu0
      %v1754 = vadd.f32 0.0, %v1753
      %v1755 = vpop.f32.mrb[0].mxu0
      %1756 = vmatprep.mubr.bf16.mxu0 0
      %1757 = vmatmul.mubr.bf16.gmra.mrb[0].mxu0 %v1608
      %v1758 = vpop.f32.mrb[0].mxu0
      %v1759 = vadd.f32 0.0, %v1758
      %v1760 = vpop.f32.mrb[0].mxu0
      %v1761 = vpop.f32.mrb[0].mxu0
      %v1762 = vadd.f32 0.0, %v1761
      %v1763 = vpop.f32.mrb[0].mxu0
      %1764 = vmatprep.mubr.bf16.mxu0 0
      %1765 = vmatmul.mubr.bf16.gmra.mrb[0].mxu0 %v1611
      %v1766 = vpop.f32.mrb[0].mxu0
      %v1767 = vadd.f32 0.0, %v1766
      %v1768 = vpop.f32.mrb[0].mxu0
      %v1769 = vpop.f32.mrb[0].mxu0
      %v1770 = vadd.f32 0.0, %v1769
      %v1771 = vpop.f32.mrb[0].mxu0
      %1772 = vmatprep.mubr.bf16.mxu0 0
      %1773 = vmatmul.mubr.bf16.gmra.mrb[0].mxu0 %v1614
      %v1774 = vpop.f32.mrb[0].mxu0
      %v1775 = vadd.f32 0.0, %v1774
      %v1776 = vpop.f32.mrb[0].mxu0
      %v1777 = vpop.f32.mrb[0].mxu0
      %v1778 = vadd.f32 0.0, %v1777
      %v1779 = vpop.f32.mrb[0].mxu0
      %1780 = vmatprep.mubr.bf16.mxu0 0
      %1781 = vmatmul.mubr.bf16.gmra.mrb[0].mxu0 %v1617
      %v1782 = vpop.f32.mrb[0].mxu0
      %v1783 = vadd.f32 0.0, %v1782
      %v1784 = vpop.f32.mrb[0].mxu0
      %v1785 = vpop.f32.mrb[0].mxu0
      %v1786 = vadd.f32 0.0, %v1785
      %v1787 = vpop.f32.mrb[0].mxu0
      %1788 = vmatprep.mubr.bf16.mxu0 0
      %1789 = vmatmul.mubr.bf16.gmra.mrb[0].mxu0 %v1620
      %v1790 = vpop.f32.mrb[0].mxu0
      %v1791 = vadd.f32 0.0, %v1790
      %v1792 = vpop.f32.mrb[0].mxu0
      %v1793 = vpop.f32.mrb[0].mxu0
      %v1794 = vadd.f32 0.0, %v1793
      %v1795 = vpop.f32.mrb[0].mxu0
      %1796 = vmatprep.mubr.bf16.mxu0 0
      %1797 = vmatmul.mubr.bf16.gmra.mrb[0].mxu0 %v1623
      %v1798 = vpop.f32.mrb[0].mxu0
      %v1799 = vadd.f32 0.0, %v1798
      %v1800 = vpop.f32.mrb[0].mxu0
      %v1801 = vpop.f32.mrb[0].mxu0
      %v1802 = vadd.f32 0.0, %v1801
      %v1803 = vpop.f32.mrb[0].mxu0
      %1804 = vmatprep.mubr.bf16.mxu0 0
      %1805 = vmatmul.mubr.bf16.gmra.mrb[0].mxu0 %v1626
      %v1806 = vpop.f32.mrb[0].mxu0
      %v1807 = vadd.f32 0.0, %v1806
      %v1808 = vpop.f32.mrb[0].mxu0
      %v1809 = vpop.f32.mrb[0].mxu0
      %v1810 = vadd.f32 0.0, %v1809
      %v1811 = vpop.f32.mrb[0].mxu0
      %1812 = vdwg.mxu0
      %v1813 = vpack.c.bf16 %v1666, %v1663
      %v1814 = vpack.c.bf16 %v1674, %v1671
      %v1815 = vpack.c.bf16 %v1682, %v1679
      %v1816 = vpack.c.bf16 %v1690, %v1687
      %v1817 = vpack.c.bf16 %v1698, %v1695
      %v1818 = vpack.c.bf16 %v1706, %v1703
      %v1819 = vpack.c.bf16 %v1714, %v1711
      %v1820 = vpack.c.bf16 %v1722, %v1719
      %v1821 = vpack.c.bf16 %v1730, %v1727
      %v1822 = vpack.c.bf16 %v1738, %v1735
      %v1823 = vpack.c.bf16 %v1746, %v1743
      %v1824 = vpack.c.bf16 %v1754, %v1751
      %v1825 = vpack.c.bf16 %v1762, %v1759
      %v1826 = vpack.c.bf16 %v1770, %v1767
      %v1827 = vpack.c.bf16 %v1778, %v1775
      %v1828 = vpack.c.bf16 %v1786, %v1783
      %v1829 = vpack.c.bf16 %v1794, %v1791
      %v1830 = vpack.c.bf16 %v1802, %v1799
      %v1831 = vpack.c.bf16 %v1810, %v1807
      %v1832 = vld [vmem:[%s7] sm:$0xf]
      %v1833 = vld [vmem:[%s7 + $0x4] sm:$0xf]
      %v1834 = vld [vmem:[%s7 + $0x8] sm:$0xf]
      %v1835 = vld [vmem:[%s7 + $0xc] sm:$0xf]
      %s1836 = scalar_lea.vmem %s7, 16
      %v1837 = vld [vmem:[%s1836] sm:$0xf]
      %v1838 = vld [vmem:[%s1836 + $0x4] sm:$0xf]
      %v1839 = vld [vmem:[%s1836 + $0x8] sm:$0xf]
      %v1840 = vld [vmem:[%s1836 + $0xc] sm:$0xf]
      %v1845 = vunpack.c.l.b16 %v1837
      %v1846 = vunpack.c.l.b16 %v1838
      %v1847 = vunpack.c.l.b16 %v1839
      %v1848 = vunpack.c.l.b16 %v1840
      %v1849 = vpack.c.b16 %v1846, %v1845
      %v1850 = vpack.c.b16 %v1848, %v1847
      %vm1853 = vcmask 261120
      %v1855 = vsel %vm1853, %v1813, 0
      %1857 = vmatprep.subr.bf16.mxu0 0
      %1858 = vmatpush1.bf16.msra.mxu0 %v1849
      %1859 = vmatprep.subr.bf16.mxu0 0
      %1860 = vmatpush1.bf16.msra.mxu0 %v1850
      %1861 = vmatprep.subr.bf16.mxu0 0
      %1862 = vmatpush1.bf16.msra.mxu0 0
      %1863 = vmatprep.subr.bf16.mxu0 0
      %1864 = vmatpush1.bf16.msra.mxu0 0
      %1865 = vmatprep.subr.bf16.mxu0 0
      %1866 = vmatpush1.bf16.msra.mxu0 0
      %1867 = vmatprep.subr.bf16.mxu0 0
      %1868 = vmatpush1.bf16.msra.mxu0 0
      %1869 = vmatprep.subr.bf16.mxu0 0
      %1870 = vmatpush1.bf16.msra.mxu0 0
      %1871 = vmatprep.subr.bf16.mxu0 0
      %1872 = vmatpush1.bf16.msra.mxu0 0
      %1873 = vmatprep.subr.bf16.mxu0 0
      %1874 = vmatpush1.bf16.msra.mxu0 0
      %1875 = vmatprep.subr.bf16.mxu0 0
      %1876 = vmatpush1.bf16.msra.mxu0 0
      %1877 = vmatprep.subr.bf16.mxu0 0
      %1878 = vmatpush1.bf16.msra.mxu0 0
      %1879 = vmatprep.subr.bf16.mxu0 0
      %1880 = vmatpush1.bf16.msra.mxu0 0
      %1881 = vmatprep.subr.bf16.mxu0 0
      %1882 = vmatpush1.bf16.msra.mxu0 0
      %1883 = vmatprep.subr.bf16.mxu0 0
      %1884 = vmatpush1.bf16.msra.mxu0 0
      %1885 = vmatprep.subr.bf16.mxu0 0
      %1886 = vmatpush1.bf16.msra.mxu0 0
      %1887 = vmatprep.subr.bf16.mxu0 0
      %1888 = vmatpush1.bf16.msra.mxu0 0
      %1889 = vmatprep.mubr.bf16.mxu0 0
      %1890 = vmatmul.mubr.bf16.gmra.mrb[0].mxu0 %v1855
      %v1891 = vpop.f32.mrb[0].mxu0
      %v1892 = vadd.f32 0.0, %v1891
      %v1893 = vpop.f32.mrb[0].mxu0
      %v1894 = vpop.f32.mrb[0].mxu0
      %v1895 = vadd.f32 0.0, %v1894
      %v1896 = vpop.f32.mrb[0].mxu0
      %1897 = vdwg.mxu0
      %v1902 = vunpack.c.l.b16 %v1832
      %v1903 = vunpack.c.l.b16 %v1833
      %v1904 = vunpack.c.l.b16 %v1834
      %v1905 = vunpack.c.l.b16 %v1835
      %v1906 = vpack.c.b16 %v1903, %v1902
      %v1907 = vpack.c.b16 %v1905, %v1904
      %v1911 = vsel %vm1853, %v1437, 0
      %1913 = vmatprep.subr.bf16.mxu0 0
      %1914 = vmatpush1.bf16.msra.mxu0 %v1906
      %1915 = vmatprep.subr.bf16.mxu0 0
      %1916 = vmatpush1.bf16.msra.mxu0 %v1907
      %1917 = vmatprep.subr.bf16.mxu0 0
      %1918 = vmatpush1.bf16.msra.mxu0 0
      %1919 = vmatprep.subr.bf16.mxu0 0
      %1920 = vmatpush1.bf16.msra.mxu0 0
      %1921 = vmatprep.subr.bf16.mxu0 0
      %1922 = vmatpush1.bf16.msra.mxu0 0
      %1923 = vmatprep.subr.bf16.mxu0 0
      %1924 = vmatpush1.bf16.msra.mxu0 0
      %1925 = vmatprep.subr.bf16.mxu0 0
      %1926 = vmatpush1.bf16.msra.mxu0 0
      %1927 = vmatprep.subr.bf16.mxu0 0
      %1928 = vmatpush1.bf16.msra.mxu0 0
      %1929 = vmatprep.subr.bf16.mxu0 0
      %1930 = vmatpush1.bf16.msra.mxu0 0
      %1931 = vmatprep.subr.bf16.mxu0 0
      %1932 = vmatpush1.bf16.msra.mxu0 0
      %1933 = vmatprep.subr.bf16.mxu0 0
      %1934 = vmatpush1.bf16.msra.mxu0 0
      %1935 = vmatprep.subr.bf16.mxu0 0
      %1936 = vmatpush1.bf16.msra.mxu0 0
      %1937 = vmatprep.subr.bf16.mxu0 0
      %1938 = vmatpush1.bf16.msra.mxu0 0
      %1939 = vmatprep.subr.bf16.mxu0 0
      %1940 = vmatpush1.bf16.msra.mxu0 0
      %1941 = vmatprep.subr.bf16.mxu0 0
      %1942 = vmatpush1.bf16.msra.mxu0 0
      %1943 = vmatprep.subr.bf16.mxu0 0
      %1944 = vmatpush1.bf16.msra.mxu0 0
      %1945 = vmatprep.mubr.bf16.mxu0 0
      %1946 = vmatmul.mubr.bf16.gmra.mrb[0].mxu0 %v1911
      %v1947 = vpop.f32.mrb[0].mxu0
      %v1948 = vadd.f32 %v1892, %v1947
      %v1949 = vpop.f32.mrb[0].mxu0
      %v1950 = vpop.f32.mrb[0].mxu0
      %v1951 = vadd.f32 %v1895, %v1950
      %v1952 = vpop.f32.mrb[0].mxu0
      %1953 = vdwg.mxu0
      %s1954 = scalar_lea.vmem %s7, 32
      %v1955 = vld [vmem:[%s1954] sm:$0xf]
      %v1956 = vld [vmem:[%s1954 + $0x4] sm:$0xf]
      %v1957 = vld [vmem:[%s1954 + $0x8] sm:$0xf]
      %v1958 = vld [vmem:[%s1954 + $0xc] sm:$0xf]
      %v1963 = vunpack.c.l.b16 %v1955
      %v1964 = vunpack.c.l.b16 %v1956
      %v1965 = vunpack.c.l.b16 %v1957
      %v1966 = vunpack.c.l.b16 %v1958
      %v1967 = vpack.c.b16 %v1964, %v1963
      %v1968 = vpack.c.b16 %v1966, %v1965
      %v1972 = vsel %vm1853, %v1814, 0
      %1974 = vmatprep.subr.bf16.mxu0 0
      %1975 = vmatpush1.bf16.msra.mxu0 %v1967
      %1976 = vmatprep.subr.bf16.mxu0 0
      %1977 = vmatpush1.bf16.msra.mxu0 %v1968
      %1978 = vmatprep.subr.bf16.mxu0 0
      %1979 = vmatpush1.bf16.msra.mxu0 0
      %1980 = vmatprep.subr.bf16.mxu0 0
      %1981 = vmatpush1.bf16.msra.mxu0 0
      %1982 = vmatprep.subr.bf16.mxu0 0
      %1983 = vmatpush1.bf16.msra.mxu0 0
      %1984 = vmatprep.subr.bf16.mxu0 0
      %1985 = vmatpush1.bf16.msra.mxu0 0
      %1986 = vmatprep.subr.bf16.mxu0 0
      %1987 = vmatpush1.bf16.msra.mxu0 0
      %1988 = vmatprep.subr.bf16.mxu0 0
      %1989 = vmatpush1.bf16.msra.mxu0 0
      %1990 = vmatprep.subr.bf16.mxu0 0
      %1991 = vmatpush1.bf16.msra.mxu0 0
      %1992 = vmatprep.subr.bf16.mxu0 0
      %1993 = vmatpush1.bf16.msra.mxu0 0
      %1994 = vmatprep.subr.bf16.mxu0 0
      %1995 = vmatpush1.bf16.msra.mxu0 0
      %1996 = vmatprep.subr.bf16.mxu0 0
      %1997 = vmatpush1.bf16.msra.mxu0 0
      %1998 = vmatprep.subr.bf16.mxu0 0
      %1999 = vmatpush1.bf16.msra.mxu0 0
      %2000 = vmatprep.subr.bf16.mxu0 0
      %2001 = vmatpush1.bf16.msra.mxu0 0
      %2002 = vmatprep.subr.bf16.mxu0 0
      %2003 = vmatpush1.bf16.msra.mxu0 0
      %2004 = vmatprep.subr.bf16.mxu0 0
      %2005 = vmatpush1.bf16.msra.mxu0 0
      %2006 = vmatprep.mubr.bf16.mxu0 0
      %2007 = vmatmul.mubr.bf16.gmra.mrb[0].mxu0 %v1972
      %v2008 = vpop.f32.mrb[0].mxu0
      %v2009 = vadd.f32 0.0, %v2008
      %v2010 = vpop.f32.mrb[0].mxu0
      %v2011 = vpop.f32.mrb[0].mxu0
      %v2012 = vadd.f32 0.0, %v2011
      %v2013 = vpop.f32.mrb[0].mxu0
      %2014 = vdwg.mxu0
      %v2015 = vadd.f32 %v1948, %v2009
      %v2016 = vadd.f32 %v1951, %v2012
      %s2017 = scalar_lea.vmem %s7, 48
      %v2018 = vld [vmem:[%s2017] sm:$0xf]
      %v2019 = vld [vmem:[%s2017 + $0x4] sm:$0xf]
      %v2020 = vld [vmem:[%s2017 + $0x8] sm:$0xf]
      %v2021 = vld [vmem:[%s2017 + $0xc] sm:$0xf]
      %v2026 = vunpack.c.l.b16 %v2018
      %v2027 = vunpack.c.l.b16 %v2019
      %v2028 = vunpack.c.l.b16 %v2020
      %v2029 = vunpack.c.l.b16 %v2021
      %v2030 = vpack.c.b16 %v2027, %v2026
      %v2031 = vpack.c.b16 %v2029, %v2028
      %v2035 = vsel %vm1853, %v1815, 0
      %2037 = vmatprep.subr.bf16.mxu0 0
      %2038 = vmatpush1.bf16.msra.mxu0 %v2030
      %2039 = vmatprep.subr.bf16.mxu0 0
      %2040 = vmatpush1.bf16.msra.mxu0 %v2031
      %2041 = vmatprep.subr.bf16.mxu0 0
      %2042 = vmatpush1.bf16.msra.mxu0 0
      %2043 = vmatprep.subr.bf16.mxu0 0
      %2044 = vmatpush1.bf16.msra.mxu0 0
      %2045 = vmatprep.subr.bf16.mxu0 0
      %2046 = vmatpush1.bf16.msra.mxu0 0
      %2047 = vmatprep.subr.bf16.mxu0 0
      %2048 = vmatpush1.bf16.msra.mxu0 0
      %2049 = vmatprep.subr.bf16.mxu0 0
      %2050 = vmatpush1.bf16.msra.mxu0 0
      %2051 = vmatprep.subr.bf16.mxu0 0
      %2052 = vmatpush1.bf16.msra.mxu0 0
      %2053 = vmatprep.subr.bf16.mxu0 0
      %2054 = vmatpush1.bf16.msra.mxu0 0
      %2055 = vmatprep.subr.bf16.mxu0 0
      %2056 = vmatpush1.bf16.msra.mxu0 0
      %2057 = vmatprep.subr.bf16.mxu0 0
      %2058 = vmatpush1.bf16.msra.mxu0 0
      %2059 = vmatprep.subr.bf16.mxu0 0
      %2060 = vmatpush1.bf16.msra.mxu0 0
      %2061 = vmatprep.subr.bf16.mxu0 0
      %2062 = vmatpush1.bf16.msra.mxu0 0
      %2063 = vmatprep.subr.bf16.mxu0 0
      %2064 = vmatpush1.bf16.msra.mxu0 0
      %2065 = vmatprep.subr.bf16.mxu0 0
      %2066 = vmatpush1.bf16.msra.mxu0 0
      %2067 = vmatprep.subr.bf16.mxu0 0
      %2068 = vmatpush1.bf16.msra.mxu0 0
      %2069 = vmatprep.mubr.bf16.mxu0 0
      %2070 = vmatmul.mubr.bf16.gmra.mrb[0].mxu0 %v2035
      %v2071 = vpop.f32.mrb[0].mxu0
      %v2072 = vadd.f32 0.0, %v2071
      %v2073 = vpop.f32.mrb[0].mxu0
      %v2074 = vpop.f32.mrb[0].mxu0
      %v2075 = vadd.f32 0.0, %v2074
      %v2076 = vpop.f32.mrb[0].mxu0
      %2077 = vdwg.mxu0
      %v2078 = vadd.f32 %v2015, %v2072
      %v2079 = vadd.f32 %v2016, %v2075
      %s2080 = scalar_lea.vmem %s7, 64
      %v2081 = vld [vmem:[%s2080] sm:$0xf]
      %v2082 = vld [vmem:[%s2080 + $0x4] sm:$0xf]
      %v2083 = vld [vmem:[%s2080 + $0x8] sm:$0xf]
      %v2084 = vld [vmem:[%s2080 + $0xc] sm:$0xf]
      %v2089 = vunpack.c.l.b16 %v2081
      %v2090 = vunpack.c.l.b16 %v2082
      %v2091 = vunpack.c.l.b16 %v2083
      %v2092 = vunpack.c.l.b16 %v2084
      %v2093 = vpack.c.b16 %v2090, %v2089
      %v2094 = vpack.c.b16 %v2092, %v2091
      %v2098 = vsel %vm1853, %v1816, 0
      %2100 = vmatprep.subr.bf16.mxu0 0
      %2101 = vmatpush1.bf16.msra.mxu0 %v2093
      %2102 = vmatprep.subr.bf16.mxu0 0
      %2103 = vmatpush1.bf16.msra.mxu0 %v2094
      %2104 = vmatprep.subr.bf16.mxu0 0
      %2105 = vmatpush1.bf16.msra.mxu0 0
      %2106 = vmatprep.subr.bf16.mxu0 0
      %2107 = vmatpush1.bf16.msra.mxu0 0
      %2108 = vmatprep.subr.bf16.mxu0 0
      %2109 = vmatpush1.bf16.msra.mxu0 0
      %2110 = vmatprep.subr.bf16.mxu0 0
      %2111 = vmatpush1.bf16.msra.mxu0 0
      %2112 = vmatprep.subr.bf16.mxu0 0
      %2113 = vmatpush1.bf16.msra.mxu0 0
      %2114 = vmatprep.subr.bf16.mxu0 0
      %2115 = vmatpush1.bf16.msra.mxu0 0
      %2116 = vmatprep.subr.bf16.mxu0 0
      %2117 = vmatpush1.bf16.msra.mxu0 0
      %2118 = vmatprep.subr.bf16.mxu0 0
      %2119 = vmatpush1.bf16.msra.mxu0 0
      %2120 = vmatprep.subr.bf16.mxu0 0
      %2121 = vmatpush1.bf16.msra.mxu0 0
      %2122 = vmatprep.subr.bf16.mxu0 0
      %2123 = vmatpush1.bf16.msra.mxu0 0
      %2124 = vmatprep.subr.bf16.mxu0 0
      %2125 = vmatpush1.bf16.msra.mxu0 0
      %2126 = vmatprep.subr.bf16.mxu0 0
      %2127 = vmatpush1.bf16.msra.mxu0 0
      %2128 = vmatprep.subr.bf16.mxu0 0
      %2129 = vmatpush1.bf16.msra.mxu0 0
      %2130 = vmatprep.subr.bf16.mxu0 0
      %2131 = vmatpush1.bf16.msra.mxu0 0
      %2132 = vmatprep.mubr.bf16.mxu0 0
      %2133 = vmatmul.mubr.bf16.gmra.mrb[0].mxu0 %v2098
      %v2134 = vpop.f32.mrb[0].mxu0
      %v2135 = vadd.f32 0.0, %v2134
      %v2136 = vpop.f32.mrb[0].mxu0
      %v2137 = vpop.f32.mrb[0].mxu0
      %v2138 = vadd.f32 0.0, %v2137
      %v2139 = vpop.f32.mrb[0].mxu0
      %2140 = vdwg.mxu0
      %v2141 = vadd.f32 %v2078, %v2135
      %v2142 = vadd.f32 %v2079, %v2138
      %s2143 = scalar_lea.vmem %s7, 80
      %v2144 = vld [vmem:[%s2143] sm:$0xf]
      %v2145 = vld [vmem:[%s2143 + $0x4] sm:$0xf]
      %v2146 = vld [vmem:[%s2143 + $0x8] sm:$0xf]
      %v2147 = vld [vmem:[%s2143 + $0xc] sm:$0xf]
      %v2152 = vunpack.c.l.b16 %v2144
      %v2153 = vunpack.c.l.b16 %v2145
      %v2154 = vunpack.c.l.b16 %v2146
      %v2155 = vunpack.c.l.b16 %v2147
      %v2156 = vpack.c.b16 %v2153, %v2152
      %v2157 = vpack.c.b16 %v2155, %v2154
      %v2161 = vsel %vm1853, %v1817, 0
      %2163 = vmatprep.subr.bf16.mxu0 0
      %2164 = vmatpush1.bf16.msra.mxu0 %v2156
      %2165 = vmatprep.subr.bf16.mxu0 0
      %2166 = vmatpush1.bf16.msra.mxu0 %v2157
      %2167 = vmatprep.subr.bf16.mxu0 0
      %2168 = vmatpush1.bf16.msra.mxu0 0
      %2169 = vmatprep.subr.bf16.mxu0 0
      %2170 = vmatpush1.bf16.msra.mxu0 0
      %2171 = vmatprep.subr.bf16.mxu0 0
      %2172 = vmatpush1.bf16.msra.mxu0 0
      %2173 = vmatprep.subr.bf16.mxu0 0
      %2174 = vmatpush1.bf16.msra.mxu0 0
      %2175 = vmatprep.subr.bf16.mxu0 0
      %2176 = vmatpush1.bf16.msra.mxu0 0
      %2177 = vmatprep.subr.bf16.mxu0 0
      %2178 = vmatpush1.bf16.msra.mxu0 0
      %2179 = vmatprep.subr.bf16.mxu0 0
      %2180 = vmatpush1.bf16.msra.mxu0 0
      %2181 = vmatprep.subr.bf16.mxu0 0
      %2182 = vmatpush1.bf16.msra.mxu0 0
      %2183 = vmatprep.subr.bf16.mxu0 0
      %2184 = vmatpush1.bf16.msra.mxu0 0
      %2185 = vmatprep.subr.bf16.mxu0 0
      %2186 = vmatpush1.bf16.msra.mxu0 0
      %2187 = vmatprep.subr.bf16.mxu0 0
      %2188 = vmatpush1.bf16.msra.mxu0 0
      %2189 = vmatprep.subr.bf16.mxu0 0
      %2190 = vmatpush1.bf16.msra.mxu0 0
      %2191 = vmatprep.subr.bf16.mxu0 0
      %2192 = vmatpush1.bf16.msra.mxu0 0
      %2193 = vmatprep.subr.bf16.mxu0 0
      %2194 = vmatpush1.bf16.msra.mxu0 0
      %2195 = vmatprep.mubr.bf16.mxu0 0
      %2196 = vmatmul.mubr.bf16.gmra.mrb[0].mxu0 %v2161
      %v2197 = vpop.f32.mrb[0].mxu0
      %v2198 = vadd.f32 0.0, %v2197
      %v2199 = vpop.f32.mrb[0].mxu0
      %v2200 = vpop.f32.mrb[0].mxu0
      %v2201 = vadd.f32 0.0, %v2200
      %v2202 = vpop.f32.mrb[0].mxu0
      %2203 = vdwg.mxu0
      %v2204 = vadd.f32 %v2141, %v2198
      %v2205 = vadd.f32 %v2142, %v2201
      %s2206 = scalar_lea.vmem %s7, 96
      %v2207 = vld [vmem:[%s2206] sm:$0xf]
      %v2208 = vld [vmem:[%s2206 + $0x4] sm:$0xf]
      %v2209 = vld [vmem:[%s2206 + $0x8] sm:$0xf]
      %v2210 = vld [vmem:[%s2206 + $0xc] sm:$0xf]
      %v2215 = vunpack.c.l.b16 %v2207
      %v2216 = vunpack.c.l.b16 %v2208
      %v2217 = vunpack.c.l.b16 %v2209
      %v2218 = vunpack.c.l.b16 %v2210
      %v2219 = vpack.c.b16 %v2216, %v2215
      %v2220 = vpack.c.b16 %v2218, %v2217
      %v2224 = vsel %vm1853, %v1818, 0
      %2226 = vmatprep.subr.bf16.mxu0 0
      %2227 = vmatpush1.bf16.msra.mxu0 %v2219
      %2228 = vmatprep.subr.bf16.mxu0 0
      %2229 = vmatpush1.bf16.msra.mxu0 %v2220
      %2230 = vmatprep.subr.bf16.mxu0 0
      %2231 = vmatpush1.bf16.msra.mxu0 0
      %2232 = vmatprep.subr.bf16.mxu0 0
      %2233 = vmatpush1.bf16.msra.mxu0 0
      %2234 = vmatprep.subr.bf16.mxu0 0
      %2235 = vmatpush1.bf16.msra.mxu0 0
      %2236 = vmatprep.subr.bf16.mxu0 0
      %2237 = vmatpush1.bf16.msra.mxu0 0
      %2238 = vmatprep.subr.bf16.mxu0 0
      %2239 = vmatpush1.bf16.msra.mxu0 0
      %2240 = vmatprep.subr.bf16.mxu0 0
      %2241 = vmatpush1.bf16.msra.mxu0 0
      %2242 = vmatprep.subr.bf16.mxu0 0
      %2243 = vmatpush1.bf16.msra.mxu0 0
      %2244 = vmatprep.subr.bf16.mxu0 0
      %2245 = vmatpush1.bf16.msra.mxu0 0
      %2246 = vmatprep.subr.bf16.mxu0 0
      %2247 = vmatpush1.bf16.msra.mxu0 0
      %2248 = vmatprep.subr.bf16.mxu0 0
      %2249 = vmatpush1.bf16.msra.mxu0 0
      %2250 = vmatprep.subr.bf16.mxu0 0
      %2251 = vmatpush1.bf16.msra.mxu0 0
      %2252 = vmatprep.subr.bf16.mxu0 0
      %2253 = vmatpush1.bf16.msra.mxu0 0
      %2254 = vmatprep.subr.bf16.mxu0 0
      %2255 = vmatpush1.bf16.msra.mxu0 0
      %2256 = vmatprep.subr.bf16.mxu0 0
      %2257 = vmatpush1.bf16.msra.mxu0 0
      %2258 = vmatprep.mubr.bf16.mxu0 0
      %2259 = vmatmul.mubr.bf16.gmra.mrb[0].mxu0 %v2224
      %v2260 = vpop.f32.mrb[0].mxu0
      %v2261 = vadd.f32 0.0, %v2260
      %v2262 = vpop.f32.mrb[0].mxu0
      %v2263 = vpop.f32.mrb[0].mxu0
      %v2264 = vadd.f32 0.0, %v2263
      %v2265 = vpop.f32.mrb[0].mxu0
      %2266 = vdwg.mxu0
      %v2267 = vadd.f32 %v2204, %v2261
      %v2268 = vadd.f32 %v2205, %v2264
      %s2269 = scalar_lea.vmem %s7, 112
      %v2270 = vld [vmem:[%s2269] sm:$0xf]
      %v2271 = vld [vmem:[%s2269 + $0x4] sm:$0xf]
      %v2272 = vld [vmem:[%s2269 + $0x8] sm:$0xf]
      %v2273 = vld [vmem:[%s2269 + $0xc] sm:$0xf]
      %v2278 = vunpack.c.l.b16 %v2270
      %v2279 = vunpack.c.l.b16 %v2271
      %v2280 = vunpack.c.l.b16 %v2272
      %v2281 = vunpack.c.l.b16 %v2273
      %v2282 = vpack.c.b16 %v2279, %v2278
      %v2283 = vpack.c.b16 %v2281, %v2280
      %v2287 = vsel %vm1853, %v1819, 0
      %2289 = vmatprep.subr.bf16.mxu0 0
      %2290 = vmatpush1.bf16.msra.mxu0 %v2282
      %2291 = vmatprep.subr.bf16.mxu0 0
      %2292 = vmatpush1.bf16.msra.mxu0 %v2283
      %2293 = vmatprep.subr.bf16.mxu0 0
      %2294 = vmatpush1.bf16.msra.mxu0 0
      %2295 = vmatprep.subr.bf16.mxu0 0
      %2296 = vmatpush1.bf16.msra.mxu0 0
      %2297 = vmatprep.subr.bf16.mxu0 0
      %2298 = vmatpush1.bf16.msra.mxu0 0
      %2299 = vmatprep.subr.bf16.mxu0 0
      %2300 = vmatpush1.bf16.msra.mxu0 0
      %2301 = vmatprep.subr.bf16.mxu0 0
      %2302 = vmatpush1.bf16.msra.mxu0 0
      %2303 = vmatprep.subr.bf16.mxu0 0
      %2304 = vmatpush1.bf16.msra.mxu0 0
      %2305 = vmatprep.subr.bf16.mxu0 0
      %2306 = vmatpush1.bf16.msra.mxu0 0
      %2307 = vmatprep.subr.bf16.mxu0 0
      %2308 = vmatpush1.bf16.msra.mxu0 0
      %2309 = vmatprep.subr.bf16.mxu0 0
      %2310 = vmatpush1.bf16.msra.mxu0 0
      %2311 = vmatprep.subr.bf16.mxu0 0
      %2312 = vmatpush1.bf16.msra.mxu0 0
      %2313 = vmatprep.subr.bf16.mxu0 0
      %2314 = vmatpush1.bf16.msra.mxu0 0
      %2315 = vmatprep.subr.bf16.mxu0 0
      %2316 = vmatpush1.bf16.msra.mxu0 0
      %2317 = vmatprep.subr.bf16.mxu0 0
      %2318 = vmatpush1.bf16.msra.mxu0 0
      %2319 = vmatprep.subr.bf16.mxu0 0
      %2320 = vmatpush1.bf16.msra.mxu0 0
      %2321 = vmatprep.mubr.bf16.mxu0 0
      %2322 = vmatmul.mubr.bf16.gmra.mrb[0].mxu0 %v2287
      %v2323 = vpop.f32.mrb[0].mxu0
      %v2324 = vadd.f32 0.0, %v2323
      %v2325 = vpop.f32.mrb[0].mxu0
      %v2326 = vpop.f32.mrb[0].mxu0
      %v2327 = vadd.f32 0.0, %v2326
      %v2328 = vpop.f32.mrb[0].mxu0
      %2329 = vdwg.mxu0
      %v2330 = vadd.f32 %v2267, %v2324
      %v2331 = vadd.f32 %v2268, %v2327
      %s2332 = scalar_lea.vmem %s7, 128
      %v2333 = vld [vmem:[%s2332] sm:$0xf]
      %v2334 = vld [vmem:[%s2332 + $0x4] sm:$0xf]
      %v2335 = vld [vmem:[%s2332 + $0x8] sm:$0xf]
      %v2336 = vld [vmem:[%s2332 + $0xc] sm:$0xf]
      %v2341 = vunpack.c.l.b16 %v2333
      %v2342 = vunpack.c.l.b16 %v2334
      %v2343 = vunpack.c.l.b16 %v2335
      %v2344 = vunpack.c.l.b16 %v2336
      %v2345 = vpack.c.b16 %v2342, %v2341
      %v2346 = vpack.c.b16 %v2344, %v2343
      %v2350 = vsel %vm1853, %v1820, 0
      %2352 = vmatprep.subr.bf16.mxu0 0
      %2353 = vmatpush1.bf16.msra.mxu0 %v2345
      %2354 = vmatprep.subr.bf16.mxu0 0
      %2355 = vmatpush1.bf16.msra.mxu0 %v2346
      %2356 = vmatprep.subr.bf16.mxu0 0
      %2357 = vmatpush1.bf16.msra.mxu0 0
      %2358 = vmatprep.subr.bf16.mxu0 0
      %2359 = vmatpush1.bf16.msra.mxu0 0
      %2360 = vmatprep.subr.bf16.mxu0 0
      %2361 = vmatpush1.bf16.msra.mxu0 0
      %2362 = vmatprep.subr.bf16.mxu0 0
      %2363 = vmatpush1.bf16.msra.mxu0 0
      %2364 = vmatprep.subr.bf16.mxu0 0
      %2365 = vmatpush1.bf16.msra.mxu0 0
      %2366 = vmatprep.subr.bf16.mxu0 0
      %2367 = vmatpush1.bf16.msra.mxu0 0
      %2368 = vmatprep.subr.bf16.mxu0 0
      %2369 = vmatpush1.bf16.msra.mxu0 0
      %2370 = vmatprep.subr.bf16.mxu0 0
      %2371 = vmatpush1.bf16.msra.mxu0 0
      %2372 = vmatprep.subr.bf16.mxu0 0
      %2373 = vmatpush1.bf16.msra.mxu0 0
      %2374 = vmatprep.subr.bf16.mxu0 0
      %2375 = vmatpush1.bf16.msra.mxu0 0
      %2376 = vmatprep.subr.bf16.mxu0 0
      %2377 = vmatpush1.bf16.msra.mxu0 0
      %2378 = vmatprep.subr.bf16.mxu0 0
      %2379 = vmatpush1.bf16.msra.mxu0 0
      %2380 = vmatprep.subr.bf16.mxu0 0
      %2381 = vmatpush1.bf16.msra.mxu0 0
      %2382 = vmatprep.subr.bf16.mxu0 0
      %2383 = vmatpush1.bf16.msra.mxu0 0
      %2384 = vmatprep.mubr.bf16.mxu0 0
      %2385 = vmatmul.mubr.bf16.gmra.mrb[0].mxu0 %v2350
      %v2386 = vpop.f32.mrb[0].mxu0
      %v2387 = vadd.f32 0.0, %v2386
      %v2388 = vpop.f32.mrb[0].mxu0
      %v2389 = vpop.f32.mrb[0].mxu0
      %v2390 = vadd.f32 0.0, %v2389
      %v2391 = vpop.f32.mrb[0].mxu0
      %2392 = vdwg.mxu0
      %v2393 = vadd.f32 %v2330, %v2387
      %v2394 = vadd.f32 %v2331, %v2390
      %s2395 = scalar_lea.vmem %s7, 144
      %v2396 = vld [vmem:[%s2395] sm:$0xf]
      %v2397 = vld [vmem:[%s2395 + $0x4] sm:$0xf]
      %v2398 = vld [vmem:[%s2395 + $0x8] sm:$0xf]
      %v2399 = vld [vmem:[%s2395 + $0xc] sm:$0xf]
      %v2404 = vunpack.c.l.b16 %v2396
      %v2405 = vunpack.c.l.b16 %v2397
      %v2406 = vunpack.c.l.b16 %v2398
      %v2407 = vunpack.c.l.b16 %v2399
      %v2408 = vpack.c.b16 %v2405, %v2404
      %v2409 = vpack.c.b16 %v2407, %v2406
      %v2413 = vsel %vm1853, %v1821, 0
      %2415 = vmatprep.subr.bf16.mxu0 0
      %2416 = vmatpush1.bf16.msra.mxu0 %v2408
      %2417 = vmatprep.subr.bf16.mxu0 0
      %2418 = vmatpush1.bf16.msra.mxu0 %v2409
      %2419 = vmatprep.subr.bf16.mxu0 0
      %2420 = vmatpush1.bf16.msra.mxu0 0
      %2421 = vmatprep.subr.bf16.mxu0 0
      %2422 = vmatpush1.bf16.msra.mxu0 0
      %2423 = vmatprep.subr.bf16.mxu0 0
      %2424 = vmatpush1.bf16.msra.mxu0 0
      %2425 = vmatprep.subr.bf16.mxu0 0
      %2426 = vmatpush1.bf16.msra.mxu0 0
      %2427 = vmatprep.subr.bf16.mxu0 0
      %2428 = vmatpush1.bf16.msra.mxu0 0
      %2429 = vmatprep.subr.bf16.mxu0 0
      %2430 = vmatpush1.bf16.msra.mxu0 0
      %2431 = vmatprep.subr.bf16.mxu0 0
      %2432 = vmatpush1.bf16.msra.mxu0 0
      %2433 = vmatprep.subr.bf16.mxu0 0
      %2434 = vmatpush1.bf16.msra.mxu0 0
      %2435 = vmatprep.subr.bf16.mxu0 0
      %2436 = vmatpush1.bf16.msra.mxu0 0
      %2437 = vmatprep.subr.bf16.mxu0 0
      %2438 = vmatpush1.bf16.msra.mxu0 0
      %2439 = vmatprep.subr.bf16.mxu0 0
      %2440 = vmatpush1.bf16.msra.mxu0 0
      %2441 = vmatprep.subr.bf16.mxu0 0
      %2442 = vmatpush1.bf16.msra.mxu0 0
      %2443 = vmatprep.subr.bf16.mxu0 0
      %2444 = vmatpush1.bf16.msra.mxu0 0
      %2445 = vmatprep.subr.bf16.mxu0 0
      %2446 = vmatpush1.bf16.msra.mxu0 0
      %2447 = vmatprep.mubr.bf16.mxu0 0
      %2448 = vmatmul.mubr.bf16.gmra.mrb[0].mxu0 %v2413
      %v2449 = vpop.f32.mrb[0].mxu0
      %v2450 = vadd.f32 0.0, %v2449
      %v2451 = vpop.f32.mrb[0].mxu0
      %v2452 = vpop.f32.mrb[0].mxu0
      %v2453 = vadd.f32 0.0, %v2452
      %v2454 = vpop.f32.mrb[0].mxu0
      %2455 = vdwg.mxu0
      %v2456 = vadd.f32 %v2393, %v2450
      %v2457 = vadd.f32 %v2394, %v2453
      %s2458 = scalar_lea.vmem %s7, 160
      %v2459 = vld [vmem:[%s2458] sm:$0xf]
      %v2460 = vld [vmem:[%s2458 + $0x4] sm:$0xf]
      %v2461 = vld [vmem:[%s2458 + $0x8] sm:$0xf]
      %v2462 = vld [vmem:[%s2458 + $0xc] sm:$0xf]
      %v2467 = vunpack.c.l.b16 %v2459
      %v2468 = vunpack.c.l.b16 %v2460
      %v2469 = vunpack.c.l.b16 %v2461
      %v2470 = vunpack.c.l.b16 %v2462
      %v2471 = vpack.c.b16 %v2468, %v2467
      %v2472 = vpack.c.b16 %v2470, %v2469
      %v2476 = vsel %vm1853, %v1822, 0
      %2478 = vmatprep.subr.bf16.mxu0 0
      %2479 = vmatpush1.bf16.msra.mxu0 %v2471
      %2480 = vmatprep.subr.bf16.mxu0 0
      %2481 = vmatpush1.bf16.msra.mxu0 %v2472
      %2482 = vmatprep.subr.bf16.mxu0 0
      %2483 = vmatpush1.bf16.msra.mxu0 0
      %2484 = vmatprep.subr.bf16.mxu0 0
      %2485 = vmatpush1.bf16.msra.mxu0 0
      %2486 = vmatprep.subr.bf16.mxu0 0
      %2487 = vmatpush1.bf16.msra.mxu0 0
      %2488 = vmatprep.subr.bf16.mxu0 0
      %2489 = vmatpush1.bf16.msra.mxu0 0
      %2490 = vmatprep.subr.bf16.mxu0 0
      %2491 = vmatpush1.bf16.msra.mxu0 0
      %2492 = vmatprep.subr.bf16.mxu0 0
      %2493 = vmatpush1.bf16.msra.mxu0 0
      %2494 = vmatprep.subr.bf16.mxu0 0
      %2495 = vmatpush1.bf16.msra.mxu0 0
      %2496 = vmatprep.subr.bf16.mxu0 0
      %2497 = vmatpush1.bf16.msra.mxu0 0
      %2498 = vmatprep.subr.bf16.mxu0 0
      %2499 = vmatpush1.bf16.msra.mxu0 0
      %2500 = vmatprep.subr.bf16.mxu0 0
      %2501 = vmatpush1.bf16.msra.mxu0 0
      %2502 = vmatprep.subr.bf16.mxu0 0
      %2503 = vmatpush1.bf16.msra.mxu0 0
      %2504 = vmatprep.subr.bf16.mxu0 0
      %2505 = vmatpush1.bf16.msra.mxu0 0
      %2506 = vmatprep.subr.bf16.mxu0 0
      %2507 = vmatpush1.bf16.msra.mxu0 0
      %2508 = vmatprep.subr.bf16.mxu0 0
      %2509 = vmatpush1.bf16.msra.mxu0 0
      %2510 = vmatprep.mubr.bf16.mxu0 0
      %2511 = vmatmul.mubr.bf16.gmra.mrb[0].mxu0 %v2476
      %v2512 = vpop.f32.mrb[0].mxu0
      %v2513 = vadd.f32 0.0, %v2512
      %v2514 = vpop.f32.mrb[0].mxu0
      %v2515 = vpop.f32.mrb[0].mxu0
      %v2516 = vadd.f32 0.0, %v2515
      %v2517 = vpop.f32.mrb[0].mxu0
      %2518 = vdwg.mxu0
      %v2519 = vadd.f32 %v2456, %v2513
      %v2520 = vadd.f32 %v2457, %v2516
      %s2521 = scalar_lea.vmem %s7, 176
      %v2522 = vld [vmem:[%s2521] sm:$0xf]
      %v2523 = vld [vmem:[%s2521 + $0x4] sm:$0xf]
      %v2524 = vld [vmem:[%s2521 + $0x8] sm:$0xf]
      %v2525 = vld [vmem:[%s2521 + $0xc] sm:$0xf]
      %v2530 = vunpack.c.l.b16 %v2522
      %v2531 = vunpack.c.l.b16 %v2523
      %v2532 = vunpack.c.l.b16 %v2524
      %v2533 = vunpack.c.l.b16 %v2525
      %v2534 = vpack.c.b16 %v2531, %v2530
      %v2535 = vpack.c.b16 %v2533, %v2532
      %v2539 = vsel %vm1853, %v1823, 0
      %2541 = vmatprep.subr.bf16.mxu0 0
      %2542 = vmatpush1.bf16.msra.mxu0 %v2534
      %2543 = vmatprep.subr.bf16.mxu0 0
      %2544 = vmatpush1.bf16.msra.mxu0 %v2535
      %2545 = vmatprep.subr.bf16.mxu0 0
      %2546 = vmatpush1.bf16.msra.mxu0 0
      %2547 = vmatprep.subr.bf16.mxu0 0
      %2548 = vmatpush1.bf16.msra.mxu0 0
      %2549 = vmatprep.subr.bf16.mxu0 0
      %2550 = vmatpush1.bf16.msra.mxu0 0
      %2551 = vmatprep.subr.bf16.mxu0 0
      %2552 = vmatpush1.bf16.msra.mxu0 0
      %2553 = vmatprep.subr.bf16.mxu0 0
      %2554 = vmatpush1.bf16.msra.mxu0 0
      %2555 = vmatprep.subr.bf16.mxu0 0
      %2556 = vmatpush1.bf16.msra.mxu0 0
      %2557 = vmatprep.subr.bf16.mxu0 0
      %2558 = vmatpush1.bf16.msra.mxu0 0
      %2559 = vmatprep.subr.bf16.mxu0 0
      %2560 = vmatpush1.bf16.msra.mxu0 0
      %2561 = vmatprep.subr.bf16.mxu0 0
      %2562 = vmatpush1.bf16.msra.mxu0 0
      %2563 = vmatprep.subr.bf16.mxu0 0
      %2564 = vmatpush1.bf16.msra.mxu0 0
      %2565 = vmatprep.subr.bf16.mxu0 0
      %2566 = vmatpush1.bf16.msra.mxu0 0
      %2567 = vmatprep.subr.bf16.mxu0 0
      %2568 = vmatpush1.bf16.msra.mxu0 0
      %2569 = vmatprep.subr.bf16.mxu0 0
      %2570 = vmatpush1.bf16.msra.mxu0 0
      %2571 = vmatprep.subr.bf16.mxu0 0
      %2572 = vmatpush1.bf16.msra.mxu0 0
      %2573 = vmatprep.mubr.bf16.mxu0 0
      %2574 = vmatmul.mubr.bf16.gmra.mrb[0].mxu0 %v2539
      %v2575 = vpop.f32.mrb[0].mxu0
      %v2576 = vadd.f32 0.0, %v2575
      %v2577 = vpop.f32.mrb[0].mxu0
      %v2578 = vpop.f32.mrb[0].mxu0
      %v2579 = vadd.f32 0.0, %v2578
      %v2580 = vpop.f32.mrb[0].mxu0
      %2581 = vdwg.mxu0
      %v2582 = vadd.f32 %v2519, %v2576
      %v2583 = vadd.f32 %v2520, %v2579
      %s2584 = scalar_lea.vmem %s7, 192
      %v2585 = vld [vmem:[%s2584] sm:$0xf]
      %v2586 = vld [vmem:[%s2584 + $0x4] sm:$0xf]
      %v2587 = vld [vmem:[%s2584 + $0x8] sm:$0xf]
      %v2588 = vld [vmem:[%s2584 + $0xc] sm:$0xf]
      %v2593 = vunpack.c.l.b16 %v2585
      %v2594 = vunpack.c.l.b16 %v2586
      %v2595 = vunpack.c.l.b16 %v2587
      %v2596 = vunpack.c.l.b16 %v2588
      %v2597 = vpack.c.b16 %v2594, %v2593
      %v2598 = vpack.c.b16 %v2596, %v2595
      %v2602 = vsel %vm1853, %v1824, 0
      %2604 = vmatprep.subr.bf16.mxu0 0
      %2605 = vmatpush1.bf16.msra.mxu0 %v2597
      %2606 = vmatprep.subr.bf16.mxu0 0
      %2607 = vmatpush1.bf16.msra.mxu0 %v2598
      %2608 = vmatprep.subr.bf16.mxu0 0
      %2609 = vmatpush1.bf16.msra.mxu0 0
      %2610 = vmatprep.subr.bf16.mxu0 0
      %2611 = vmatpush1.bf16.msra.mxu0 0
      %2612 = vmatprep.subr.bf16.mxu0 0
      %2613 = vmatpush1.bf16.msra.mxu0 0
      %2614 = vmatprep.subr.bf16.mxu0 0
      %2615 = vmatpush1.bf16.msra.mxu0 0
      %2616 = vmatprep.subr.bf16.mxu0 0
      %2617 = vmatpush1.bf16.msra.mxu0 0
      %2618 = vmatprep.subr.bf16.mxu0 0
      %2619 = vmatpush1.bf16.msra.mxu0 0
      %2620 = vmatprep.subr.bf16.mxu0 0
      %2621 = vmatpush1.bf16.msra.mxu0 0
      %2622 = vmatprep.subr.bf16.mxu0 0
      %2623 = vmatpush1.bf16.msra.mxu0 0
      %2624 = vmatprep.subr.bf16.mxu0 0
      %2625 = vmatpush1.bf16.msra.mxu0 0
      %2626 = vmatprep.subr.bf16.mxu0 0
      %2627 = vmatpush1.bf16.msra.mxu0 0
      %2628 = vmatprep.subr.bf16.mxu0 0
      %2629 = vmatpush1.bf16.msra.mxu0 0
      %2630 = vmatprep.subr.bf16.mxu0 0
      %2631 = vmatpush1.bf16.msra.mxu0 0
      %2632 = vmatprep.subr.bf16.mxu0 0
      %2633 = vmatpush1.bf16.msra.mxu0 0
      %2634 = vmatprep.subr.bf16.mxu0 0
      %2635 = vmatpush1.bf16.msra.mxu0 0
      %2636 = vmatprep.mubr.bf16.mxu0 0
      %2637 = vmatmul.mubr.bf16.gmra.mrb[0].mxu0 %v2602
      %v2638 = vpop.f32.mrb[0].mxu0
      %v2639 = vadd.f32 0.0, %v2638
      %v2640 = vpop.f32.mrb[0].mxu0
      %v2641 = vpop.f32.mrb[0].mxu0
      %v2642 = vadd.f32 0.0, %v2641
      %v2643 = vpop.f32.mrb[0].mxu0
      %2644 = vdwg.mxu0
      %v2645 = vadd.f32 %v2582, %v2639
      %v2646 = vadd.f32 %v2583, %v2642
      %s2647 = scalar_lea.vmem %s7, 208
      %v2648 = vld [vmem:[%s2647] sm:$0xf]
      %v2649 = vld [vmem:[%s2647 + $0x4] sm:$0xf]
      %v2650 = vld [vmem:[%s2647 + $0x8] sm:$0xf]
      %v2651 = vld [vmem:[%s2647 + $0xc] sm:$0xf]
      %v2656 = vunpack.c.l.b16 %v2648
      %v2657 = vunpack.c.l.b16 %v2649
      %v2658 = vunpack.c.l.b16 %v2650
      %v2659 = vunpack.c.l.b16 %v2651
      %v2660 = vpack.c.b16 %v2657, %v2656
      %v2661 = vpack.c.b16 %v2659, %v2658
      %v2665 = vsel %vm1853, %v1825, 0
      %2667 = vmatprep.subr.bf16.mxu0 0
      %2668 = vmatpush1.bf16.msra.mxu0 %v2660
      %2669 = vmatprep.subr.bf16.mxu0 0
      %2670 = vmatpush1.bf16.msra.mxu0 %v2661
      %2671 = vmatprep.subr.bf16.mxu0 0
      %2672 = vmatpush1.bf16.msra.mxu0 0
      %2673 = vmatprep.subr.bf16.mxu0 0
      %2674 = vmatpush1.bf16.msra.mxu0 0
      %2675 = vmatprep.subr.bf16.mxu0 0
      %2676 = vmatpush1.bf16.msra.mxu0 0
      %2677 = vmatprep.subr.bf16.mxu0 0
      %2678 = vmatpush1.bf16.msra.mxu0 0
      %2679 = vmatprep.subr.bf16.mxu0 0
      %2680 = vmatpush1.bf16.msra.mxu0 0
      %2681 = vmatprep.subr.bf16.mxu0 0
      %2682 = vmatpush1.bf16.msra.mxu0 0
      %2683 = vmatprep.subr.bf16.mxu0 0
      %2684 = vmatpush1.bf16.msra.mxu0 0
      %2685 = vmatprep.subr.bf16.mxu0 0
      %2686 = vmatpush1.bf16.msra.mxu0 0
      %2687 = vmatprep.subr.bf16.mxu0 0
      %2688 = vmatpush1.bf16.msra.mxu0 0
      %2689 = vmatprep.subr.bf16.mxu0 0
      %2690 = vmatpush1.bf16.msra.mxu0 0
      %2691 = vmatprep.subr.bf16.mxu0 0
      %2692 = vmatpush1.bf16.msra.mxu0 0
      %2693 = vmatprep.subr.bf16.mxu0 0
      %2694 = vmatpush1.bf16.msra.mxu0 0
      %2695 = vmatprep.subr.bf16.mxu0 0
      %2696 = vmatpush1.bf16.msra.mxu0 0
      %2697 = vmatprep.subr.bf16.mxu0 0
      %2698 = vmatpush1.bf16.msra.mxu0 0
      %2699 = vmatprep.mubr.bf16.mxu0 0
      %2700 = vmatmul.mubr.bf16.gmra.mrb[0].mxu0 %v2665
      %v2701 = vpop.f32.mrb[0].mxu0
      %v2702 = vadd.f32 0.0, %v2701
      %v2703 = vpop.f32.mrb[0].mxu0
      %v2704 = vpop.f32.mrb[0].mxu0
      %v2705 = vadd.f32 0.0, %v2704
      %v2706 = vpop.f32.mrb[0].mxu0
      %2707 = vdwg.mxu0
      %v2708 = vadd.f32 %v2645, %v2702
      %v2709 = vadd.f32 %v2646, %v2705
      %s2710 = scalar_lea.vmem %s7, 224
      %v2711 = vld [vmem:[%s2710] sm:$0xf]
      %v2712 = vld [vmem:[%s2710 + $0x4] sm:$0xf]
      %v2713 = vld [vmem:[%s2710 + $0x8] sm:$0xf]
      %v2714 = vld [vmem:[%s2710 + $0xc] sm:$0xf]
      %v2719 = vunpack.c.l.b16 %v2711
      %v2720 = vunpack.c.l.b16 %v2712
      %v2721 = vunpack.c.l.b16 %v2713
      %v2722 = vunpack.c.l.b16 %v2714
      %v2723 = vpack.c.b16 %v2720, %v2719
      %v2724 = vpack.c.b16 %v2722, %v2721
      %v2728 = vsel %vm1853, %v1826, 0
      %2730 = vmatprep.subr.bf16.mxu0 0
      %2731 = vmatpush1.bf16.msra.mxu0 %v2723
      %2732 = vmatprep.subr.bf16.mxu0 0
      %2733 = vmatpush1.bf16.msra.mxu0 %v2724
      %2734 = vmatprep.subr.bf16.mxu0 0
      %2735 = vmatpush1.bf16.msra.mxu0 0
      %2736 = vmatprep.subr.bf16.mxu0 0
      %2737 = vmatpush1.bf16.msra.mxu0 0
      %2738 = vmatprep.subr.bf16.mxu0 0
      %2739 = vmatpush1.bf16.msra.mxu0 0
      %2740 = vmatprep.subr.bf16.mxu0 0
      %2741 = vmatpush1.bf16.msra.mxu0 0
      %2742 = vmatprep.subr.bf16.mxu0 0
      %2743 = vmatpush1.bf16.msra.mxu0 0
      %2744 = vmatprep.subr.bf16.mxu0 0
      %2745 = vmatpush1.bf16.msra.mxu0 0
      %2746 = vmatprep.subr.bf16.mxu0 0
      %2747 = vmatpush1.bf16.msra.mxu0 0
      %2748 = vmatprep.subr.bf16.mxu0 0
      %2749 = vmatpush1.bf16.msra.mxu0 0
      %2750 = vmatprep.subr.bf16.mxu0 0
      %2751 = vmatpush1.bf16.msra.mxu0 0
      %2752 = vmatprep.subr.bf16.mxu0 0
      %2753 = vmatpush1.bf16.msra.mxu0 0
      %2754 = vmatprep.subr.bf16.mxu0 0
      %2755 = vmatpush1.bf16.msra.mxu0 0
      %2756 = vmatprep.subr.bf16.mxu0 0
      %2757 = vmatpush1.bf16.msra.mxu0 0
      %2758 = vmatprep.subr.bf16.mxu0 0
      %2759 = vmatpush1.bf16.msra.mxu0 0
      %2760 = vmatprep.subr.bf16.mxu0 0
      %2761 = vmatpush1.bf16.msra.mxu0 0
      %2762 = vmatprep.mubr.bf16.mxu0 0
      %2763 = vmatmul.mubr.bf16.gmra.mrb[0].mxu0 %v2728
      %v2764 = vpop.f32.mrb[0].mxu0
      %v2765 = vadd.f32 0.0, %v2764
      %v2766 = vpop.f32.mrb[0].mxu0
      %v2767 = vpop.f32.mrb[0].mxu0
      %v2768 = vadd.f32 0.0, %v2767
      %v2769 = vpop.f32.mrb[0].mxu0
      %2770 = vdwg.mxu0
      %v2771 = vadd.f32 %v2708, %v2765
      %v2772 = vadd.f32 %v2709, %v2768
      %s2773 = scalar_lea.vmem %s7, 240
      %v2774 = vld [vmem:[%s2773] sm:$0xf]
      %v2775 = vld [vmem:[%s2773 + $0x4] sm:$0xf]
      %v2776 = vld [vmem:[%s2773 + $0x8] sm:$0xf]
      %v2777 = vld [vmem:[%s2773 + $0xc] sm:$0xf]
      %v2782 = vunpack.c.l.b16 %v2774
      %v2783 = vunpack.c.l.b16 %v2775
      %v2784 = vunpack.c.l.b16 %v2776
      %v2785 = vunpack.c.l.b16 %v2777
      %v2786 = vpack.c.b16 %v2783, %v2782
      %v2787 = vpack.c.b16 %v2785, %v2784
      %v2791 = vsel %vm1853, %v1827, 0
      %2793 = vmatprep.subr.bf16.mxu0 0
      %2794 = vmatpush1.bf16.msra.mxu0 %v2786
      %2795 = vmatprep.subr.bf16.mxu0 0
      %2796 = vmatpush1.bf16.msra.mxu0 %v2787
      %2797 = vmatprep.subr.bf16.mxu0 0
      %2798 = vmatpush1.bf16.msra.mxu0 0
      %2799 = vmatprep.subr.bf16.mxu0 0
      %2800 = vmatpush1.bf16.msra.mxu0 0
      %2801 = vmatprep.subr.bf16.mxu0 0
      %2802 = vmatpush1.bf16.msra.mxu0 0
      %2803 = vmatprep.subr.bf16.mxu0 0
      %2804 = vmatpush1.bf16.msra.mxu0 0
      %2805 = vmatprep.subr.bf16.mxu0 0
      %2806 = vmatpush1.bf16.msra.mxu0 0
      %2807 = vmatprep.subr.bf16.mxu0 0
      %2808 = vmatpush1.bf16.msra.mxu0 0
      %2809 = vmatprep.subr.bf16.mxu0 0
      %2810 = vmatpush1.bf16.msra.mxu0 0
      %2811 = vmatprep.subr.bf16.mxu0 0
      %2812 = vmatpush1.bf16.msra.mxu0 0
      %2813 = vmatprep.subr.bf16.mxu0 0
      %2814 = vmatpush1.bf16.msra.mxu0 0
      %2815 = vmatprep.subr.bf16.mxu0 0
      %2816 = vmatpush1.bf16.msra.mxu0 0
      %2817 = vmatprep.subr.bf16.mxu0 0
      %2818 = vmatpush1.bf16.msra.mxu0 0
      %2819 = vmatprep.subr.bf16.mxu0 0
      %2820 = vmatpush1.bf16.msra.mxu0 0
      %2821 = vmatprep.subr.bf16.mxu0 0
      %2822 = vmatpush1.bf16.msra.mxu0 0
      %2823 = vmatprep.subr.bf16.mxu0 0
      %2824 = vmatpush1.bf16.msra.mxu0 0
      %2825 = vmatprep.mubr.bf16.mxu0 0
      %2826 = vmatmul.mubr.bf16.gmra.mrb[0].mxu0 %v2791
      %v2827 = vpop.f32.mrb[0].mxu0
      %v2828 = vadd.f32 0.0, %v2827
      %v2829 = vpop.f32.mrb[0].mxu0
      %v2830 = vpop.f32.mrb[0].mxu0
      %v2831 = vadd.f32 0.0, %v2830
      %v2832 = vpop.f32.mrb[0].mxu0
      %2833 = vdwg.mxu0
      %v2834 = vadd.f32 %v2771, %v2828
      %v2835 = vadd.f32 %v2772, %v2831
      %s2836 = scalar_lea.vmem %s7, 256
      %v2837 = vld [vmem:[%s2836] sm:$0xf]
      %v2838 = vld [vmem:[%s2836 + $0x4] sm:$0xf]
      %v2839 = vld [vmem:[%s2836 + $0x8] sm:$0xf]
      %v2840 = vld [vmem:[%s2836 + $0xc] sm:$0xf]
      %v2845 = vunpack.c.l.b16 %v2837
      %v2846 = vunpack.c.l.b16 %v2838
      %v2847 = vunpack.c.l.b16 %v2839
      %v2848 = vunpack.c.l.b16 %v2840
      %v2849 = vpack.c.b16 %v2846, %v2845
      %v2850 = vpack.c.b16 %v2848, %v2847
      %v2854 = vsel %vm1853, %v1828, 0
      %2856 = vmatprep.subr.bf16.mxu0 0
      %2857 = vmatpush1.bf16.msra.mxu0 %v2849
      %2858 = vmatprep.subr.bf16.mxu0 0
      %2859 = vmatpush1.bf16.msra.mxu0 %v2850
      %2860 = vmatprep.subr.bf16.mxu0 0
      %2861 = vmatpush1.bf16.msra.mxu0 0
      %2862 = vmatprep.subr.bf16.mxu0 0
      %2863 = vmatpush1.bf16.msra.mxu0 0
      %2864 = vmatprep.subr.bf16.mxu0 0
      %2865 = vmatpush1.bf16.msra.mxu0 0
      %2866 = vmatprep.subr.bf16.mxu0 0
      %2867 = vmatpush1.bf16.msra.mxu0 0
      %2868 = vmatprep.subr.bf16.mxu0 0
      %2869 = vmatpush1.bf16.msra.mxu0 0
      %2870 = vmatprep.subr.bf16.mxu0 0
      %2871 = vmatpush1.bf16.msra.mxu0 0
      %2872 = vmatprep.subr.bf16.mxu0 0
      %2873 = vmatpush1.bf16.msra.mxu0 0
      %2874 = vmatprep.subr.bf16.mxu0 0
      %2875 = vmatpush1.bf16.msra.mxu0 0
      %2876 = vmatprep.subr.bf16.mxu0 0
      %2877 = vmatpush1.bf16.msra.mxu0 0
      %2878 = vmatprep.subr.bf16.mxu0 0
      %2879 = vmatpush1.bf16.msra.mxu0 0
      %2880 = vmatprep.subr.bf16.mxu0 0
      %2881 = vmatpush1.bf16.msra.mxu0 0
      %2882 = vmatprep.subr.bf16.mxu0 0
      %2883 = vmatpush1.bf16.msra.mxu0 0
      %2884 = vmatprep.subr.bf16.mxu0 0
      %2885 = vmatpush1.bf16.msra.mxu0 0
      %2886 = vmatprep.subr.bf16.mxu0 0
      %2887 = vmatpush1.bf16.msra.mxu0 0
      %2888 = vmatprep.mubr.bf16.mxu0 0
      %2889 = vmatmul.mubr.bf16.gmra.mrb[0].mxu0 %v2854
      %v2890 = vpop.f32.mrb[0].mxu0
      %v2891 = vadd.f32 0.0, %v2890
      %v2892 = vpop.f32.mrb[0].mxu0
      %v2893 = vpop.f32.mrb[0].mxu0
      %v2894 = vadd.f32 0.0, %v2893
      %v2895 = vpop.f32.mrb[0].mxu0
      %2896 = vdwg.mxu0
      %v2897 = vadd.f32 %v2834, %v2891
      %v2898 = vadd.f32 %v2835, %v2894
      %s2899 = scalar_lea.vmem %s7, 272
      %v2900 = vld [vmem:[%s2899] sm:$0xf]
      %v2901 = vld [vmem:[%s2899 + $0x4] sm:$0xf]
      %v2902 = vld [vmem:[%s2899 + $0x8] sm:$0xf]
      %v2903 = vld [vmem:[%s2899 + $0xc] sm:$0xf]
      %v2908 = vunpack.c.l.b16 %v2900
      %v2909 = vunpack.c.l.b16 %v2901
      %v2910 = vunpack.c.l.b16 %v2902
      %v2911 = vunpack.c.l.b16 %v2903
      %v2912 = vpack.c.b16 %v2909, %v2908
      %v2913 = vpack.c.b16 %v2911, %v2910
      %v2917 = vsel %vm1853, %v1829, 0
      %2919 = vmatprep.subr.bf16.mxu0 0
      %2920 = vmatpush1.bf16.msra.mxu0 %v2912
      %2921 = vmatprep.subr.bf16.mxu0 0
      %2922 = vmatpush1.bf16.msra.mxu0 %v2913
      %2923 = vmatprep.subr.bf16.mxu0 0
      %2924 = vmatpush1.bf16.msra.mxu0 0
      %2925 = vmatprep.subr.bf16.mxu0 0
      %2926 = vmatpush1.bf16.msra.mxu0 0
      %2927 = vmatprep.subr.bf16.mxu0 0
      %2928 = vmatpush1.bf16.msra.mxu0 0
      %2929 = vmatprep.subr.bf16.mxu0 0
      %2930 = vmatpush1.bf16.msra.mxu0 0
      %2931 = vmatprep.subr.bf16.mxu0 0
      %2932 = vmatpush1.bf16.msra.mxu0 0
      %2933 = vmatprep.subr.bf16.mxu0 0
      %2934 = vmatpush1.bf16.msra.mxu0 0
      %2935 = vmatprep.subr.bf16.mxu0 0
      %2936 = vmatpush1.bf16.msra.mxu0 0
      %2937 = vmatprep.subr.bf16.mxu0 0
      %2938 = vmatpush1.bf16.msra.mxu0 0
      %2939 = vmatprep.subr.bf16.mxu0 0
      %2940 = vmatpush1.bf16.msra.mxu0 0
      %2941 = vmatprep.subr.bf16.mxu0 0
      %2942 = vmatpush1.bf16.msra.mxu0 0
      %2943 = vmatprep.subr.bf16.mxu0 0
      %2944 = vmatpush1.bf16.msra.mxu0 0
      %2945 = vmatprep.subr.bf16.mxu0 0
      %2946 = vmatpush1.bf16.msra.mxu0 0
      %2947 = vmatprep.subr.bf16.mxu0 0
      %2948 = vmatpush1.bf16.msra.mxu0 0
      %2949 = vmatprep.subr.bf16.mxu0 0
      %2950 = vmatpush1.bf16.msra.mxu0 0
      %2951 = vmatprep.mubr.bf16.mxu0 0
      %2952 = vmatmul.mubr.bf16.gmra.mrb[0].mxu0 %v2917
      %v2953 = vpop.f32.mrb[0].mxu0
      %v2954 = vadd.f32 0.0, %v2953
      %v2955 = vpop.f32.mrb[0].mxu0
      %v2956 = vpop.f32.mrb[0].mxu0
      %v2957 = vadd.f32 0.0, %v2956
      %v2958 = vpop.f32.mrb[0].mxu0
      %2959 = vdwg.mxu0
      %v2960 = vadd.f32 %v2897, %v2954
      %v2961 = vadd.f32 %v2898, %v2957
      %s2962 = scalar_lea.vmem %s7, 288
      %v2963 = vld [vmem:[%s2962] sm:$0xf]
      %v2964 = vld [vmem:[%s2962 + $0x4] sm:$0xf]
      %v2965 = vld [vmem:[%s2962 + $0x8] sm:$0xf]
      %v2966 = vld [vmem:[%s2962 + $0xc] sm:$0xf]
      %v2971 = vunpack.c.l.b16 %v2963
      %v2972 = vunpack.c.l.b16 %v2964
      %v2973 = vunpack.c.l.b16 %v2965
      %v2974 = vunpack.c.l.b16 %v2966
      %v2975 = vpack.c.b16 %v2972, %v2971
      %v2976 = vpack.c.b16 %v2974, %v2973
      %v2980 = vsel %vm1853, %v1830, 0
      %2982 = vmatprep.subr.bf16.mxu0 0
      %2983 = vmatpush1.bf16.msra.mxu0 %v2975
      %2984 = vmatprep.subr.bf16.mxu0 0
      %2985 = vmatpush1.bf16.msra.mxu0 %v2976
      %2986 = vmatprep.subr.bf16.mxu0 0
      %2987 = vmatpush1.bf16.msra.mxu0 0
      %2988 = vmatprep.subr.bf16.mxu0 0
      %2989 = vmatpush1.bf16.msra.mxu0 0
      %2990 = vmatprep.subr.bf16.mxu0 0
      %2991 = vmatpush1.bf16.msra.mxu0 0
      %2992 = vmatprep.subr.bf16.mxu0 0
      %2993 = vmatpush1.bf16.msra.mxu0 0
      %2994 = vmatprep.subr.bf16.mxu0 0
      %2995 = vmatpush1.bf16.msra.mxu0 0
      %2996 = vmatprep.subr.bf16.mxu0 0
      %2997 = vmatpush1.bf16.msra.mxu0 0
      %2998 = vmatprep.subr.bf16.mxu0 0
      %2999 = vmatpush1.bf16.msra.mxu0 0
      %3000 = vmatprep.subr.bf16.mxu0 0
      %3001 = vmatpush1.bf16.msra.mxu0 0
      %3002 = vmatprep.subr.bf16.mxu0 0
      %3003 = vmatpush1.bf16.msra.mxu0 0
      %3004 = vmatprep.subr.bf16.mxu0 0
      %3005 = vmatpush1.bf16.msra.mxu0 0
      %3006 = vmatprep.subr.bf16.mxu0 0
      %3007 = vmatpush1.bf16.msra.mxu0 0
      %3008 = vmatprep.subr.bf16.mxu0 0
      %3009 = vmatpush1.bf16.msra.mxu0 0
      %3010 = vmatprep.subr.bf16.mxu0 0
      %3011 = vmatpush1.bf16.msra.mxu0 0
      %3012 = vmatprep.subr.bf16.mxu0 0
      %3013 = vmatpush1.bf16.msra.mxu0 0
      %3014 = vmatprep.mubr.bf16.mxu0 0
      %3015 = vmatmul.mubr.bf16.gmra.mrb[0].mxu0 %v2980
      %v3016 = vpop.f32.mrb[0].mxu0
      %v3017 = vadd.f32 0.0, %v3016
      %v3018 = vpop.f32.mrb[0].mxu0
      %v3019 = vpop.f32.mrb[0].mxu0
      %v3020 = vadd.f32 0.0, %v3019
      %v3021 = vpop.f32.mrb[0].mxu0
      %3022 = vdwg.mxu0
      %v3023 = vadd.f32 %v2960, %v3017
      %v3024 = vadd.f32 %v2961, %v3020
      %s3025 = scalar_lea.vmem %s7, 304
      %v3026 = vld [vmem:[%s3025] sm:$0xf]
      %v3027 = vld [vmem:[%s3025 + $0x4] sm:$0xf]
      %v3028 = vld [vmem:[%s3025 + $0x8] sm:$0xf]
      %v3029 = vld [vmem:[%s3025 + $0xc] sm:$0xf]
      %v3034 = vunpack.c.l.b16 %v3026
      %v3035 = vunpack.c.l.b16 %v3027
      %v3036 = vunpack.c.l.b16 %v3028
      %v3037 = vunpack.c.l.b16 %v3029
      %v3038 = vpack.c.b16 %v3035, %v3034
      %v3039 = vpack.c.b16 %v3037, %v3036
      %v3043 = vsel %vm1853, %v1831, 0
      %3045 = vmatprep.subr.bf16.mxu0 0
      %3046 = vmatpush1.bf16.msra.mxu0 %v3038
      %3047 = vmatprep.subr.bf16.mxu0 0
      %3048 = vmatpush1.bf16.msra.mxu0 %v3039
      %3049 = vmatprep.subr.bf16.mxu0 0
      %3050 = vmatpush1.bf16.msra.mxu0 0
      %3051 = vmatprep.subr.bf16.mxu0 0
      %3052 = vmatpush1.bf16.msra.mxu0 0
      %3053 = vmatprep.subr.bf16.mxu0 0
      %3054 = vmatpush1.bf16.msra.mxu0 0
      %3055 = vmatprep.subr.bf16.mxu0 0
      %3056 = vmatpush1.bf16.msra.mxu0 0
      %3057 = vmatprep.subr.bf16.mxu0 0
      %3058 = vmatpush1.bf16.msra.mxu0 0
      %3059 = vmatprep.subr.bf16.mxu0 0
      %3060 = vmatpush1.bf16.msra.mxu0 0
      %3061 = vmatprep.subr.bf16.mxu0 0
      %3062 = vmatpush1.bf16.msra.mxu0 0
      %3063 = vmatprep.subr.bf16.mxu0 0
      %3064 = vmatpush1.bf16.msra.mxu0 0
      %3065 = vmatprep.subr.bf16.mxu0 0
      %3066 = vmatpush1.bf16.msra.mxu0 0
      %3067 = vmatprep.subr.bf16.mxu0 0
      %3068 = vmatpush1.bf16.msra.mxu0 0
      %3069 = vmatprep.subr.bf16.mxu0 0
      %3070 = vmatpush1.bf16.msra.mxu0 0
      %3071 = vmatprep.subr.bf16.mxu0 0
      %3072 = vmatpush1.bf16.msra.mxu0 0
      %3073 = vmatprep.subr.bf16.mxu0 0
      %3074 = vmatpush1.bf16.msra.mxu0 0
      %3075 = vmatprep.subr.bf16.mxu0 0
      %3076 = vmatpush1.bf16.msra.mxu0 0
      %3077 = vmatprep.mubr.bf16.mxu0 0
      %3078 = vmatmul.mubr.bf16.gmra.mrb[0].mxu0 %v3043
      %v3079 = vpop.f32.mrb[0].mxu0
      %v3080 = vadd.f32 0.0, %v3079
      %v3081 = vpop.f32.mrb[0].mxu0
      %v3082 = vpop.f32.mrb[0].mxu0
      %v3083 = vadd.f32 0.0, %v3082
      %v3084 = vpop.f32.mrb[0].mxu0
      %3085 = vdwg.mxu0
      %v3086 = vadd.f32 %v3023, %v3080
      %v3087 = vadd.f32 %v3024, %v3083
      %v3088 = vld [vmem:[%s8] sm:$0x1]
      %v3090 = vlaneseq
      %v3091 = vshrl.u32 %v3090, 7
      %v3092 = vsub.s32 0, %v3091
      %v3093 = vrot.slane %v3088, %v3092
      %v3095 = vadd.f32 %v3086, %v3093
      %v3096 = vadd.f32 %v3087, %v3093
      %v3097 = vmax.f32 %v3095, 0.0
      %v3098 = vmax.f32 %v3096, 0.0
      %v3099 = vpack.c.bf16 %v3098, %v3097
      %v3100 = vld [vmem:[%s9] sm:$0xf]
      %v3101 = vld [vmem:[%s9 + $0x4] sm:$0xf]
      %v3102 = vld [vmem:[%s9 + $0x8] sm:$0xf]
      %v3103 = vld [vmem:[%s9 + $0xc] sm:$0xf]
      %v3104 = vld [vmem:[%s9 + $0x10] sm:$0xf]
      %v3105 = vld [vmem:[%s9 + $0x14] sm:$0xf]
      %v3106 = vld [vmem:[%s9 + $0x18] sm:$0xf]
      %v3107 = vld [vmem:[%s9 + $0x1c] sm:$0xf]
      %v3108 = vld [vmem:[%s10] sm:$0x1]
      %v3110 = vlaneseq
      %v3111 = vshrl.u32 %v3110, 7
      %v3112 = vsub.s32 0, %v3111
      %v3113 = vrot.slane %v3108, %v3112
      %v3123 = vunpack.c.l.b16 %v3100
      %v3124 = vunpack.c.l.b16 %v3101
      %v3125 = vunpack.c.l.b16 %v3102
      %v3126 = vunpack.c.l.b16 %v3103
      %v3127 = vunpack.c.l.b16 %v3104
      %v3128 = vunpack.c.l.b16 %v3105
      %v3129 = vunpack.c.l.b16 %v3106
      %v3130 = vunpack.c.l.b16 %v3107
      %v3131 = vpack.c.b16 %v3124, %v3123
      %v3132 = vpack.c.b16 %v3126, %v3125
      %v3133 = vpack.c.b16 %v3128, %v3127
      %v3134 = vpack.c.b16 %v3130, %v3129
      %v3140 = vsel %vm793, %v3099, 0
      %3142 = vmatprep.subr.bf16.mxu0 0
      %3143 = vmatpush1.bf16.msra.mxu0 %v3131
      %3144 = vmatprep.subr.bf16.mxu0 0
      %3145 = vmatpush1.bf16.msra.mxu0 %v3132
      %3146 = vmatprep.subr.bf16.mxu0 0
      %3147 = vmatpush1.bf16.msra.mxu0 %v3133
      %3148 = vmatprep.subr.bf16.mxu0 0
      %3149 = vmatpush1.bf16.msra.mxu0 %v3134
      %3150 = vmatprep.subr.bf16.mxu0 0
      %3151 = vmatpush1.bf16.msra.mxu0 0
      %3152 = vmatprep.subr.bf16.mxu0 0
      %3153 = vmatpush1.bf16.msra.mxu0 0
      %3154 = vmatprep.subr.bf16.mxu0 0
      %3155 = vmatpush1.bf16.msra.mxu0 0
      %3156 = vmatprep.subr.bf16.mxu0 0
      %3157 = vmatpush1.bf16.msra.mxu0 0
      %3158 = vmatprep.subr.bf16.mxu0 0
      %3159 = vmatpush1.bf16.msra.mxu0 0
      %3160 = vmatprep.subr.bf16.mxu0 0
      %3161 = vmatpush1.bf16.msra.mxu0 0
      %3162 = vmatprep.subr.bf16.mxu0 0
      %3163 = vmatpush1.bf16.msra.mxu0 0
      %3164 = vmatprep.subr.bf16.mxu0 0
      %3165 = vmatpush1.bf16.msra.mxu0 0
      %3166 = vmatprep.subr.bf16.mxu0 0
      %3167 = vmatpush1.bf16.msra.mxu0 0
      %3168 = vmatprep.subr.bf16.mxu0 0
      %3169 = vmatpush1.bf16.msra.mxu0 0
      %3170 = vmatprep.subr.bf16.mxu0 0
      %3171 = vmatpush1.bf16.msra.mxu0 0
      %3172 = vmatprep.subr.bf16.mxu0 0
      %3173 = vmatpush1.bf16.msra.mxu0 0
      %3174 = vmatprep.mubr.bf16.mxu0 0
      %3175 = vmatmul.mubr.bf16.gmra.mrb[0].mxu0 %v3140
      %v3176 = vpop.f32.mrb[0].mxu0
      %v3177 = vadd.f32 %v3113, %v3176
      %v3178 = vpop.f32.mrb[0].mxu0
      %v3179 = vpop.f32.mrb[0].mxu0
      %v3180 = vadd.f32 %v3113, %v3179
      %v3181 = vpop.f32.mrb[0].mxu0
      %3182 = vdwg.mxu0
      %v3183 = vmax.f32 %v3177, 0.0
      %v3184 = vmax.f32 %v3180, 0.0
      %v3185 = vpack.c.bf16 %v3184, %v3183
      %v3186 = vld [vmem:[%s11] sm:$0xf]
      %v3187 = vld [vmem:[%s11 + $0x4] sm:$0xf]
      %v3188 = vld [vmem:[%s11 + $0x8] sm:$0xf]
      %v3189 = vld [vmem:[%s11 + $0xc] sm:$0xf]
      %v3190 = vld [vmem:[%s11 + $0x10] sm:$0xf]
      %v3191 = vld [vmem:[%s11 + $0x14] sm:$0xf]
      %v3192 = vld [vmem:[%s11 + $0x18] sm:$0xf]
      %v3193 = vld [vmem:[%s11 + $0x1c] sm:$0xf]
      %v3194 = vld [vmem:[%s11 + $0x20] sm:$0xf]
      %v3195 = vld [vmem:[%s11 + $0x24] sm:$0xf]
      %v3196 = vld [vmem:[%s11 + $0x28] sm:$0xf]
      %v3197 = vld [vmem:[%s11 + $0x2c] sm:$0xf]
      %v3198 = vld [vmem:[%s11 + $0x30] sm:$0xf]
      %v3199 = vld [vmem:[%s11 + $0x34] sm:$0xf]
      %v3200 = vld [vmem:[%s11 + $0x38] sm:$0xf]
      %v3201 = vld [vmem:[%s11 + $0x3c] sm:$0xf]
      %v3202 = vld [vmem:[%s11 + $0x40] sm:$0xf]
      %v3203 = vld [vmem:[%s11 + $0x44] sm:$0xf]
      %v3222 = vunpack.c.l.b16 %v3186
      %v3223 = vunpack.c.l.b16 %v3187
      %v3224 = vunpack.c.l.b16 %v3188
      %v3225 = vunpack.c.l.b16 %v3189
      %v3226 = vunpack.c.l.b16 %v3190
      %v3227 = vunpack.c.l.b16 %v3191
      %v3228 = vunpack.c.l.b16 %v3192
      %v3229 = vunpack.c.l.b16 %v3193
      %v3230 = vunpack.c.l.b16 %v3194
      %v3231 = vunpack.c.l.b16 %v3195
      %v3232 = vunpack.c.l.b16 %v3196
      %v3233 = vunpack.c.l.b16 %v3197
      %v3234 = vunpack.c.l.b16 %v3198
      %v3235 = vunpack.c.l.b16 %v3199
      %v3236 = vunpack.c.l.b16 %v3200
      %v3237 = vunpack.c.l.b16 %v3201
      %v3238 = vunpack.c.l.b16 %v3202
      %v3239 = vunpack.c.l.b16 %v3203
      %v3240 = vpack.c.b16 %v3223, %v3222
      %v3241 = vpack.c.b16 %v3225, %v3224
      %v3242 = vpack.c.b16 %v3227, %v3226
      %v3243 = vpack.c.b16 %v3229, %v3228
      %v3244 = vpack.c.b16 %v3231, %v3230
      %v3245 = vpack.c.b16 %v3233, %v3232
      %v3246 = vpack.c.b16 %v3235, %v3234
      %v3247 = vpack.c.b16 %v3237, %v3236
      %v3248 = vpack.c.b16 %v3239, %v3238
      %v3250 = vsel %vm946, %v3240, 0
      %v3253 = vsel %vm946, %v3241, 0
      %v3256 = vsel %vm946, %v3242, 0
      %v3259 = vsel %vm946, %v3243, 0
      %v3262 = vsel %vm946, %v3244, 0
      %v3265 = vsel %vm946, %v3245, 0
      %v3268 = vsel %vm946, %v3246, 0
      %v3271 = vsel %vm946, %v3247, 0
      %v3274 = vsel %vm946, %v3248, 0
      %3276 = vmatprep.subr.bf16.mxu0 0
      %3277 = vmatpush1.bf16.msra.mxu0 %v3185
      %3278 = vmatprep.subr.bf16.mxu0 0
      %3279 = vmatpush1.bf16.msra.mxu0 0
      %3280 = vmatprep.subr.bf16.mxu0 0
      %3281 = vmatpush1.bf16.msra.mxu0 0
      %3282 = vmatprep.subr.bf16.mxu0 0
      %3283 = vmatpush1.bf16.msra.mxu0 0
      %3284 = vmatprep.subr.bf16.mxu0 0
      %3285 = vmatpush1.bf16.msra.mxu0 0
      %3286 = vmatprep.subr.bf16.mxu0 0
      %3287 = vmatpush1.bf16.msra.mxu0 0
      %3288 = vmatprep.subr.bf16.mxu0 0
      %3289 = vmatpush1.bf16.msra.mxu0 0
      %3290 = vmatprep.subr.bf16.mxu0 0
      %3291 = vmatpush1.bf16.msra.mxu0 0
      %3292 = vmatprep.subr.bf16.mxu0 0
      %3293 = vmatpush1.bf16.msra.mxu0 0
      %3294 = vmatprep.subr.bf16.mxu0 0
      %3295 = vmatpush1.bf16.msra.mxu0 0
      %3296 = vmatprep.subr.bf16.mxu0 0
      %3297 = vmatpush1.bf16.msra.mxu0 0
      %3298 = vmatprep.subr.bf16.mxu0 0
      %3299 = vmatpush1.bf16.msra.mxu0 0
      %3300 = vmatprep.subr.bf16.mxu0 0
      %3301 = vmatpush1.bf16.msra.mxu0 0
      %3302 = vmatprep.subr.bf16.mxu0 0
      %3303 = vmatpush1.bf16.msra.mxu0 0
      %3304 = vmatprep.subr.bf16.mxu0 0
      %3305 = vmatpush1.bf16.msra.mxu0 0
      %3306 = vmatprep.subr.bf16.mxu0 0
      %3307 = vmatpush1.bf16.msra.mxu0 0
      %3308 = vmatprep.mubr.bf16.mxu0 0
      %3309 = vmatmul.mubr.bf16.gmra.mrb[0].mxu0 %v3250
      %v3310 = vpop.f32.mrb[0].mxu0
      %v3311 = vadd.f32 0.0, %v3310
      %v3312 = vpop.f32.mrb[0].mxu0
      %v3313 = vpop.f32.mrb[0].mxu0
      %v3314 = vadd.f32 0.0, %v3313
      %v3315 = vpop.f32.mrb[0].mxu0
      %3316 = vmatprep.mubr.bf16.mxu0 0
      %3317 = vmatmul.mubr.bf16.gmra.mrb[0].mxu0 %v3253
      %v3318 = vpop.f32.mrb[0].mxu0
      %v3319 = vadd.f32 0.0, %v3318
      %v3320 = vpop.f32.mrb[0].mxu0
      %v3321 = vpop.f32.mrb[0].mxu0
      %v3322 = vadd.f32 0.0, %v3321
      %v3323 = vpop.f32.mrb[0].mxu0
      %3324 = vmatprep.mubr.bf16.mxu0 0
      %3325 = vmatmul.mubr.bf16.gmra.mrb[0].mxu0 %v3256
      %v3326 = vpop.f32.mrb[0].mxu0
      %v3327 = vadd.f32 0.0, %v3326
      %v3328 = vpop.f32.mrb[0].mxu0
      %v3329 = vpop.f32.mrb[0].mxu0
      %v3330 = vadd.f32 0.0, %v3329
      %v3331 = vpop.f32.mrb[0].mxu0
      %3332 = vmatprep.mubr.bf16.mxu0 0
      %3333 = vmatmul.mubr.bf16.gmra.mrb[0].mxu0 %v3259
      %v3334 = vpop.f32.mrb[0].mxu0
      %v3335 = vadd.f32 0.0, %v3334
      %v3336 = vpop.f32.mrb[0].mxu0
      %v3337 = vpop.f32.mrb[0].mxu0
      %v3338 = vadd.f32 0.0, %v3337
      %v3339 = vpop.f32.mrb[0].mxu0
      %3340 = vmatprep.mubr.bf16.mxu0 0
      %3341 = vmatmul.mubr.bf16.gmra.mrb[0].mxu0 %v3262
      %v3342 = vpop.f32.mrb[0].mxu0
      %v3343 = vadd.f32 0.0, %v3342
      %v3344 = vpop.f32.mrb[0].mxu0
      %v3345 = vpop.f32.mrb[0].mxu0
      %v3346 = vadd.f32 0.0, %v3345
      %v3347 = vpop.f32.mrb[0].mxu0
      %3348 = vmatprep.mubr.bf16.mxu0 0
      %3349 = vmatmul.mubr.bf16.gmra.mrb[0].mxu0 %v3265
      %v3350 = vpop.f32.mrb[0].mxu0
      %v3351 = vadd.f32 0.0, %v3350
      %v3352 = vpop.f32.mrb[0].mxu0
      %v3353 = vpop.f32.mrb[0].mxu0
      %v3354 = vadd.f32 0.0, %v3353
      %v3355 = vpop.f32.mrb[0].mxu0
      %3356 = vmatprep.mubr.bf16.mxu0 0
      %3357 = vmatmul.mubr.bf16.gmra.mrb[0].mxu0 %v3268
      %v3358 = vpop.f32.mrb[0].mxu0
      %v3359 = vadd.f32 0.0, %v3358
      %v3360 = vpop.f32.mrb[0].mxu0
      %v3361 = vpop.f32.mrb[0].mxu0
      %v3362 = vadd.f32 0.0, %v3361
      %v3363 = vpop.f32.mrb[0].mxu0
      %3364 = vmatprep.mubr.bf16.mxu0 0
      %3365 = vmatmul.mubr.bf16.gmra.mrb[0].mxu0 %v3271
      %v3366 = vpop.f32.mrb[0].mxu0
      %v3367 = vadd.f32 0.0, %v3366
      %v3368 = vpop.f32.mrb[0].mxu0
      %v3369 = vpop.f32.mrb[0].mxu0
      %v3370 = vadd.f32 0.0, %v3369
      %v3371 = vpop.f32.mrb[0].mxu0
      %3372 = vmatprep.mubr.bf16.mxu0 0
      %3373 = vmatmul.mubr.bf16.gmra.mrb[0].mxu0 %v3274
      %v3374 = vpop.f32.mrb[0].mxu0
      %v3375 = vadd.f32 0.0, %v3374
      %v3376 = vpop.f32.mrb[0].mxu0
      %v3377 = vpop.f32.mrb[0].mxu0
      %v3378 = vadd.f32 0.0, %v3377
      %v3379 = vpop.f32.mrb[0].mxu0
      %3380 = vdwg.mxu0
      %v3381 = vpack.c.bf16 %v3314, %v3311
      %v3382 = vpack.c.bf16 %v3322, %v3319
      %v3383 = vpack.c.bf16 %v3330, %v3327
      %v3384 = vpack.c.bf16 %v3338, %v3335
      %v3385 = vpack.c.bf16 %v3346, %v3343
      %v3386 = vpack.c.bf16 %v3354, %v3351
      %v3387 = vpack.c.bf16 %v3362, %v3359
      %v3388 = vpack.c.bf16 %v3370, %v3367
      %v3389 = vpack.c.bf16 %v3378, %v3375
      %v3390 = vld [vmem:[%s12] sm:$0xf]
      %v3391 = vld [vmem:[%s12 + $0x4] sm:$0xf]
      %s3392 = scalar_lea.vmem %s12, 8
      %v3393 = vld [vmem:[%s3392] sm:$0xf]
      %v3394 = vld [vmem:[%s3392 + $0x4] sm:$0xf]
      %v3397 = vunpack.c.l.b16 %v3393
      %v3398 = vunpack.c.l.b16 %v3394
      %v3399 = vpack.c.b16 %v3398, %v3397
      %v3402 = vsel %vm946, %v3382, 0
      %3404 = vmatprep.subr.bf16.mxu0 0
      %3405 = vmatpush1.bf16.msra.mxu0 %v3399
      %3406 = vmatprep.subr.bf16.mxu0 0
      %3407 = vmatpush1.bf16.msra.mxu0 0
      %3408 = vmatprep.subr.bf16.mxu0 0
      %3409 = vmatpush1.bf16.msra.mxu0 0
      %3410 = vmatprep.subr.bf16.mxu0 0
      %3411 = vmatpush1.bf16.msra.mxu0 0
      %3412 = vmatprep.subr.bf16.mxu0 0
      %3413 = vmatpush1.bf16.msra.mxu0 0
      %3414 = vmatprep.subr.bf16.mxu0 0
      %3415 = vmatpush1.bf16.msra.mxu0 0
      %3416 = vmatprep.subr.bf16.mxu0 0
      %3417 = vmatpush1.bf16.msra.mxu0 0
      %3418 = vmatprep.subr.bf16.mxu0 0
      %3419 = vmatpush1.bf16.msra.mxu0 0
      %3420 = vmatprep.subr.bf16.mxu0 0
      %3421 = vmatpush1.bf16.msra.mxu0 0
      %3422 = vmatprep.subr.bf16.mxu0 0
      %3423 = vmatpush1.bf16.msra.mxu0 0
      %3424 = vmatprep.subr.bf16.mxu0 0
      %3425 = vmatpush1.bf16.msra.mxu0 0
      %3426 = vmatprep.subr.bf16.mxu0 0
      %3427 = vmatpush1.bf16.msra.mxu0 0
      %3428 = vmatprep.subr.bf16.mxu0 0
      %3429 = vmatpush1.bf16.msra.mxu0 0
      %3430 = vmatprep.subr.bf16.mxu0 0
      %3431 = vmatpush1.bf16.msra.mxu0 0
      %3432 = vmatprep.subr.bf16.mxu0 0
      %3433 = vmatpush1.bf16.msra.mxu0 0
      %3434 = vmatprep.subr.bf16.mxu0 0
      %3435 = vmatpush1.bf16.msra.mxu0 0
      %3436 = vmatprep.mubr.bf16.mxu0 0
      %3437 = vmatmul.mubr.bf16.gmra.mrb[0].mxu0 %v3402
      %v3438 = vpop.f32.mrb[0].mxu0
      %v3439 = vadd.f32 0.0, %v3438
      %v3440 = vpop.f32.mrb[0].mxu0
      %v3441 = vpop.f32.mrb[0].mxu0
      %v3442 = vadd.f32 0.0, %v3441
      %v3443 = vpop.f32.mrb[0].mxu0
      %3444 = vdwg.mxu0
      %v3447 = vunpack.c.l.b16 %v3390
      %v3448 = vunpack.c.l.b16 %v3391
      %v3449 = vpack.c.b16 %v3448, %v3447
      %v3452 = vsel %vm946, %v3381, 0
      %3454 = vmatprep.subr.bf16.mxu0 0
      %3455 = vmatpush1.bf16.msra.mxu0 %v3449
      %3456 = vmatprep.subr.bf16.mxu0 0
      %3457 = vmatpush1.bf16.msra.mxu0 0
      %3458 = vmatprep.subr.bf16.mxu0 0
      %3459 = vmatpush1.bf16.msra.mxu0 0
      %3460 = vmatprep.subr.bf16.mxu0 0
      %3461 = vmatpush1.bf16.msra.mxu0 0
      %3462 = vmatprep.subr.bf16.mxu0 0
      %3463 = vmatpush1.bf16.msra.mxu0 0
      %3464 = vmatprep.subr.bf16.mxu0 0
      %3465 = vmatpush1.bf16.msra.mxu0 0
      %3466 = vmatprep.subr.bf16.mxu0 0
      %3467 = vmatpush1.bf16.msra.mxu0 0
      %3468 = vmatprep.subr.bf16.mxu0 0
      %3469 = vmatpush1.bf16.msra.mxu0 0
      %3470 = vmatprep.subr.bf16.mxu0 0
      %3471 = vmatpush1.bf16.msra.mxu0 0
      %3472 = vmatprep.subr.bf16.mxu0 0
      %3473 = vmatpush1.bf16.msra.mxu0 0
      %3474 = vmatprep.subr.bf16.mxu0 0
      %3475 = vmatpush1.bf16.msra.mxu0 0
      %3476 = vmatprep.subr.bf16.mxu0 0
      %3477 = vmatpush1.bf16.msra.mxu0 0
      %3478 = vmatprep.subr.bf16.mxu0 0
      %3479 = vmatpush1.bf16.msra.mxu0 0
      %3480 = vmatprep.subr.bf16.mxu0 0
      %3481 = vmatpush1.bf16.msra.mxu0 0
      %3482 = vmatprep.subr.bf16.mxu0 0
      %3483 = vmatpush1.bf16.msra.mxu0 0
      %3484 = vmatprep.subr.bf16.mxu0 0
      %3485 = vmatpush1.bf16.msra.mxu0 0
      %3486 = vmatprep.mubr.bf16.mxu0 0
      %3487 = vmatmul.mubr.bf16.gmra.mrb[0].mxu0 %v3452
      %v3488 = vpop.f32.mrb[0].mxu0
      %v3489 = vadd.f32 %v3439, %v3488
      %v3490 = vpop.f32.mrb[0].mxu0
      %v3491 = vpop.f32.mrb[0].mxu0
      %v3492 = vadd.f32 %v3442, %v3491
      %v3493 = vpop.f32.mrb[0].mxu0
      %3494 = vdwg.mxu0
      %s3495 = scalar_lea.vmem %s12, 16
      %v3496 = vld [vmem:[%s3495] sm:$0xf]
      %v3497 = vld [vmem:[%s3495 + $0x4] sm:$0xf]
      %v3500 = vunpack.c.l.b16 %v3496
      %v3501 = vunpack.c.l.b16 %v3497
      %v3502 = vpack.c.b16 %v3501, %v3500
      %v3505 = vsel %vm946, %v3383, 0
      %3507 = vmatprep.subr.bf16.mxu0 0
      %3508 = vmatpush1.bf16.msra.mxu0 %v3502
      %3509 = vmatprep.subr.bf16.mxu0 0
      %3510 = vmatpush1.bf16.msra.mxu0 0
      %3511 = vmatprep.subr.bf16.mxu0 0
      %3512 = vmatpush1.bf16.msra.mxu0 0
      %3513 = vmatprep.subr.bf16.mxu0 0
      %3514 = vmatpush1.bf16.msra.mxu0 0
      %3515 = vmatprep.subr.bf16.mxu0 0
      %3516 = vmatpush1.bf16.msra.mxu0 0
      %3517 = vmatprep.subr.bf16.mxu0 0
      %3518 = vmatpush1.bf16.msra.mxu0 0
      %3519 = vmatprep.subr.bf16.mxu0 0
      %3520 = vmatpush1.bf16.msra.mxu0 0
      %3521 = vmatprep.subr.bf16.mxu0 0
      %3522 = vmatpush1.bf16.msra.mxu0 0
      %3523 = vmatprep.subr.bf16.mxu0 0
      %3524 = vmatpush1.bf16.msra.mxu0 0
      %3525 = vmatprep.subr.bf16.mxu0 0
      %3526 = vmatpush1.bf16.msra.mxu0 0
      %3527 = vmatprep.subr.bf16.mxu0 0
      %3528 = vmatpush1.bf16.msra.mxu0 0
      %3529 = vmatprep.subr.bf16.mxu0 0
      %3530 = vmatpush1.bf16.msra.mxu0 0
      %3531 = vmatprep.subr.bf16.mxu0 0
      %3532 = vmatpush1.bf16.msra.mxu0 0
      %3533 = vmatprep.subr.bf16.mxu0 0
      %3534 = vmatpush1.bf16.msra.mxu0 0
      %3535 = vmatprep.subr.bf16.mxu0 0
      %3536 = vmatpush1.bf16.msra.mxu0 0
      %3537 = vmatprep.subr.bf16.mxu0 0
      %3538 = vmatpush1.bf16.msra.mxu0 0
      %3539 = vmatprep.mubr.bf16.mxu0 0
      %3540 = vmatmul.mubr.bf16.gmra.mrb[0].mxu0 %v3505
      %v3541 = vpop.f32.mrb[0].mxu0
      %v3542 = vadd.f32 0.0, %v3541
      %v3543 = vpop.f32.mrb[0].mxu0
      %v3544 = vpop.f32.mrb[0].mxu0
      %v3545 = vadd.f32 0.0, %v3544
      %v3546 = vpop.f32.mrb[0].mxu0
      %3547 = vdwg.mxu0
      %v3548 = vadd.f32 %v3489, %v3542
      %v3549 = vadd.f32 %v3492, %v3545
      %s3550 = scalar_lea.vmem %s12, 24
      %v3551 = vld [vmem:[%s3550] sm:$0xf]
      %v3552 = vld [vmem:[%s3550 + $0x4] sm:$0xf]
      %v3555 = vunpack.c.l.b16 %v3551
      %v3556 = vunpack.c.l.b16 %v3552
      %v3557 = vpack.c.b16 %v3556, %v3555
      %v3560 = vsel %vm946, %v3384, 0
      %3562 = vmatprep.subr.bf16.mxu0 0
      %3563 = vmatpush1.bf16.msra.mxu0 %v3557
      %3564 = vmatprep.subr.bf16.mxu0 0
      %3565 = vmatpush1.bf16.msra.mxu0 0
      %3566 = vmatprep.subr.bf16.mxu0 0
      %3567 = vmatpush1.bf16.msra.mxu0 0
      %3568 = vmatprep.subr.bf16.mxu0 0
      %3569 = vmatpush1.bf16.msra.mxu0 0
      %3570 = vmatprep.subr.bf16.mxu0 0
      %3571 = vmatpush1.bf16.msra.mxu0 0
      %3572 = vmatprep.subr.bf16.mxu0 0
      %3573 = vmatpush1.bf16.msra.mxu0 0
      %3574 = vmatprep.subr.bf16.mxu0 0
      %3575 = vmatpush1.bf16.msra.mxu0 0
      %3576 = vmatprep.subr.bf16.mxu0 0
      %3577 = vmatpush1.bf16.msra.mxu0 0
      %3578 = vmatprep.subr.bf16.mxu0 0
      %3579 = vmatpush1.bf16.msra.mxu0 0
      %3580 = vmatprep.subr.bf16.mxu0 0
      %3581 = vmatpush1.bf16.msra.mxu0 0
      %3582 = vmatprep.subr.bf16.mxu0 0
      %3583 = vmatpush1.bf16.msra.mxu0 0
      %3584 = vmatprep.subr.bf16.mxu0 0
      %3585 = vmatpush1.bf16.msra.mxu0 0
      %3586 = vmatprep.subr.bf16.mxu0 0
      %3587 = vmatpush1.bf16.msra.mxu0 0
      %3588 = vmatprep.subr.bf16.mxu0 0
      %3589 = vmatpush1.bf16.msra.mxu0 0
      %3590 = vmatprep.subr.bf16.mxu0 0
      %3591 = vmatpush1.bf16.msra.mxu0 0
      %3592 = vmatprep.subr.bf16.mxu0 0
      %3593 = vmatpush1.bf16.msra.mxu0 0
      %3594 = vmatprep.mubr.bf16.mxu0 0
      %3595 = vmatmul.mubr.bf16.gmra.mrb[0].mxu0 %v3560
      %v3596 = vpop.f32.mrb[0].mxu0
      %v3597 = vadd.f32 0.0, %v3596
      %v3598 = vpop.f32.mrb[0].mxu0
      %v3599 = vpop.f32.mrb[0].mxu0
      %v3600 = vadd.f32 0.0, %v3599
      %v3601 = vpop.f32.mrb[0].mxu0
      %3602 = vdwg.mxu0
      %v3603 = vadd.f32 %v3548, %v3597
      %v3604 = vadd.f32 %v3549, %v3600
      %s3605 = scalar_lea.vmem %s12, 32
      %v3606 = vld [vmem:[%s3605] sm:$0xf]
      %v3607 = vld [vmem:[%s3605 + $0x4] sm:$0xf]
      %v3610 = vunpack.c.l.b16 %v3606
      %v3611 = vunpack.c.l.b16 %v3607
      %v3612 = vpack.c.b16 %v3611, %v3610
      %v3615 = vsel %vm946, %v3385, 0
      %3617 = vmatprep.subr.bf16.mxu0 0
      %3618 = vmatpush1.bf16.msra.mxu0 %v3612
      %3619 = vmatprep.subr.bf16.mxu0 0
      %3620 = vmatpush1.bf16.msra.mxu0 0
      %3621 = vmatprep.subr.bf16.mxu0 0
      %3622 = vmatpush1.bf16.msra.mxu0 0
      %3623 = vmatprep.subr.bf16.mxu0 0
      %3624 = vmatpush1.bf16.msra.mxu0 0
      %3625 = vmatprep.subr.bf16.mxu0 0
      %3626 = vmatpush1.bf16.msra.mxu0 0
      %3627 = vmatprep.subr.bf16.mxu0 0
      %3628 = vmatpush1.bf16.msra.mxu0 0
      %3629 = vmatprep.subr.bf16.mxu0 0
      %3630 = vmatpush1.bf16.msra.mxu0 0
      %3631 = vmatprep.subr.bf16.mxu0 0
      %3632 = vmatpush1.bf16.msra.mxu0 0
      %3633 = vmatprep.subr.bf16.mxu0 0
      %3634 = vmatpush1.bf16.msra.mxu0 0
      %3635 = vmatprep.subr.bf16.mxu0 0
      %3636 = vmatpush1.bf16.msra.mxu0 0
      %3637 = vmatprep.subr.bf16.mxu0 0
      %3638 = vmatpush1.bf16.msra.mxu0 0
      %3639 = vmatprep.subr.bf16.mxu0 0
      %3640 = vmatpush1.bf16.msra.mxu0 0
      %3641 = vmatprep.subr.bf16.mxu0 0
      %3642 = vmatpush1.bf16.msra.mxu0 0
      %3643 = vmatprep.subr.bf16.mxu0 0
      %3644 = vmatpush1.bf16.msra.mxu0 0
      %3645 = vmatprep.subr.bf16.mxu0 0
      %3646 = vmatpush1.bf16.msra.mxu0 0
      %3647 = vmatprep.subr.bf16.mxu0 0
      %3648 = vmatpush1.bf16.msra.mxu0 0
      %3649 = vmatprep.mubr.bf16.mxu0 0
      %3650 = vmatmul.mubr.bf16.gmra.mrb[0].mxu0 %v3615
      %v3651 = vpop.f32.mrb[0].mxu0
      %v3652 = vadd.f32 0.0, %v3651
      %v3653 = vpop.f32.mrb[0].mxu0
      %v3654 = vpop.f32.mrb[0].mxu0
      %v3655 = vadd.f32 0.0, %v3654
      %v3656 = vpop.f32.mrb[0].mxu0
      %3657 = vdwg.mxu0
      %v3658 = vadd.f32 %v3603, %v3652
      %v3659 = vadd.f32 %v3604, %v3655
      %s3660 = scalar_lea.vmem %s12, 40
      %v3661 = vld [vmem:[%s3660] sm:$0xf]
      %v3662 = vld [vmem:[%s3660 + $0x4] sm:$0xf]
      %v3665 = vunpack.c.l.b16 %v3661
      %v3666 = vunpack.c.l.b16 %v3662
      %v3667 = vpack.c.b16 %v3666, %v3665
      %v3670 = vsel %vm946, %v3386, 0
      %3672 = vmatprep.subr.bf16.mxu0 0
      %3673 = vmatpush1.bf16.msra.mxu0 %v3667
      %3674 = vmatprep.subr.bf16.mxu0 0
      %3675 = vmatpush1.bf16.msra.mxu0 0
      %3676 = vmatprep.subr.bf16.mxu0 0
      %3677 = vmatpush1.bf16.msra.mxu0 0
      %3678 = vmatprep.subr.bf16.mxu0 0
      %3679 = vmatpush1.bf16.msra.mxu0 0
      %3680 = vmatprep.subr.bf16.mxu0 0
      %3681 = vmatpush1.bf16.msra.mxu0 0
      %3682 = vmatprep.subr.bf16.mxu0 0
      %3683 = vmatpush1.bf16.msra.mxu0 0
      %3684 = vmatprep.subr.bf16.mxu0 0
      %3685 = vmatpush1.bf16.msra.mxu0 0
      %3686 = vmatprep.subr.bf16.mxu0 0
      %3687 = vmatpush1.bf16.msra.mxu0 0
      %3688 = vmatprep.subr.bf16.mxu0 0
      %3689 = vmatpush1.bf16.msra.mxu0 0
      %3690 = vmatprep.subr.bf16.mxu0 0
      %3691 = vmatpush1.bf16.msra.mxu0 0
      %3692 = vmatprep.subr.bf16.mxu0 0
      %3693 = vmatpush1.bf16.msra.mxu0 0
      %3694 = vmatprep.subr.bf16.mxu0 0
      %3695 = vmatpush1.bf16.msra.mxu0 0
      %3696 = vmatprep.subr.bf16.mxu0 0
      %3697 = vmatpush1.bf16.msra.mxu0 0
      %3698 = vmatprep.subr.bf16.mxu0 0
      %3699 = vmatpush1.bf16.msra.mxu0 0
      %3700 = vmatprep.subr.bf16.mxu0 0
      %3701 = vmatpush1.bf16.msra.mxu0 0
      %3702 = vmatprep.subr.bf16.mxu0 0
      %3703 = vmatpush1.bf16.msra.mxu0 0
      %3704 = vmatprep.mubr.bf16.mxu0 0
      %3705 = vmatmul.mubr.bf16.gmra.mrb[0].mxu0 %v3670
      %v3706 = vpop.f32.mrb[0].mxu0
      %v3707 = vadd.f32 0.0, %v3706
      %v3708 = vpop.f32.mrb[0].mxu0
      %v3709 = vpop.f32.mrb[0].mxu0
      %v3710 = vadd.f32 0.0, %v3709
      %v3711 = vpop.f32.mrb[0].mxu0
      %3712 = vdwg.mxu0
      %v3713 = vadd.f32 %v3658, %v3707
      %v3714 = vadd.f32 %v3659, %v3710
      %s3715 = scalar_lea.vmem %s12, 48
      %v3716 = vld [vmem:[%s3715] sm:$0xf]
      %v3717 = vld [vmem:[%s3715 + $0x4] sm:$0xf]
      %v3720 = vunpack.c.l.b16 %v3716
      %v3721 = vunpack.c.l.b16 %v3717
      %v3722 = vpack.c.b16 %v3721, %v3720
      %v3725 = vsel %vm946, %v3387, 0
      %3727 = vmatprep.subr.bf16.mxu0 0
      %3728 = vmatpush1.bf16.msra.mxu0 %v3722
      %3729 = vmatprep.subr.bf16.mxu0 0
      %3730 = vmatpush1.bf16.msra.mxu0 0
      %3731 = vmatprep.subr.bf16.mxu0 0
      %3732 = vmatpush1.bf16.msra.mxu0 0
      %3733 = vmatprep.subr.bf16.mxu0 0
      %3734 = vmatpush1.bf16.msra.mxu0 0
      %3735 = vmatprep.subr.bf16.mxu0 0
      %3736 = vmatpush1.bf16.msra.mxu0 0
      %3737 = vmatprep.subr.bf16.mxu0 0
      %3738 = vmatpush1.bf16.msra.mxu0 0
      %3739 = vmatprep.subr.bf16.mxu0 0
      %3740 = vmatpush1.bf16.msra.mxu0 0
      %3741 = vmatprep.subr.bf16.mxu0 0
      %3742 = vmatpush1.bf16.msra.mxu0 0
      %3743 = vmatprep.subr.bf16.mxu0 0
      %3744 = vmatpush1.bf16.msra.mxu0 0
      %3745 = vmatprep.subr.bf16.mxu0 0
      %3746 = vmatpush1.bf16.msra.mxu0 0
      %3747 = vmatprep.subr.bf16.mxu0 0
      %3748 = vmatpush1.bf16.msra.mxu0 0
      %3749 = vmatprep.subr.bf16.mxu0 0
      %3750 = vmatpush1.bf16.msra.mxu0 0
      %3751 = vmatprep.subr.bf16.mxu0 0
      %3752 = vmatpush1.bf16.msra.mxu0 0
      %3753 = vmatprep.subr.bf16.mxu0 0
      %3754 = vmatpush1.bf16.msra.mxu0 0
      %3755 = vmatprep.subr.bf16.mxu0 0
      %3756 = vmatpush1.bf16.msra.mxu0 0
      %3757 = vmatprep.subr.bf16.mxu0 0
      %3758 = vmatpush1.bf16.msra.mxu0 0
      %3759 = vmatprep.mubr.bf16.mxu0 0
      %3760 = vmatmul.mubr.bf16.gmra.mrb[0].mxu0 %v3725
      %v3761 = vpop.f32.mrb[0].mxu0
      %v3762 = vadd.f32 0.0, %v3761
      %v3763 = vpop.f32.mrb[0].mxu0
      %v3764 = vpop.f32.mrb[0].mxu0
      %v3765 = vadd.f32 0.0, %v3764
      %v3766 = vpop.f32.mrb[0].mxu0
      %3767 = vdwg.mxu0
      %v3768 = vadd.f32 %v3713, %v3762
      %v3769 = vadd.f32 %v3714, %v3765
      %s3770 = scalar_lea.vmem %s12, 56
      %v3771 = vld [vmem:[%s3770] sm:$0xf]
      %v3772 = vld [vmem:[%s3770 + $0x4] sm:$0xf]
      %v3775 = vunpack.c.l.b16 %v3771
      %v3776 = vunpack.c.l.b16 %v3772
      %v3777 = vpack.c.b16 %v3776, %v3775
      %v3780 = vsel %vm946, %v3388, 0
      %3782 = vmatprep.subr.bf16.mxu0 0
      %3783 = vmatpush1.bf16.msra.mxu0 %v3777
      %3784 = vmatprep.subr.bf16.mxu0 0
      %3785 = vmatpush1.bf16.msra.mxu0 0
      %3786 = vmatprep.subr.bf16.mxu0 0
      %3787 = vmatpush1.bf16.msra.mxu0 0
      %3788 = vmatprep.subr.bf16.mxu0 0
      %3789 = vmatpush1.bf16.msra.mxu0 0
      %3790 = vmatprep.subr.bf16.mxu0 0
      %3791 = vmatpush1.bf16.msra.mxu0 0
      %3792 = vmatprep.subr.bf16.mxu0 0
      %3793 = vmatpush1.bf16.msra.mxu0 0
      %3794 = vmatprep.subr.bf16.mxu0 0
      %3795 = vmatpush1.bf16.msra.mxu0 0
      %3796 = vmatprep.subr.bf16.mxu0 0
      %3797 = vmatpush1.bf16.msra.mxu0 0
      %3798 = vmatprep.subr.bf16.mxu0 0
      %3799 = vmatpush1.bf16.msra.mxu0 0
      %3800 = vmatprep.subr.bf16.mxu0 0
      %3801 = vmatpush1.bf16.msra.mxu0 0
      %3802 = vmatprep.subr.bf16.mxu0 0
      %3803 = vmatpush1.bf16.msra.mxu0 0
      %3804 = vmatprep.subr.bf16.mxu0 0
      %3805 = vmatpush1.bf16.msra.mxu0 0
      %3806 = vmatprep.subr.bf16.mxu0 0
      %3807 = vmatpush1.bf16.msra.mxu0 0
      %3808 = vmatprep.subr.bf16.mxu0 0
      %3809 = vmatpush1.bf16.msra.mxu0 0
      %3810 = vmatprep.subr.bf16.mxu0 0
      %3811 = vmatpush1.bf16.msra.mxu0 0
      %3812 = vmatprep.subr.bf16.mxu0 0
      %3813 = vmatpush1.bf16.msra.mxu0 0
      %3814 = vmatprep.mubr.bf16.mxu0 0
      %3815 = vmatmul.mubr.bf16.gmra.mrb[0].mxu0 %v3780
      %v3816 = vpop.f32.mrb[0].mxu0
      %v3817 = vadd.f32 0.0, %v3816
      %v3818 = vpop.f32.mrb[0].mxu0
      %v3819 = vpop.f32.mrb[0].mxu0
      %v3820 = vadd.f32 0.0, %v3819
      %v3821 = vpop.f32.mrb[0].mxu0
      %3822 = vdwg.mxu0
      %v3823 = vadd.f32 %v3768, %v3817
      %v3824 = vadd.f32 %v3769, %v3820
      %s3825 = scalar_lea.vmem %s12, 64
      %v3826 = vld [vmem:[%s3825] sm:$0xf]
      %v3827 = vld [vmem:[%s3825 + $0x4] sm:$0xf]
      %v3830 = vunpack.c.l.b16 %v3826
      %v3831 = vunpack.c.l.b16 %v3827
      %v3832 = vpack.c.b16 %v3831, %v3830
      %v3835 = vsel %vm946, %v3389, 0
      %3837 = vmatprep.subr.bf16.mxu0 0
      %3838 = vmatpush1.bf16.msra.mxu0 %v3832
      %3839 = vmatprep.subr.bf16.mxu0 0
      %3840 = vmatpush1.bf16.msra.mxu0 0
      %3841 = vmatprep.subr.bf16.mxu0 0
      %3842 = vmatpush1.bf16.msra.mxu0 0
      %3843 = vmatprep.subr.bf16.mxu0 0
      %3844 = vmatpush1.bf16.msra.mxu0 0
      %3845 = vmatprep.subr.bf16.mxu0 0
      %3846 = vmatpush1.bf16.msra.mxu0 0
      %3847 = vmatprep.subr.bf16.mxu0 0
      %3848 = vmatpush1.bf16.msra.mxu0 0
      %3849 = vmatprep.subr.bf16.mxu0 0
      %3850 = vmatpush1.bf16.msra.mxu0 0
      %3851 = vmatprep.subr.bf16.mxu0 0
      %3852 = vmatpush1.bf16.msra.mxu0 0
      %3853 = vmatprep.subr.bf16.mxu0 0
      %3854 = vmatpush1.bf16.msra.mxu0 0
      %3855 = vmatprep.subr.bf16.mxu0 0
      %3856 = vmatpush1.bf16.msra.mxu0 0
      %3857 = vmatprep.subr.bf16.mxu0 0
      %3858 = vmatpush1.bf16.msra.mxu0 0
      %3859 = vmatprep.subr.bf16.mxu0 0
      %3860 = vmatpush1.bf16.msra.mxu0 0
      %3861 = vmatprep.subr.bf16.mxu0 0
      %3862 = vmatpush1.bf16.msra.mxu0 0
      %3863 = vmatprep.subr.bf16.mxu0 0
      %3864 = vmatpush1.bf16.msra.mxu0 0
      %3865 = vmatprep.subr.bf16.mxu0 0
      %3866 = vmatpush1.bf16.msra.mxu0 0
      %3867 = vmatprep.subr.bf16.mxu0 0
      %3868 = vmatpush1.bf16.msra.mxu0 0
      %3869 = vmatprep.mubr.bf16.mxu0 0
      %3870 = vmatmul.mubr.bf16.gmra.mrb[0].mxu0 %v3835
      %v3871 = vpop.f32.mrb[0].mxu0
      %v3872 = vadd.f32 0.0, %v3871
      %v3873 = vpop.f32.mrb[0].mxu0
      %v3874 = vpop.f32.mrb[0].mxu0
      %v3875 = vadd.f32 0.0, %v3874
      %v3876 = vpop.f32.mrb[0].mxu0
      %3877 = vdwg.mxu0
      %v3878 = vadd.f32 %v3823, %v3872
      %v3879 = vadd.f32 %v3824, %v3875
      %v3880 = vld [vmem:[%s13] sm:$0x1]
      %v3882 = vlaneseq
      %v3883 = vshrl.u32 %v3882, 7
      %v3884 = vsub.s32 0, %v3883
      %v3885 = vrot.slane %v3880, %v3884
      %v3887 = vadd.f32 %v3878, %v3885
      %v3888 = vadd.f32 %v3879, %v3885
      %v3889 = vmax.f32 %v3887, 0.0
      %v3890 = vmax.f32 %v3888, 0.0
      %v3891 = vpack.c.bf16 %v3890, %v3889
      %v3892 = vld [vmem:[%s14] sm:$0xf]
      %v3893 = vld [vmem:[%s14 + $0x4] sm:$0xf]
      %v3894 = vld [vmem:[%s15] sm:$0x1]
      %v3896 = vlaneseq
      %v3897 = vshrl.u32 %v3896, 7
      %v3898 = vsub.s32 0, %v3897
      %v3899 = vrot.slane %v3894, %v3898
      %v3903 = vunpack.c.l.b16 %v3892
      %v3904 = vunpack.c.l.b16 %v3893
      %v3905 = vpack.c.b16 %v3904, %v3903
      %v3908 = vsel %vm946, %v3891, 0
      %3910 = vmatprep.subr.bf16.mxu0 0
      %3911 = vmatpush1.bf16.msra.mxu0 %v3905
      %3912 = vmatprep.subr.bf16.mxu0 0
      %3913 = vmatpush1.bf16.msra.mxu0 0
      %3914 = vmatprep.subr.bf16.mxu0 0
      %3915 = vmatpush1.bf16.msra.mxu0 0
      %3916 = vmatprep.subr.bf16.mxu0 0
      %3917 = vmatpush1.bf16.msra.mxu0 0
      %3918 = vmatprep.subr.bf16.mxu0 0
      %3919 = vmatpush1.bf16.msra.mxu0 0
      %3920 = vmatprep.subr.bf16.mxu0 0
      %3921 = vmatpush1.bf16.msra.mxu0 0
      %3922 = vmatprep.subr.bf16.mxu0 0
      %3923 = vmatpush1.bf16.msra.mxu0 0
      %3924 = vmatprep.subr.bf16.mxu0 0
      %3925 = vmatpush1.bf16.msra.mxu0 0
      %3926 = vmatprep.subr.bf16.mxu0 0
      %3927 = vmatpush1.bf16.msra.mxu0 0
      %3928 = vmatprep.subr.bf16.mxu0 0
      %3929 = vmatpush1.bf16.msra.mxu0 0
      %3930 = vmatprep.subr.bf16.mxu0 0
      %3931 = vmatpush1.bf16.msra.mxu0 0
      %3932 = vmatprep.subr.bf16.mxu0 0
      %3933 = vmatpush1.bf16.msra.mxu0 0
      %3934 = vmatprep.subr.bf16.mxu0 0
      %3935 = vmatpush1.bf16.msra.mxu0 0
      %3936 = vmatprep.subr.bf16.mxu0 0
      %3937 = vmatpush1.bf16.msra.mxu0 0
      %3938 = vmatprep.subr.bf16.mxu0 0
      %3939 = vmatpush1.bf16.msra.mxu0 0
      %3940 = vmatprep.subr.bf16.mxu0 0
      %3941 = vmatpush1.bf16.msra.mxu0 0
      %3942 = vmatprep.mubr.bf16.mxu0 0
      %3943 = vmatmul.mubr.bf16.gmra.mrb[0].mxu0 %v3908
      %v3944 = vpop.f32.mrb[0].mxu0
      %v3945 = vadd.f32 %v3899, %v3944
      %v3946 = vpop.f32.mrb[0].mxu0
      %v3947 = vpop.f32.mrb[0].mxu0
      %v3948 = vadd.f32 %v3899, %v3947
      %v3949 = vpop.f32.mrb[0].mxu0
      %3950 = vdwg.mxu0
      %v3951 = vpack.c.bf16 %v3948, %v3945
      %v3952 = vld [vmem:[%s16] sm:$0xf]
      %v3953 = vld [vmem:[%s16 + $0x4] sm:$0xf]
      %v3954 = vld [vmem:[%s16 + $0x8] sm:$0xf]
      %v3955 = vld [vmem:[%s16 + $0xc] sm:$0xf]
      %v3956 = vld [vmem:[%s16 + $0x10] sm:$0xf]
      %v3957 = vld [vmem:[%s16 + $0x14] sm:$0xf]
      %v3958 = vld [vmem:[%s16 + $0x18] sm:$0xf]
      %v3959 = vld [vmem:[%s16 + $0x1c] sm:$0xf]
      %v3960 = vld [vmem:[%s16 + $0x20] sm:$0xf]
      %v3961 = vld [vmem:[%s16 + $0x24] sm:$0xf]
      %v3962 = vld [vmem:[%s16 + $0x28] sm:$0xf]
      %v3963 = vld [vmem:[%s16 + $0x2c] sm:$0xf]
      %v3964 = vld [vmem:[%s16 + $0x30] sm:$0xf]
      %v3965 = vld [vmem:[%s16 + $0x34] sm:$0xf]
      %v3966 = vld [vmem:[%s16 + $0x38] sm:$0xf]
      %v3967 = vld [vmem:[%s16 + $0x3c] sm:$0xf]
      %v3968 = vld [vmem:[%s16 + $0x40] sm:$0xf]
      %v3969 = vld [vmem:[%s16 + $0x44] sm:$0xf]
      %v3970 = vld [vmem:[%s16 + $0x48] sm:$0xf]
      %v3971 = vld [vmem:[%s16 + $0x4c] sm:$0xf]
      %v3972 = vld [vmem:[%s16 + $0x50] sm:$0xf]
      %v3973 = vld [vmem:[%s16 + $0x54] sm:$0xf]
      %v3974 = vld [vmem:[%s16 + $0x58] sm:$0xf]
      %v3975 = vld [vmem:[%s16 + $0x5c] sm:$0xf]
      %v3976 = vld [vmem:[%s16 + $0x60] sm:$0xf]
      %v3977 = vld [vmem:[%s16 + $0x64] sm:$0xf]
      %v3978 = vld [vmem:[%s16 + $0x68] sm:$0xf]
      %v3979 = vld [vmem:[%s16 + $0x6c] sm:$0xf]
      %v3980 = vld [vmem:[%s16 + $0x70] sm:$0xf]
      %v3981 = vld [vmem:[%s16 + $0x74] sm:$0xf]
      %v3982 = vld [vmem:[%s16 + $0x78] sm:$0xf]
      %v3983 = vld [vmem:[%s16 + $0x7c] sm:$0xf]
      %v4016 = vunpack.c.l.b16 %v3952
      %v4017 = vunpack.c.l.b16 %v3953
      %v4018 = vunpack.c.l.b16 %v3954
      %v4019 = vunpack.c.l.b16 %v3955
      %v4020 = vunpack.c.l.b16 %v3956
      %v4021 = vunpack.c.l.b16 %v3957
      %v4022 = vunpack.c.l.b16 %v3958
      %v4023 = vunpack.c.l.b16 %v3959
      %v4024 = vunpack.c.l.b16 %v3960
      %v4025 = vunpack.c.l.b16 %v3961
      %v4026 = vunpack.c.l.b16 %v3962
      %v4027 = vunpack.c.l.b16 %v3963
      %v4028 = vunpack.c.l.b16 %v3964
      %v4029 = vunpack.c.l.b16 %v3965
      %v4030 = vunpack.c.l.b16 %v3966
      %v4031 = vunpack.c.l.b16 %v3967
      %v4032 = vunpack.c.l.b16 %v3968
      %v4033 = vunpack.c.l.b16 %v3969
      %v4034 = vunpack.c.l.b16 %v3970
      %v4035 = vunpack.c.l.b16 %v3971
      %v4036 = vunpack.c.l.b16 %v3972
      %v4037 = vunpack.c.l.b16 %v3973
      %v4038 = vunpack.c.l.b16 %v3974
      %v4039 = vunpack.c.l.b16 %v3975
      %v4040 = vunpack.c.l.b16 %v3976
      %v4041 = vunpack.c.l.b16 %v3977
      %v4042 = vunpack.c.l.b16 %v3978
      %v4043 = vunpack.c.l.b16 %v3979
      %v4044 = vunpack.c.l.b16 %v3980
      %v4045 = vunpack.c.l.b16 %v3981
      %v4046 = vunpack.c.l.b16 %v3982
      %v4047 = vunpack.c.l.b16 %v3983
      %v4048 = vpack.c.b16 %v4017, %v4016
      %v4049 = vpack.c.b16 %v4019, %v4018
      %v4050 = vpack.c.b16 %v4021, %v4020
      %v4051 = vpack.c.b16 %v4023, %v4022
      %v4052 = vpack.c.b16 %v4025, %v4024
      %v4053 = vpack.c.b16 %v4027, %v4026
      %v4054 = vpack.c.b16 %v4029, %v4028
      %v4055 = vpack.c.b16 %v4031, %v4030
      %v4056 = vpack.c.b16 %v4033, %v4032
      %v4057 = vpack.c.b16 %v4035, %v4034
      %v4058 = vpack.c.b16 %v4037, %v4036
      %v4059 = vpack.c.b16 %v4039, %v4038
      %v4060 = vpack.c.b16 %v4041, %v4040
      %v4061 = vpack.c.b16 %v4043, %v4042
      %v4062 = vpack.c.b16 %v4045, %v4044
      %v4063 = vpack.c.b16 %v4047, %v4046
      %v4065 = vsel %vm946, %v4048, 0
      %v4068 = vsel %vm946, %v4049, 0
      %v4071 = vsel %vm946, %v4050, 0
      %v4074 = vsel %vm946, %v4051, 0
      %v4077 = vsel %vm946, %v4052, 0
      %v4080 = vsel %vm946, %v4053, 0
      %v4083 = vsel %vm946, %v4054, 0
      %v4086 = vsel %vm946, %v4055, 0
      %v4089 = vsel %vm946, %v4056, 0
      %v4092 = vsel %vm946, %v4057, 0
      %v4095 = vsel %vm946, %v4058, 0
      %v4098 = vsel %vm946, %v4059, 0
      %v4101 = vsel %vm946, %v4060, 0
      %v4104 = vsel %vm946, %v4061, 0
      %v4107 = vsel %vm946, %v4062, 0
      %v4110 = vsel %vm946, %v4063, 0
      %4112 = vmatprep.subr.bf16.mxu0 0
      %4113 = vmatpush1.bf16.msra.mxu0 %v3951
      %4114 = vmatprep.subr.bf16.mxu0 0
      %4115 = vmatpush1.bf16.msra.mxu0 0
      %4116 = vmatprep.subr.bf16.mxu0 0
      %4117 = vmatpush1.bf16.msra.mxu0 0
      %4118 = vmatprep.subr.bf16.mxu0 0
      %4119 = vmatpush1.bf16.msra.mxu0 0
      %4120 = vmatprep.subr.bf16.mxu0 0
      %4121 = vmatpush1.bf16.msra.mxu0 0
      %4122 = vmatprep.subr.bf16.mxu0 0
      %4123 = vmatpush1.bf16.msra.mxu0 0
      %4124 = vmatprep.subr.bf16.mxu0 0
      %4125 = vmatpush1.bf16.msra.mxu0 0
      %4126 = vmatprep.subr.bf16.mxu0 0
      %4127 = vmatpush1.bf16.msra.mxu0 0
      %4128 = vmatprep.subr.bf16.mxu0 0
      %4129 = vmatpush1.bf16.msra.mxu0 0
      %4130 = vmatprep.subr.bf16.mxu0 0
      %4131 = vmatpush1.bf16.msra.mxu0 0
      %4132 = vmatprep.subr.bf16.mxu0 0
      %4133 = vmatpush1.bf16.msra.mxu0 0
      %4134 = vmatprep.subr.bf16.mxu0 0
      %4135 = vmatpush1.bf16.msra.mxu0 0
      %4136 = vmatprep.subr.bf16.mxu0 0
      %4137 = vmatpush1.bf16.msra.mxu0 0
      %4138 = vmatprep.subr.bf16.mxu0 0
      %4139 = vmatpush1.bf16.msra.mxu0 0
      %4140 = vmatprep.subr.bf16.mxu0 0
      %4141 = vmatpush1.bf16.msra.mxu0 0
      %4142 = vmatprep.subr.bf16.mxu0 0
      %4143 = vmatpush1.bf16.msra.mxu0 0
      %4144 = vmatprep.mubr.bf16.mxu0 0
      %4145 = vmatmul.mubr.bf16.gmra.mrb[0].mxu0 %v4065
      %v4146 = vpop.f32.mrb[0].mxu0
      %v4147 = vadd.f32 0.0, %v4146
      %v4148 = vpop.f32.mrb[0].mxu0
      %v4149 = vpop.f32.mrb[0].mxu0
      %v4150 = vadd.f32 0.0, %v4149
      %v4151 = vpop.f32.mrb[0].mxu0
      %4152 = vmatprep.mubr.bf16.mxu0 0
      %4153 = vmatmul.mubr.bf16.gmra.mrb[0].mxu0 %v4068
      %v4154 = vpop.f32.mrb[0].mxu0
      %v4155 = vadd.f32 0.0, %v4154
      %v4156 = vpop.f32.mrb[0].mxu0
      %v4157 = vpop.f32.mrb[0].mxu0
      %v4158 = vadd.f32 0.0, %v4157
      %v4159 = vpop.f32.mrb[0].mxu0
      %4160 = vmatprep.mubr.bf16.mxu0 0
      %4161 = vmatmul.mubr.bf16.gmra.mrb[0].mxu0 %v4071
      %v4162 = vpop.f32.mrb[0].mxu0
      %v4163 = vadd.f32 0.0, %v4162
      %v4164 = vpop.f32.mrb[0].mxu0
      %v4165 = vpop.f32.mrb[0].mxu0
      %v4166 = vadd.f32 0.0, %v4165
      %v4167 = vpop.f32.mrb[0].mxu0
      %4168 = vmatprep.mubr.bf16.mxu0 0
      %4169 = vmatmul.mubr.bf16.gmra.mrb[0].mxu0 %v4074
      %v4170 = vpop.f32.mrb[0].mxu0
      %v4171 = vadd.f32 0.0, %v4170
      %v4172 = vpop.f32.mrb[0].mxu0
      %v4173 = vpop.f32.mrb[0].mxu0
      %v4174 = vadd.f32 0.0, %v4173
      %v4175 = vpop.f32.mrb[0].mxu0
      %4176 = vmatprep.mubr.bf16.mxu0 0
      %4177 = vmatmul.mubr.bf16.gmra.mrb[0].mxu0 %v4077
      %v4178 = vpop.f32.mrb[0].mxu0
      %v4179 = vadd.f32 0.0, %v4178
      %v4180 = vpop.f32.mrb[0].mxu0
      %v4181 = vpop.f32.mrb[0].mxu0
      %v4182 = vadd.f32 0.0, %v4181
      %v4183 = vpop.f32.mrb[0].mxu0
      %4184 = vmatprep.mubr.bf16.mxu0 0
      %4185 = vmatmul.mubr.bf16.gmra.mrb[0].mxu0 %v4080
      %v4186 = vpop.f32.mrb[0].mxu0
      %v4187 = vadd.f32 0.0, %v4186
      %v4188 = vpop.f32.mrb[0].mxu0
      %v4189 = vpop.f32.mrb[0].mxu0
      %v4190 = vadd.f32 0.0, %v4189
      %v4191 = vpop.f32.mrb[0].mxu0
      %4192 = vmatprep.mubr.bf16.mxu0 0
      %4193 = vmatmul.mubr.bf16.gmra.mrb[0].mxu0 %v4083
      %v4194 = vpop.f32.mrb[0].mxu0
      %v4195 = vadd.f32 0.0, %v4194
      %v4196 = vpop.f32.mrb[0].mxu0
      %v4197 = vpop.f32.mrb[0].mxu0
      %v4198 = vadd.f32 0.0, %v4197
      %v4199 = vpop.f32.mrb[0].mxu0
      %4200 = vmatprep.mubr.bf16.mxu0 0
      %4201 = vmatmul.mubr.bf16.gmra.mrb[0].mxu0 %v4086
      %v4202 = vpop.f32.mrb[0].mxu0
      %v4203 = vadd.f32 0.0, %v4202
      %v4204 = vpop.f32.mrb[0].mxu0
      %v4205 = vpop.f32.mrb[0].mxu0
      %v4206 = vadd.f32 0.0, %v4205
      %v4207 = vpop.f32.mrb[0].mxu0
      %4208 = vmatprep.mubr.bf16.mxu0 0
      %4209 = vmatmul.mubr.bf16.gmra.mrb[0].mxu0 %v4089
      %v4210 = vpop.f32.mrb[0].mxu0
      %v4211 = vadd.f32 0.0, %v4210
      %v4212 = vpop.f32.mrb[0].mxu0
      %v4213 = vpop.f32.mrb[0].mxu0
      %v4214 = vadd.f32 0.0, %v4213
      %v4215 = vpop.f32.mrb[0].mxu0
      %4216 = vmatprep.mubr.bf16.mxu0 0
      %4217 = vmatmul.mubr.bf16.gmra.mrb[0].mxu0 %v4092
      %v4218 = vpop.f32.mrb[0].mxu0
      %v4219 = vadd.f32 0.0, %v4218
      %v4220 = vpop.f32.mrb[0].mxu0
      %v4221 = vpop.f32.mrb[0].mxu0
      %v4222 = vadd.f32 0.0, %v4221
      %v4223 = vpop.f32.mrb[0].mxu0
      %4224 = vmatprep.mubr.bf16.mxu0 0
      %4225 = vmatmul.mubr.bf16.gmra.mrb[0].mxu0 %v4095
      %v4226 = vpop.f32.mrb[0].mxu0
      %v4227 = vadd.f32 0.0, %v4226
      %v4228 = vpop.f32.mrb[0].mxu0
      %v4229 = vpop.f32.mrb[0].mxu0
      %v4230 = vadd.f32 0.0, %v4229
      %v4231 = vpop.f32.mrb[0].mxu0
      %4232 = vmatprep.mubr.bf16.mxu0 0
      %4233 = vmatmul.mubr.bf16.gmra.mrb[0].mxu0 %v4098
      %v4234 = vpop.f32.mrb[0].mxu0
      %v4235 = vadd.f32 0.0, %v4234
      %v4236 = vpop.f32.mrb[0].mxu0
      %v4237 = vpop.f32.mrb[0].mxu0
      %v4238 = vadd.f32 0.0, %v4237
      %v4239 = vpop.f32.mrb[0].mxu0
      %4240 = vmatprep.mubr.bf16.mxu0 0
      %4241 = vmatmul.mubr.bf16.gmra.mrb[0].mxu0 %v4101
      %v4242 = vpop.f32.mrb[0].mxu0
      %v4243 = vadd.f32 0.0, %v4242
      %v4244 = vpop.f32.mrb[0].mxu0
      %v4245 = vpop.f32.mrb[0].mxu0
      %v4246 = vadd.f32 0.0, %v4245
      %v4247 = vpop.f32.mrb[0].mxu0
      %4248 = vmatprep.mubr.bf16.mxu0 0
      %4249 = vmatmul.mubr.bf16.gmra.mrb[0].mxu0 %v4104
      %v4250 = vpop.f32.mrb[0].mxu0
      %v4251 = vadd.f32 0.0, %v4250
      %v4252 = vpop.f32.mrb[0].mxu0
      %v4253 = vpop.f32.mrb[0].mxu0
      %v4254 = vadd.f32 0.0, %v4253
      %v4255 = vpop.f32.mrb[0].mxu0
      %4256 = vmatprep.mubr.bf16.mxu0 0
      %4257 = vmatmul.mubr.bf16.gmra.mrb[0].mxu0 %v4107
      %v4258 = vpop.f32.mrb[0].mxu0
      %v4259 = vadd.f32 0.0, %v4258
      %v4260 = vpop.f32.mrb[0].mxu0
      %v4261 = vpop.f32.mrb[0].mxu0
      %v4262 = vadd.f32 0.0, %v4261
      %v4263 = vpop.f32.mrb[0].mxu0
      %4264 = vmatprep.mubr.bf16.mxu0 0
      %4265 = vmatmul.mubr.bf16.gmra.mrb[0].mxu0 %v4110
      %v4266 = vpop.f32.mrb[0].mxu0
      %v4267 = vadd.f32 0.0, %v4266
      %v4268 = vpop.f32.mrb[0].mxu0
      %v4269 = vpop.f32.mrb[0].mxu0
      %v4270 = vadd.f32 0.0, %v4269
      %v4271 = vpop.f32.mrb[0].mxu0
      %4272 = vdwg.mxu0
      %4273 = vst [vmem:[%s548] sm:$0xff] %v4147
      %4274 = vst [vmem:[%s548 + $0x8] sm:$0xff] %v4150
      %4275 = vst [vmem:[%s548 + $0x10] sm:$0xff] %v4155
      %4276 = vst [vmem:[%s548 + $0x18] sm:$0xff] %v4158
      %4277 = vst [vmem:[%s548 + $0x20] sm:$0xff] %v4163
      %4278 = vst [vmem:[%s548 + $0x28] sm:$0xff] %v4166
      %4279 = vst [vmem:[%s548 + $0x30] sm:$0xff] %v4171
      %4280 = vst [vmem:[%s548 + $0x38] sm:$0xff] %v4174
      %4281 = vst [vmem:[%s548 + $0x40] sm:$0xff] %v4179
      %4282 = vst [vmem:[%s548 + $0x48] sm:$0xff] %v4182
      %4283 = vst [vmem:[%s548 + $0x50] sm:$0xff] %v4187
      %4284 = vst [vmem:[%s548 + $0x58] sm:$0xff] %v4190
      %4285 = vst [vmem:[%s548 + $0x60] sm:$0xff] %v4195
      %4286 = vst [vmem:[%s548 + $0x68] sm:$0xff] %v4198
      %4287 = vst [vmem:[%s548 + $0x70] sm:$0xff] %v4203
      %4288 = vst [vmem:[%s548 + $0x78] sm:$0xff] %v4206
      %4289 = vst [vmem:[%s548 + $0x80] sm:$0xff] %v4211
      %4290 = vst [vmem:[%s548 + $0x88] sm:$0xff] %v4214
      %4291 = vst [vmem:[%s548 + $0x90] sm:$0xff] %v4219
      %4292 = vst [vmem:[%s548 + $0x98] sm:$0xff] %v4222
      %4293 = vst [vmem:[%s548 + $0xa0] sm:$0xff] %v4227
      %4294 = vst [vmem:[%s548 + $0xa8] sm:$0xff] %v4230
      %4295 = vst [vmem:[%s548 + $0xb0] sm:$0xff] %v4235
      %4296 = vst [vmem:[%s548 + $0xb8] sm:$0xff] %v4238
      %4297 = vst [vmem:[%s548 + $0xc0] sm:$0xff] %v4243
      %4298 = vst [vmem:[%s548 + $0xc8] sm:$0xff] %v4246
      %4299 = vst [vmem:[%s548 + $0xd0] sm:$0xff] %v4251
      %4300 = vst [vmem:[%s548 + $0xd8] sm:$0xff] %v4254
      %4301 = vst [vmem:[%s548 + $0xe0] sm:$0xff] %v4259
      %4302 = vst [vmem:[%s548 + $0xe8] sm:$0xff] %v4262
      %4303 = vst [vmem:[%s548 + $0xf0] sm:$0xff] %v4267
      %4304 = vst [vmem:[%s548 + $0xf8] sm:$0xff] %v4270
      %p4305 = scmp.lt.s32.totalorder %s28, 1
      %s4306 = scalar_select %p4305, %s28, 1
      %s4307 = smul.addr %s4306, 32
      %s4308 = smul.addr %s4307, 8
      %s4309 = scalar_lea.vmem %s17, %s4308
      // Predicated region
      $region89: #{deeplabv3_wrapper_forward.1} parent=87 // pred_check
        %p4310 = pneg %p408
      $region90: #{deeplabv3_wrapper_forward.1} parent=87 // pred_check_branch
        %4312 = sbr.rel (%p4310) target = $region92
      $region91: #{deeplabv3_wrapper_forward.1} parent=87 // pred_region
        _
      $region92: #{deeplabv3_wrapper_forward.1} parent=87 // pred_fallthru
        _
    $region88: #{deeplabv3_wrapper_forward.1} parent=5 // pred_fallthru
      _
    %p4313 = scmp.le.s32.totalorder 2, %s23
    // Predicated region
    $region93: #{deeplabv3_wrapper_forward.1} parent=5 // pred_check
      %p4314 = pneg %p4313
    $region94: #{deeplabv3_wrapper_forward.1} parent=5 // pred_check_branch
      %4316 = sbr.rel (%p4314) target = $region96
    $region95: #{deeplabv3_wrapper_forward.1} parent=5 // pred_region
      %s4317 = ssub.s32 %s23, 2
      // Predicated region
      $region97: #{deeplabv3_wrapper_forward.1} parent=95 // pred_check
        %p4318 = pneg %p414
      $region98: #{deeplabv3_wrapper_forward.1} parent=95 // pred_check_branch
        %4320 = sbr.rel (%p4318) target = $region100
      $region99: #{deeplabv3_wrapper_forward.1} parent=95 // pred_region
        %p4321 = scmp.lt.s32.totalorder %s29, 1
        %s4322 = scalar_select %p4321, %s29, 1
        %s4323 = smul.addr %s4322, 32
        %s4324 = smul.addr %s4323, 8
        %s4325 = scalar_lea.vmem %s17, %s4324
      $region100: #{deeplabv3_wrapper_forward.1} parent=95 // pred_fallthru
        _
    $region96: #{deeplabv3_wrapper_forward.1} parent=5 // pred_fallthru
      _
  $region6: #{deeplabv3_wrapper_forward.1} parent=0 // loop_footer
    %s27 = sadd.s32 1, %s23
  $region7: #{deeplabv3_wrapper_forward.1} parent=0 // loop_footer_branch
    %22 = sbr.rel target = $region3
  $region8: #{deeplabv3_wrapper_forward.1} parent=0 // loop_exit
    _

</llo_original>
